<compile_context>
chip_gen: v7x
topology: tpu7x:2x2x1
jax: 0.10.0
libtpu: 0.0.40
codegen_flags: <defaults>
</compile_context>

<pallas_src>
import functools
import math

import jax
import jax.numpy as jnp
from jax.experimental import pallas as pl
from jax.experimental.pallas import tpu as pltpu


def _mhsa_kernel(num_heads, head_dim, tb, n, d, attn_dim,
                 x_ref, pos_ref, mask_ref,
                 wqkv_ref, bqkv_ref, wo_ref, bo_ref,
                 o_ref):
    """One grid step: TB batch elements presented as (TB*N, D) rows.

    x_ref/o_ref: (TB*N, D); pos_ref: (TB*N, D) pre-tiled positional rows;
    mask_ref: (H*N, A) head-selection mask; wqkv_ref: (D, 3A); bqkv_ref: (1, 3A);
    wo_ref: (A, D); bo_ref: (1, D).
    """
    a = attn_dim
    x = x_ref[...]                                        # (R, D) residual
    xp = x + pos_ref[...]                                 # positional add

    # Fused QKV projection: one fat MXU matmul, then lane-aligned 128 slices.
    qkv = jnp.dot(xp, wqkv_ref[...],
                  preferred_element_type=jnp.float32) + bqkv_ref[...]
    q = qkv[:, 0 * a:1 * a].reshape(tb, n, a)             # (TB, N, A)
    k = qkv[:, 1 * a:2 * a].reshape(tb, n, a)
    v = qkv[:, 2 * a:3 * a].reshape(tb, n, a)

    mask = mask_ref[...]                                  # (H*N, A)

    # Head-stacked masked queries: row (h*N + i) holds query i restricted to
    # head h's 32 lanes, so one batched einsum yields every per-head score and
    # the softmax runs over the full minor axis (no per-head loop / slicing).
    q_wide = jnp.tile(q, (1, num_heads, 1)) * mask        # (TB, H*N, A)
    s = jnp.einsum('bia,bka->bik', q_wide, k,
                   preferred_element_type=jnp.float32)    # (TB, H*N, N)
    s = s * (1.0 / math.sqrt(head_dim))
    # TODO(synk): optional attention mask (mask==0 -> -1e9) not plumbed; the
    # reference forward is exercised with mask=None here.
    m = jnp.max(s, axis=-1, keepdims=True)
    p = jnp.exp(s - m)
    # approx=True (EUP vrcp) evaluated but kept exact: negligible cost here and
    # it preserves the 1e-4 fidelity vs the f32 reference.
    attn = p * pl.reciprocal(jnp.sum(p, axis=-1, keepdims=True), approx=False)

    # Row (h*N + i) of o_acc = head-h attention applied to ALL value lanes; the
    # head mask + row-block merge keeps each lane's matching head, landing the
    # result directly in concat(heads) lane layout (no transpose / concat).
    o_acc = jnp.einsum('bik,bka->bia', attn, v,
                       preferred_element_type=jnp.float32)  # (TB, H*N, A)
    o_sel = o_acc * mask
    o_merged = o_sel[:, 0:n, :]
    for h in range(1, num_heads):            # H-1 cheap VPU adds of sublane
        o_merged = o_merged + o_sel[:, h * n:(h + 1) * n, :]  # row-blocks only

    # Single output projection with the full K=128 contraction depth.
    out = jnp.dot(o_merged.reshape(tb * n, a), wo_ref[...],
                  preferred_element_type=jnp.float32) + bo_ref[...]
    o_ref[...] = (out + x).astype(o_ref.dtype)


def _tensorcores_per_chip():
    """v7x has 2 TensorCores per chip; v5e/v6e have 1."""
    try:
        kind = jax.devices()[0].device_kind.lower()
    except Exception:
        return 1
    return 2 if "v7" in kind else 1


def _choose_batch_tile(batch, n, num_cores):
    """Pick TB (batch elems per grid step) and the padded batch size.

    Targets ~1024 rows (TB*N) per step to amortize per-step overhead, keeps
    TB*N a multiple of 8 (sublane tiling) unless the block is the full array,
    prefers a TB that divides the batch (avoids a wrapper-side pad/copy), and
    leaves >= 2 grid steps on multi-TensorCore chips so the parallel grid axis
    is actually sharded across cores.
    """
    align = 8 // math.gcd(n, 8)
    cap = max(align, (1024 // max(n, 1)) // align * align)
    if num_cores > 1 and batch > 1:
        cap = min(cap, max(1, pl.cdiv(batch, num_cores)))
    cap = min(cap, batch)
    best_div = 0
    for tb in range(1, cap + 1):
        if batch % tb == 0 and ((tb * n) % 8 == 0 or tb == batch):
            best_div = tb
    if best_div >= max(1, cap // 4):          # good divisor -> no padding
        return best_div, batch
    tb = max(align, (cap // align) * align)   # padded fallback (e.g. prime B)
    return tb, pl.cdiv(batch, tb) * tb


def multi_head_self_attention(agent_states, params, *, num_heads, attention_dim,
                              tb=None):
    """agent_states: (B, N, D) float32.  params: dict of weights (see init_params)."""
    B, N, D = agent_states.shape
    A = attention_dim
    head_dim = A // num_heads

    if tb is None:
        tb, b_pad = _choose_batch_tile(B, N, _tensorcores_per_chip())
    else:
        b_pad = pl.cdiv(B, tb) * tb
    rows = tb * N
    num_blocks = b_pad // tb

    # Flat row presentation: (B*N, D); each block is TB whole batch elements.
    x_rows = agent_states.reshape(B * N, D)
    if b_pad != B:
        x_rows = jnp.pad(x_rows, ((0, (b_pad - B) * N), (0, 0)))

    # Weight prep (done once per call by XLA, outside the kernel):
    #   PyTorch Linear weights are (out, in) -> transpose to (in, out);
    #   Q/K/V fused into a single (D, 3A) weight + (1, 3A) bias.
    wqkv = jnp.concatenate(
        [params["wq"].T, params["wk"].T, params["wv"].T], axis=1)       # (D, 3A)
    bqkv = jnp.concatenate(
        [params["bq"], params["bk"], params["bv"]]).reshape(1, 3 * A)   # (1, 3A)
    wo = params["wo"].T                                                 # (A, D)
    bo = params["bo"].reshape(1, D)
    pos_rows = jnp.tile(params["pos"][0, :N, :], (tb, 1))               # (TB*N, D)
    # head_mask[h*N + i, a] = 1 iff lane a belongs to head h (a // head_dim == h)
    head_mask = (jnp.arange(A)[None, :] // head_dim ==
                 jnp.arange(num_heads * N)[:, None] // N).astype(jnp.float32)

    kernel = functools.partial(_mhsa_kernel, num_heads, head_dim, tb, N, D, A)
    full = lambda shape: pl.BlockSpec(shape, lambda i: (0,) * len(shape))

    out_rows = pl.pallas_call(
        kernel,
        out_shape=jax.ShapeDtypeStruct((b_pad * N, D), agent_states.dtype),
        grid_spec=pltpu.PrefetchScalarGridSpec(
            num_scalar_prefetch=0,
            grid=(num_blocks,),
            in_specs=[
                pl.BlockSpec((rows, D), lambda i: (i, 0)),    # x row block
                full((rows, D)),                              # positional rows
                full((num_heads * N, A)),                     # head mask
                full((D, 3 * A)), full((1, 3 * A)),           # fused Wqkv, bqkv
                full((A, D)), full((1, D)),                   # Wo, bo
            ],
            out_specs=pl.BlockSpec((rows, D), lambda i: (i, 0)),
        ),
        compiler_params=pltpu.CompilerParams(
            dimension_semantics=("parallel",)),
    )(x_rows, pos_rows, head_mask, wqkv, bqkv, wo, bo)

    return out_rows[:B * N].reshape(B, N, D)


def init_params(key, input_dim, num_heads, attention_dim):
    """Deterministic synthetic init matching the module's parameter shapes."""
    ks = jax.random.split(key, 9)
    def lin_w(k, out_d, in_d):
        bound = 1.0 / math.sqrt(in_d)
        return jax.random.uniform(k, (out_d, in_d), jnp.float32, -bound, bound)
    def lin_b(k, out_d, in_d):
        bound = 1.0 / math.sqrt(in_d)
        return jax.random.uniform(k, (out_d,), jnp.float32, -bound, bound)
    return {
        "wq": lin_w(ks[0], attention_dim, input_dim),
        "bq": lin_b(ks[1], attention_dim, input_dim),
        "wk": lin_w(ks[2], attention_dim, input_dim),
        "bk": lin_b(ks[3], attention_dim, input_dim),
        "wv": lin_w(ks[4], attention_dim, input_dim),
        "bv": lin_b(ks[5], attention_dim, input_dim),
        "wo": lin_w(ks[6], input_dim, attention_dim),
        "bo": lin_b(ks[7], input_dim, attention_dim),
        "pos": jax.random.normal(ks[8], (1, 100, input_dim), jnp.float32),
    }


def _reference(agent_states, params, *, num_heads, attention_dim):
    """Pure-JAX reference mirroring the PyTorch forward (mask=None)."""
    B, N, D = agent_states.shape
    hd = attention_dim // num_heads
    x = agent_states + params["pos"][:, :N, :]
    Q = x @ params["wq"].T + params["bq"]
    K = x @ params["wk"].T + params["bk"]
    V = x @ params["wv"].T + params["bv"]
    Q = Q.reshape(B, N, num_heads, hd).transpose(0, 2, 1, 3)
    K = K.reshape(B, N, num_heads, hd).transpose(0, 2, 1, 3)
    V = V.reshape(B, N, num_heads, hd).transpose(0, 2, 1, 3)
    s = jnp.einsum("bhqd,bhkd->bhqk", Q, K) / math.sqrt(hd)
    a = jax.nn.softmax(s, axis=-1)
    o = jnp.einsum("bhqk,bhkd->bhqd", a, V)
    o = o.transpose(0, 2, 1, 3).reshape(B, N, attention_dim)
    return o @ params["wo"].T + params["bo"] + agent_states


if __name__ == "__main__":
    # Accurate f32 matmuls in the XLA reference so the 1e-4 check is meaningful.
    jax.config.update("jax_default_matmul_precision", "highest")

    # Shapes consistent with the module's forward:
    # batch=2, num_agents=8, state_dim(input_dim)=32, heads=4, attention_dim=128.
    B, N, D = 2, 8, 32
    NUM_HEADS, ATTN_DIM = 4, 128

    key = jax.random.PRNGKey(0)
    k_x, k_p = jax.random.split(key)
    agent_states = jax.random.normal(k_x, (B, N, D), jnp.float32)
    params = init_params(k_p, D, NUM_HEADS, ATTN_DIM)

    out = multi_head_self_attention(agent_states, params,
                                    num_heads=NUM_HEADS, attention_dim=ATTN_DIM)
    out = jax.block_until_ready(out)

    ref = _reference(agent_states, params,
                     num_heads=NUM_HEADS, attention_dim=ATTN_DIM)
    assert out.shape == (B, N, D)
    assert jnp.allclose(out, ref, atol=1e-4, rtol=1e-4), "mismatch vs reference"

    print("KERNEL_OK")
</pallas_src>

<mosaic_0001>
module attributes {stable_mosaic.version = 11 : i64} {
  func.func @_mhsa_kernel(%arg0: i32, %arg1: memref<16x32xf32, #tpu.memory_space<vmem>>, %arg2: memref<16x32xf32, #tpu.memory_space<vmem>>, %arg3: memref<32x128xf32, #tpu.memory_space<vmem>>, %arg4: memref<32x384xf32, #tpu.memory_space<vmem>>, %arg5: memref<1x384xf32, #tpu.memory_space<vmem>>, %arg6: memref<128x32xf32, #tpu.memory_space<vmem>>, %arg7: memref<1x32xf32, #tpu.memory_space<vmem>>, %arg8: memref<16x32xf32, #tpu.memory_space<vmem>>) attributes {dimension_semantics = [#tpu.dimension_semantics<parallel>], iteration_bounds = array<i64: 1>, scalar_prefetch = 0 : i64, scratch_operands = 0 : i64, tpu.core_type = #tpu.core_type<tc>, window_params = [{transform_indices = @transform_0, window_bounds = array<i64: 16, 32>}, {pipeline_mode = #tpu.pipeline_mode<synchronous>, transform_indices = @transform_1, window_bounds = array<i64: 16, 32>}, {pipeline_mode = #tpu.pipeline_mode<synchronous>, transform_indices = @transform_2, window_bounds = array<i64: 32, 128>}, {pipeline_mode = #tpu.pipeline_mode<synchronous>, transform_indices = @transform_3, window_bounds = array<i64: 32, 384>}, {pipeline_mode = #tpu.pipeline_mode<synchronous>, transform_indices = @transform_4, window_bounds = array<i64: 1, 384>}, {pipeline_mode = #tpu.pipeline_mode<synchronous>, transform_indices = @transform_5, window_bounds = array<i64: 128, 32>}, {pipeline_mode = #tpu.pipeline_mode<synchronous>, transform_indices = @transform_6, window_bounds = array<i64: 1, 32>}, {transform_indices = @transform_7, window_bounds = array<i64: 16, 32>}]} {
    %c0 = arith.constant 0 : index
    %c0_0 = arith.constant 0 : index
    %0 = vector.load %arg1[%c0, %c0_0] : memref<16x32xf32, #tpu.memory_space<vmem>>, vector<16x32xf32>
    %c0_1 = arith.constant 0 : index
    %c0_2 = arith.constant 0 : index
    %1 = vector.load %arg2[%c0_1, %c0_2] : memref<16x32xf32, #tpu.memory_space<vmem>>, vector<16x32xf32>
    %2 = arith.addf %0, %1 : vector<16x32xf32>
    %c0_3 = arith.constant 0 : index
    %c0_4 = arith.constant 0 : index
    %3 = vector.load %arg4[%c0_3, %c0_4] : memref<32x384xf32, #tpu.memory_space<vmem>>, vector<32x384xf32>
    %cst = arith.constant dense<0.000000e+00> : vector<16x384xf32>
    %4 = tpu.matmul %2, %3, %cst {dimension_numbers = #tpu.dot_dimension_numbers<[1], [0], [0], [1], [0, 0, 1, 1], [], []>, precision = #tpu.contract_precision<fp32>} : vector<16x32xf32>, vector<32x384xf32>, vector<16x384xf32> -> vector<16x384xf32>
    %c0_5 = arith.constant 0 : index
    %c0_6 = arith.constant 0 : index
    %5 = vector.load %arg5[%c0_5, %c0_6] : memref<1x384xf32, #tpu.memory_space<vmem>>, vector<1x384xf32>
    %6 = vector.broadcast %5 : vector<1x384xf32> to vector<16x384xf32>
    %7 = arith.addf %4, %6 : vector<16x384xf32>
    %8 = vector.extract_strided_slice %7 {offsets = [0, 0], sizes = [16, 128], strides = [1, 1]} : vector<16x384xf32> to vector<16x128xf32>
    %9 = vector.shape_cast %8 : vector<16x128xf32> to vector<2x8x128xf32>
    %10 = vector.extract_strided_slice %7 {offsets = [0, 128], sizes = [16, 128], strides = [1, 1]} : vector<16x384xf32> to vector<16x128xf32>
    %11 = vector.shape_cast %10 : vector<16x128xf32> to vector<2x8x128xf32>
    %12 = vector.extract_strided_slice %7 {offsets = [0, 256], sizes = [16, 128], strides = [1, 1]} : vector<16x384xf32> to vector<16x128xf32>
    %13 = vector.shape_cast %12 : vector<16x128xf32> to vector<2x8x128xf32>
    %c0_7 = arith.constant 0 : index
    %c0_8 = arith.constant 0 : index
    %14 = vector.load %arg3[%c0_7, %c0_8] : memref<32x128xf32, #tpu.memory_space<vmem>>, vector<32x128xf32>
    %15 = tpu.concatenate %9, %9, %9, %9 in 1 : vector<2x8x128xf32>, vector<2x8x128xf32>, vector<2x8x128xf32>, vector<2x8x128xf32> -> vector<2x32x128xf32>
    %16 = vector.shape_cast %14 : vector<32x128xf32> to vector<1x32x128xf32>
    %17 = vector.broadcast %16 : vector<1x32x128xf32> to vector<2x32x128xf32>
    %18 = arith.mulf %15, %17 : vector<2x32x128xf32>
    "tpu.trace_start"() <{level = 10 : i32, message = "bia,bka->bik"}> : () -> ()
    %cst_9 = arith.constant dense<0.000000e+00> : vector<2x32x8xf32>
    %19 = tpu.matmul %18, %11, %cst_9 {dimension_numbers = #tpu.dot_dimension_numbers<[2], [2], [1], [1], [0, 0, 0, 1, 1, 1], [0], [0]>, precision = #tpu.contract_precision<fp32>} : vector<2x32x128xf32>, vector<2x8x128xf32>, vector<2x32x8xf32> -> vector<2x32x8xf32>
    "tpu.trace_stop"() : () -> ()
    %cst_10 = arith.constant 0.176776692 : f32
    %20 = vector.broadcast %cst_10 : f32 to vector<2x32x8xf32>
    %21 = arith.mulf %19, %20 : vector<2x32x8xf32>
    %cst_11 = arith.constant dense<0xFF800000> : vector<2x32xf32>
    %22 = vector.multi_reduction <maximumf>, %21, %cst_11 [2] : vector<2x32x8xf32> to vector<2x32xf32>
    %23 = vector.shape_cast %22 : vector<2x32xf32> to vector<2x32x1xf32>
    %24 = vector.broadcast %23 : vector<2x32x1xf32> to vector<2x32x8xf32>
    %25 = arith.subf %21, %24 : vector<2x32x8xf32>
    %26 = math.exp %25 : vector<2x32x8xf32>
    %cst_12 = arith.constant dense<0.000000e+00> : vector<2x32xf32>
    %27 = vector.multi_reduction <add>, %26, %cst_12 [2] : vector<2x32x8xf32> to vector<2x32xf32>
    %28 = vector.shape_cast %27 : vector<2x32xf32> to vector<2x32x1xf32>
    %29 = tpu.reciprocal %28 : vector<2x32x1xf32> -> vector<2x32x1xf32>
    %30 = vector.broadcast %29 : vector<2x32x1xf32> to vector<2x32x8xf32>
    %31 = arith.mulf %26, %30 : vector<2x32x8xf32>
    "tpu.trace_start"() <{level = 10 : i32, message = "bik,bka->bia"}> : () -> ()
    %cst_13 = arith.constant dense<0.000000e+00> : vector<2x32x128xf32>
    %32 = tpu.matmul %31, %13, %cst_13 {dimension_numbers = #tpu.dot_dimension_numbers<[2], [1], [1], [2], [0, 0, 0, 1, 1, 2], [0], [0]>, precision = #tpu.contract_precision<fp32>} : vector<2x32x8xf32>, vector<2x8x128xf32>, vector<2x32x128xf32> -> vector<2x32x128xf32>
    "tpu.trace_stop"() : () -> ()
    %33 = vector.shape_cast %14 : vector<32x128xf32> to vector<1x32x128xf32>
    %34 = vector.broadcast %33 : vector<1x32x128xf32> to vector<2x32x128xf32>
    %35 = arith.mulf %32, %34 : vector<2x32x128xf32>
    %36 = vector.extract_strided_slice %35 {offsets = [0, 0, 0], sizes = [2, 8, 128], strides = [1, 1, 1]} : vector<2x32x128xf32> to vector<2x8x128xf32>
    %37 = vector.extract_strided_slice %35 {offsets = [0, 8, 0], sizes = [2, 8, 128], strides = [1, 1, 1]} : vector<2x32x128xf32> to vector<2x8x128xf32>
    %38 = arith.addf %36, %37 : vector<2x8x128xf32>
    %39 = vector.extract_strided_slice %35 {offsets = [0, 16, 0], sizes = [2, 8, 128], strides = [1, 1, 1]} : vector<2x32x128xf32> to vector<2x8x128xf32>
    %40 = arith.addf %38, %39 : vector<2x8x128xf32>
    %41 = vector.extract_strided_slice %35 {offsets = [0, 24, 0], sizes = [2, 8, 128], strides = [1, 1, 1]} : vector<2x32x128xf32> to vector<2x8x128xf32>
    %42 = arith.addf %40, %41 : vector<2x8x128xf32>
    %43 = vector.shape_cast %42 : vector<2x8x128xf32> to vector<16x128xf32>
    %c0_14 = arith.constant 0 : index
    %c0_15 = arith.constant 0 : index
    %44 = vector.load %arg6[%c0_14, %c0_15] : memref<128x32xf32, #tpu.memory_space<vmem>>, vector<128x32xf32>
    %cst_16 = arith.constant dense<0.000000e+00> : vector<16x32xf32>
    %45 = tpu.matmul %43, %44, %cst_16 {dimension_numbers = #tpu.dot_dimension_numbers<[1], [0], [0], [1], [0, 0, 1, 1], [], []>, precision = #tpu.contract_precision<fp32>} : vector<16x128xf32>, vector<128x32xf32>, vector<16x32xf32> -> vector<16x32xf32>
    %c0_17 = arith.constant 0 : index
    %c0_18 = arith.constant 0 : index
    %46 = vector.load %arg7[%c0_17, %c0_18] : memref<1x32xf32, #tpu.memory_space<vmem>>, vector<1x32xf32>
    %47 = vector.broadcast %46 : vector<1x32xf32> to vector<16x32xf32>
    %48 = arith.addf %45, %47 : vector<16x32xf32>
    %49 = arith.addf %48, %0 : vector<16x32xf32>
    %c0_19 = arith.constant 0 : index
    %c0_20 = arith.constant 0 : index
    %50 = vector.load %arg8[%c0_19, %c0_20] : memref<16x32xf32, #tpu.memory_space<vmem>>, vector<16x32xf32>
    tpu.vector_store %arg8[%c0_19, %c0_20], %49 {strides = array<i32>} : memref<16x32xf32, #tpu.memory_space<vmem>>, vector<16x32xf32>,
    return
  }
  func.func @transform_0(%arg0: i32) -> (i32, i32) {
    %c0_i32 = arith.constant 0 : i32
    %c0_i32_0 = arith.constant 0 : i32
    return %arg0, %c0_i32 : i32, i32
  }
  func.func @transform_1(%arg0: i32) -> (i32, i32) {
    %c0_i32 = arith.constant 0 : i32
    %c0_i32_0 = arith.constant 0 : i32
    %c0_i32_1 = arith.constant 0 : i32
    return %c0_i32, %c0_i32_0 : i32, i32
  }
  func.func @transform_2(%arg0: i32) -> (i32, i32) {
    %c0_i32 = arith.constant 0 : i32
    %c0_i32_0 = arith.constant 0 : i32
    %c0_i32_1 = arith.constant 0 : i32
    return %c0_i32, %c0_i32_0 : i32, i32
  }
  func.func @transform_3(%arg0: i32) -> (i32, i32) {
    %c0_i32 = arith.constant 0 : i32
    %c0_i32_0 = arith.constant 0 : i32
    %c0_i32_1 = arith.constant 0 : i32
    return %c0_i32, %c0_i32_0 : i32, i32
  }
  func.func @transform_4(%arg0: i32) -> (i32, i32) {
    %c0_i32 = arith.constant 0 : i32
    %c0_i32_0 = arith.constant 0 : i32
    %c0_i32_1 = arith.constant 0 : i32
    return %c0_i32, %c0_i32_0 : i32, i32
  }
  func.func @transform_5(%arg0: i32) -> (i32, i32) {
    %c0_i32 = arith.constant 0 : i32
    %c0_i32_0 = arith.constant 0 : i32
    %c0_i32_1 = arith.constant 0 : i32
    return %c0_i32, %c0_i32_0 : i32, i32
  }
  func.func @transform_6(%arg0: i32) -> (i32, i32) {
    %c0_i32 = arith.constant 0 : i32
    %c0_i32_0 = arith.constant 0 : i32
    %c0_i32_1 = arith.constant 0 : i32
    return %c0_i32, %c0_i32_0 : i32, i32
  }
  func.func @transform_7(%arg0: i32) -> (i32, i32) {
    %c0_i32 = arith.constant 0 : i32
    %c0_i32_0 = arith.constant 0 : i32
    return %arg0, %c0_i32 : i32, i32
  }
}

</mosaic_0001>

<llo_original>
// kernel: tpu_custom_call.1
$region0: #{tpu_custom_call.1}
  #allocation0 [shape = 'u32[]', space=smem, size = 0x4, offset = 0x4, fixed_abs, tag = 'smem constant byte address 0x4 - core index']
  #allocation1 [shape = 'u32[144,128]{1,0:T(1,128)}', space=vmem, size = 0x12000, scoped, tag = 'internal scratch']
  %s0 = inlined_call_operand.vmem [shape: f32[16,32], index: 0, kind: input, shape index: {}]
  %s1 = inlined_call_operand.vmem [shape: f32[16,32], index: 1, kind: input, shape index: {}]
  %s2 = inlined_call_operand.vmem [shape: f32[32,128], index: 2, kind: input, shape index: {}]
  %s3 = inlined_call_operand.vmem [shape: f32[32,384], index: 3, kind: input, shape index: {}]
  %s4 = inlined_call_operand.vmem [shape: f32[1,384], index: 4, kind: input, shape index: {}]
  %s5 = inlined_call_operand.vmem [shape: f32[128,32], index: 5, kind: input, shape index: {}]
  %s6 = inlined_call_operand.vmem [shape: f32[1,32], index: 6, kind: input, shape index: {}]
  %s7 = inlined_call_operand.hbm [shape: f32[16,32], index: 7, kind: output, shape index: {}]
  %s8 = sld [smem:[#allocation0]]
  $region38: #{tpu_custom_call.1} parent=0
    _
  %s10 = ssub.s32 1, %s8
  %s11 = scalar_select 0, %s10, %s8
  $region1: #{tpu_custom_call.1} parent=0
    #allocation2 [shape = 'u8[8192]{0}', space=vmem, size = 0x2000, scoped, tag = 'output window, operand 0, single buffered']
    #allocation3 [shape = 's32[1]{0}', space=sflag, size = 0x4, scoped, tag = 'scoped memory for tpu_custom_call.1']
    %12 = vsyncpa [#allocation3], 0
    // Predicated region
    $region2: #{tpu_custom_call.1} parent=1 // pred_check
      _
    $region3: #{tpu_custom_call.1} parent=1 // pred_check_branch
      %14 = sbr.rel (0) target = $region5
    $region4: #{tpu_custom_call.1} parent=1 // pred_region
      _
    $region5: #{tpu_custom_call.1} parent=1 // pred_fallthru
      _
    // Predicated region
    $region6: #{tpu_custom_call.1} parent=1 // pred_check
      _
    $region7: #{tpu_custom_call.1} parent=1 // pred_check_branch
      %16 = sbr.rel (0) target = $region9
    $region8: #{tpu_custom_call.1} parent=1 // pred_region
      _
    $region9: #{tpu_custom_call.1} parent=1 // pred_fallthru
      _
    // Predicated region
    $region10: #{tpu_custom_call.1} parent=1 // pred_check
      _
    $region11: #{tpu_custom_call.1} parent=1 // pred_check_branch
      %18 = sbr.rel (0) target = $region13
    $region12: #{tpu_custom_call.1} parent=1 // pred_region
      _
    $region13: #{tpu_custom_call.1} parent=1 // pred_fallthru
      _
    // Predicated region
    $region14: #{tpu_custom_call.1} parent=1 // pred_check
      _
    $region15: #{tpu_custom_call.1} parent=1 // pred_check_branch
      %20 = sbr.rel (0) target = $region17
    $region16: #{tpu_custom_call.1} parent=1 // pred_region
      _
    $region17: #{tpu_custom_call.1} parent=1 // pred_fallthru
      _
    // Predicated region
    $region18: #{tpu_custom_call.1} parent=1 // pred_check
      _
    $region19: #{tpu_custom_call.1} parent=1 // pred_check_branch
      %22 = sbr.rel (0) target = $region21
    $region20: #{tpu_custom_call.1} parent=1 // pred_region
      _
    $region21: #{tpu_custom_call.1} parent=1 // pred_fallthru
      _
    // Predicated region
    $region22: #{tpu_custom_call.1} parent=1 // pred_check
      _
    $region23: #{tpu_custom_call.1} parent=1 // pred_check_branch
      %24 = sbr.rel (0) target = $region25
    $region24: #{tpu_custom_call.1} parent=1 // pred_region
      _
    $region25: #{tpu_custom_call.1} parent=1 // pred_fallthru
      _
    // Predicated region
    $region26: #{tpu_custom_call.1} parent=1 // pred_check
      _
    $region27: #{tpu_custom_call.1} parent=1 // pred_check_branch
      %26 = sbr.rel (0) target = $region29
    $region28: #{tpu_custom_call.1} parent=1 // pred_region
      _
    $region29: #{tpu_custom_call.1} parent=1 // pred_fallthru
      _
    %v27 = vld [vmem:[%s0] sm:$0xff]
    %v28 = vld [vmem:[%s0 + $0x8] sm:$0xff]
    %v29 = vld [vmem:[%s1] sm:$0xff]
    %v30 = vld [vmem:[%s1 + $0x8] sm:$0xff]
    %v31 = vadd.f32 %v27, %v29
    %v32 = vadd.f32 %v28, %v30
    %v33 = vld [vmem:[%s3] sm:$0xff]
    %v34 = vld [vmem:[%s3 + $0x8] sm:$0xff]
    %v35 = vld [vmem:[%s3 + $0x10] sm:$0xff]
    %v36 = vld [vmem:[%s3 + $0x18] sm:$0xff]
    %v37 = vld [vmem:[%s3 + $0x20] sm:$0xff]
    %v38 = vld [vmem:[%s3 + $0x28] sm:$0xff]
    %v39 = vld [vmem:[%s3 + $0x30] sm:$0xff]
    %v40 = vld [vmem:[%s3 + $0x38] sm:$0xff]
    %v41 = vld [vmem:[%s3 + $0x40] sm:$0xff]
    %v42 = vld [vmem:[%s3 + $0x48] sm:$0xff]
    %v43 = vld [vmem:[%s3 + $0x50] sm:$0xff]
    %v44 = vld [vmem:[%s3 + $0x58] sm:$0xff]
    %v45 = vld [vmem:[%s4] sm:$0x7]
    %v47 = vlaneseq
    %v48 = vshrl.u32 %v47, 7
    %v49 = vsub.s32 0, %v48
    %v50 = vrot.slane %v45, %v49
    %v51 = vlaneseq
    %v52 = vshrl.u32 %v51, 7
    %v53 = vsub.s32 1, %v52
    %v54 = vrot.slane %v45, %v53
    %v55 = vlaneseq
    %v56 = vshrl.u32 %v55, 7
    %v57 = vsub.s32 2, %v56
    %v58 = vrot.slane %v45, %v57
    %vm62 = vcmask 261120
    %v64 = vsel %vm62, %v31, 0
    %v67 = vsel %vm62, %v32, 0
    %v69 = vand.u32 %v34, 4294901760
    %70 = vmatprep.subr.mxu0 %v69
    %v71 = vand.u32 %v33, 4294901760
    %72 = vmatpush1.msra.mxu0 %v71
    %v73 = vand.u32 %v37, 4294901760
    %74 = vmatprep.subr.mxu0 %v73
    %v75 = vand.u32 %v36, 4294901760
    %76 = vmatpush1.msra.mxu0 %v75
    %v77 = vand.u32 %v40, 4294901760
    %78 = vmatprep.subr.mxu0 %v77
    %v79 = vand.u32 %v39, 4294901760
    %80 = vmatpush1.msra.mxu0 %v79
    %v81 = vand.u32 %v43, 4294901760
    %82 = vmatprep.subr.mxu0 %v81
    %v83 = vand.u32 %v42, 4294901760
    %84 = vmatpush1.msra.mxu0 %v83
    %85 = vmatprep.subr.mxu0 0.0
    %86 = vmatpush1.msra.mxu0 0.0
    %87 = vmatprep.subr.mxu0 0.0
    %88 = vmatpush1.msra.mxu0 0.0
    %89 = vmatprep.subr.mxu0 0.0
    %90 = vmatpush1.msra.mxu0 0.0
    %91 = vmatprep.subr.mxu0 0.0
    %92 = vmatpush1.msra.mxu0 0.0
    %93 = vmatprep.subr.mxu0 0.0
    %94 = vmatpush1.msra.mxu0 0.0
    %95 = vmatprep.subr.mxu0 0.0
    %96 = vmatpush1.msra.mxu0 0.0
    %97 = vmatprep.subr.mxu0 0.0
    %98 = vmatpush1.msra.mxu0 0.0
    %99 = vmatprep.subr.mxu0 0.0
    %100 = vmatpush1.msra.mxu0 0.0
    %101 = vmatprep.subr.mxu0 0.0
    %102 = vmatpush1.msra.mxu0 0.0
    %103 = vmatprep.subr.mxu0 0.0
    %104 = vmatpush1.msra.mxu0 0.0
    %105 = vmatprep.subr.mxu0 0.0
    %106 = vmatpush1.msra.mxu0 0.0
    %107 = vmatprep.subr.mxu0 0.0
    %108 = vmatpush1.msra.mxu0 0.0
    %109 = vmatprep.subr.mxu0 0.0
    %110 = vmatpush1.msra.mxu0 0.0
    %111 = vmatprep.subr.mxu0 0.0
    %112 = vmatpush1.msra.mxu0 0.0
    %113 = vmatprep.subr.mxu0 0.0
    %114 = vmatpush1.msra.mxu0 0.0
    %115 = vmatprep.subr.mxu0 0.0
    %116 = vmatpush1.msra.mxu0 0.0
    %117 = vmatprep.subr.mxu0 0.0
    %118 = vmatpush1.msra.mxu0 0.0
    %119 = vmatprep.subr.mxu0 0.0
    %120 = vmatpush1.msra.mxu0 0.0
    %121 = vmatprep.subr.mxu0 0.0
    %122 = vmatpush1.msra.mxu0 0.0
    %123 = vmatprep.subr.mxu0 0.0
    %124 = vmatpush1.msra.mxu0 0.0
    %125 = vmatprep.subr.mxu0 0.0
    %126 = vmatpush1.msra.mxu0 0.0
    %127 = vmatprep.subr.mxu0 0.0
    %128 = vmatpush1.msra.mxu0 0.0
    %129 = vmatprep.subr.mxu0 0.0
    %130 = vmatpush1.msra.mxu0 0.0
    %131 = vmatprep.subr.mxu0 0.0
    %132 = vmatpush1.msra.mxu0 0.0
    %133 = vmatprep.subr.mxu0 0.0
    %134 = vmatpush1.msra.mxu0 0.0
    %135 = vmatprep.subr.mxu0 0.0
    %136 = vmatpush1.msra.mxu0 0.0
    %137 = vmatprep.subr.mxu0 0.0
    %138 = vmatpush1.msra.mxu0 0.0
    %139 = vmatprep.subr.mxu0 0.0
    %140 = vmatpush1.msra.mxu0 0.0
    %141 = vmatprep.mubr.f32.mxu0 0.0
    %v142 = vand.u32 %v64, 4294901760
    %v143 = vsub.f32 %v64, %v142
    %v144 = vand.u32 %v143, 4294901760
    %v145 = vsub.f32 %v143, %v144
    %v146 = vand.u32 %v145, 4294901760
    %147 = vmatmul.mubr.f32.gmra.mrb[0].mxu0 %v146
    %v148 = vpop.f32.mrb[0].mxu0
    %v149 = vadd.f32 %v50, %v148
    %v150 = vpop.f32.mrb[0].mxu0
    %v151 = vadd.f32 %v54, %v150
    %152 = vmatprep.mubr.f32.mxu0 0.0
    %v153 = vand.u32 %v67, 4294901760
    %v154 = vsub.f32 %v67, %v153
    %v155 = vand.u32 %v154, 4294901760
    %v156 = vsub.f32 %v154, %v155
    %v157 = vand.u32 %v156, 4294901760
    %158 = vmatmul.mubr.f32.gmra.mrb[0].mxu0 %v157
    %v159 = vpop.f32.mrb[0].mxu0
    %v160 = vadd.f32 %v50, %v159
    %v161 = vpop.f32.mrb[0].mxu0
    %v162 = vadd.f32 %v54, %v161
    %163 = vdwg.mxu0
    %v164 = vand.u32 %v34, 4294901760
    %v165 = vsub.f32 %v34, %v164
    %v166 = vand.u32 %v165, 4294901760
    %v167 = vsub.f32 %v165, %v166
    %v168 = vand.u32 %v167, 4294901760
    %169 = vmatprep.subr.mxu0 %v168
    %v170 = vand.u32 %v33, 4294901760
    %v171 = vsub.f32 %v33, %v170
    %v172 = vand.u32 %v171, 4294901760
    %v173 = vsub.f32 %v171, %v172
    %v174 = vand.u32 %v173, 4294901760
    %175 = vmatpush1.msra.mxu0 %v174
    %v176 = vand.u32 %v37, 4294901760
    %v177 = vsub.f32 %v37, %v176
    %v178 = vand.u32 %v177, 4294901760
    %v179 = vsub.f32 %v177, %v178
    %v180 = vand.u32 %v179, 4294901760
    %181 = vmatprep.subr.mxu0 %v180
    %v182 = vand.u32 %v36, 4294901760
    %v183 = vsub.f32 %v36, %v182
    %v184 = vand.u32 %v183, 4294901760
    %v185 = vsub.f32 %v183, %v184
    %v186 = vand.u32 %v185, 4294901760
    %187 = vmatpush1.msra.mxu0 %v186
    %v188 = vand.u32 %v40, 4294901760
    %v189 = vsub.f32 %v40, %v188
    %v190 = vand.u32 %v189, 4294901760
    %v191 = vsub.f32 %v189, %v190
    %v192 = vand.u32 %v191, 4294901760
    %193 = vmatprep.subr.mxu0 %v192
    %v194 = vand.u32 %v39, 4294901760
    %v195 = vsub.f32 %v39, %v194
    %v196 = vand.u32 %v195, 4294901760
    %v197 = vsub.f32 %v195, %v196
    %v198 = vand.u32 %v197, 4294901760
    %199 = vmatpush1.msra.mxu0 %v198
    %v200 = vand.u32 %v43, 4294901760
    %v201 = vsub.f32 %v43, %v200
    %v202 = vand.u32 %v201, 4294901760
    %v203 = vsub.f32 %v201, %v202
    %v204 = vand.u32 %v203, 4294901760
    %205 = vmatprep.subr.mxu0 %v204
    %v206 = vand.u32 %v42, 4294901760
    %v207 = vsub.f32 %v42, %v206
    %v208 = vand.u32 %v207, 4294901760
    %v209 = vsub.f32 %v207, %v208
    %v210 = vand.u32 %v209, 4294901760
    %211 = vmatpush1.msra.mxu0 %v210
    %212 = vmatprep.subr.mxu0 0.0
    %213 = vmatpush1.msra.mxu0 0.0
    %214 = vmatprep.subr.mxu0 0.0
    %215 = vmatpush1.msra.mxu0 0.0
    %216 = vmatprep.subr.mxu0 0.0
    %217 = vmatpush1.msra.mxu0 0.0
    %218 = vmatprep.subr.mxu0 0.0
    %219 = vmatpush1.msra.mxu0 0.0
    %220 = vmatprep.subr.mxu0 0.0
    %221 = vmatpush1.msra.mxu0 0.0
    %222 = vmatprep.subr.mxu0 0.0
    %223 = vmatpush1.msra.mxu0 0.0
    %224 = vmatprep.subr.mxu0 0.0
    %225 = vmatpush1.msra.mxu0 0.0
    %226 = vmatprep.subr.mxu0 0.0
    %227 = vmatpush1.msra.mxu0 0.0
    %228 = vmatprep.subr.mxu0 0.0
    %229 = vmatpush1.msra.mxu0 0.0
    %230 = vmatprep.subr.mxu0 0.0
    %231 = vmatpush1.msra.mxu0 0.0
    %232 = vmatprep.subr.mxu0 0.0
    %233 = vmatpush1.msra.mxu0 0.0
    %234 = vmatprep.subr.mxu0 0.0
    %235 = vmatpush1.msra.mxu0 0.0
    %236 = vmatprep.subr.mxu0 0.0
    %237 = vmatpush1.msra.mxu0 0.0
    %238 = vmatprep.subr.mxu0 0.0
    %239 = vmatpush1.msra.mxu0 0.0
    %240 = vmatprep.subr.mxu0 0.0
    %241 = vmatpush1.msra.mxu0 0.0
    %242 = vmatprep.subr.mxu0 0.0
    %243 = vmatpush1.msra.mxu0 0.0
    %244 = vmatprep.subr.mxu0 0.0
    %245 = vmatpush1.msra.mxu0 0.0
    %246 = vmatprep.subr.mxu0 0.0
    %247 = vmatpush1.msra.mxu0 0.0
    %248 = vmatprep.subr.mxu0 0.0
    %249 = vmatpush1.msra.mxu0 0.0
    %250 = vmatprep.subr.mxu0 0.0
    %251 = vmatpush1.msra.mxu0 0.0
    %252 = vmatprep.subr.mxu0 0.0
    %253 = vmatpush1.msra.mxu0 0.0
    %254 = vmatprep.subr.mxu0 0.0
    %255 = vmatpush1.msra.mxu0 0.0
    %256 = vmatprep.subr.mxu0 0.0
    %257 = vmatpush1.msra.mxu0 0.0
    %258 = vmatprep.subr.mxu0 0.0
    %259 = vmatpush1.msra.mxu0 0.0
    %260 = vmatprep.subr.mxu0 0.0
    %261 = vmatpush1.msra.mxu0 0.0
    %262 = vmatprep.subr.mxu0 0.0
    %263 = vmatpush1.msra.mxu0 0.0
    %264 = vmatprep.subr.mxu0 0.0
    %265 = vmatpush1.msra.mxu0 0.0
    %266 = vmatprep.subr.mxu0 0.0
    %267 = vmatpush1.msra.mxu0 0.0
    %268 = vmatprep.mubr.f32.mxu0 0.0
    %v269 = vand.u32 %v64, 4294901760
    %270 = vmatmul.mubr.f32.gmra.mrb[0].mxu0 %v269
    %v271 = vpop.f32.mrb[0].mxu0
    %v272 = vadd.f32 %v149, %v271
    %v273 = vpop.f32.mrb[0].mxu0
    %v274 = vadd.f32 %v151, %v273
    %275 = vmatprep.mubr.f32.mxu0 0.0
    %v276 = vand.u32 %v67, 4294901760
    %277 = vmatmul.mubr.f32.gmra.mrb[0].mxu0 %v276
    %v278 = vpop.f32.mrb[0].mxu0
    %v279 = vadd.f32 %v160, %v278
    %v280 = vpop.f32.mrb[0].mxu0
    %v281 = vadd.f32 %v162, %v280
    %282 = vdwg.mxu0
    %v283 = vand.u32 %v34, 4294901760
    %v284 = vsub.f32 %v34, %v283
    %285 = vmatprep.subr.mxu0 %v284
    %v286 = vand.u32 %v33, 4294901760
    %v287 = vsub.f32 %v33, %v286
    %288 = vmatpush1.msra.mxu0 %v287
    %v289 = vand.u32 %v37, 4294901760
    %v290 = vsub.f32 %v37, %v289
    %291 = vmatprep.subr.mxu0 %v290
    %v292 = vand.u32 %v36, 4294901760
    %v293 = vsub.f32 %v36, %v292
    %294 = vmatpush1.msra.mxu0 %v293
    %v295 = vand.u32 %v40, 4294901760
    %v296 = vsub.f32 %v40, %v295
    %297 = vmatprep.subr.mxu0 %v296
    %v298 = vand.u32 %v39, 4294901760
    %v299 = vsub.f32 %v39, %v298
    %300 = vmatpush1.msra.mxu0 %v299
    %v301 = vand.u32 %v43, 4294901760
    %v302 = vsub.f32 %v43, %v301
    %303 = vmatprep.subr.mxu0 %v302
    %v304 = vand.u32 %v42, 4294901760
    %v305 = vsub.f32 %v42, %v304
    %306 = vmatpush1.msra.mxu0 %v305
    %307 = vmatprep.subr.mxu0 0.0
    %308 = vmatpush1.msra.mxu0 0.0
    %309 = vmatprep.subr.mxu0 0.0
    %310 = vmatpush1.msra.mxu0 0.0
    %311 = vmatprep.subr.mxu0 0.0
    %312 = vmatpush1.msra.mxu0 0.0
    %313 = vmatprep.subr.mxu0 0.0
    %314 = vmatpush1.msra.mxu0 0.0
    %315 = vmatprep.subr.mxu0 0.0
    %316 = vmatpush1.msra.mxu0 0.0
    %317 = vmatprep.subr.mxu0 0.0
    %318 = vmatpush1.msra.mxu0 0.0
    %319 = vmatprep.subr.mxu0 0.0
    %320 = vmatpush1.msra.mxu0 0.0
    %321 = vmatprep.subr.mxu0 0.0
    %322 = vmatpush1.msra.mxu0 0.0
    %323 = vmatprep.subr.mxu0 0.0
    %324 = vmatpush1.msra.mxu0 0.0
    %325 = vmatprep.subr.mxu0 0.0
    %326 = vmatpush1.msra.mxu0 0.0
    %327 = vmatprep.subr.mxu0 0.0
    %328 = vmatpush1.msra.mxu0 0.0
    %329 = vmatprep.subr.mxu0 0.0
    %330 = vmatpush1.msra.mxu0 0.0
    %331 = vmatprep.subr.mxu0 0.0
    %332 = vmatpush1.msra.mxu0 0.0
    %333 = vmatprep.subr.mxu0 0.0
    %334 = vmatpush1.msra.mxu0 0.0
    %335 = vmatprep.subr.mxu0 0.0
    %336 = vmatpush1.msra.mxu0 0.0
    %337 = vmatprep.subr.mxu0 0.0
    %338 = vmatpush1.msra.mxu0 0.0
    %339 = vmatprep.subr.mxu0 0.0
    %340 = vmatpush1.msra.mxu0 0.0
    %341 = vmatprep.subr.mxu0 0.0
    %342 = vmatpush1.msra.mxu0 0.0
    %343 = vmatprep.subr.mxu0 0.0
    %344 = vmatpush1.msra.mxu0 0.0
    %345 = vmatprep.subr.mxu0 0.0
    %346 = vmatpush1.msra.mxu0 0.0
    %347 = vmatprep.subr.mxu0 0.0
    %348 = vmatpush1.msra.mxu0 0.0
    %349 = vmatprep.subr.mxu0 0.0
    %350 = vmatpush1.msra.mxu0 0.0
    %351 = vmatprep.subr.mxu0 0.0
    %352 = vmatpush1.msra.mxu0 0.0
    %353 = vmatprep.subr.mxu0 0.0
    %354 = vmatpush1.msra.mxu0 0.0
    %355 = vmatprep.subr.mxu0 0.0
    %356 = vmatpush1.msra.mxu0 0.0
    %357 = vmatprep.subr.mxu0 0.0
    %358 = vmatpush1.msra.mxu0 0.0
    %359 = vmatprep.subr.mxu0 0.0
    %360 = vmatpush1.msra.mxu0 0.0
    %361 = vmatprep.subr.mxu0 0.0
    %362 = vmatpush1.msra.mxu0 0.0
    %363 = vmatprep.mubr.f32.mxu0 0.0
    %v364 = vand.u32 %v64, 4294901760
    %v365 = vsub.f32 %v64, %v364
    %366 = vmatmul.mubr.f32.gmra.mrb[0].mxu0 %v365
    %v367 = vpop.f32.mrb[0].mxu0
    %v368 = vadd.f32 %v272, %v367
    %v369 = vpop.f32.mrb[0].mxu0
    %v370 = vadd.f32 %v274, %v369
    %371 = vmatprep.mubr.f32.mxu0 0.0
    %v372 = vand.u32 %v67, 4294901760
    %v373 = vsub.f32 %v67, %v372
    %374 = vmatmul.mubr.f32.gmra.mrb[0].mxu0 %v373
    %v375 = vpop.f32.mrb[0].mxu0
    %v376 = vadd.f32 %v279, %v375
    %v377 = vpop.f32.mrb[0].mxu0
    %v378 = vadd.f32 %v281, %v377
    %379 = vdwg.mxu0
    %v380 = vand.u32 %v34, 4294901760
    %381 = vmatprep.subr.mxu0 %v380
    %v382 = vand.u32 %v33, 4294901760
    %383 = vmatpush1.msra.mxu0 %v382
    %v384 = vand.u32 %v37, 4294901760
    %385 = vmatprep.subr.mxu0 %v384
    %v386 = vand.u32 %v36, 4294901760
    %387 = vmatpush1.msra.mxu0 %v386
    %v388 = vand.u32 %v40, 4294901760
    %389 = vmatprep.subr.mxu0 %v388
    %v390 = vand.u32 %v39, 4294901760
    %391 = vmatpush1.msra.mxu0 %v390
    %v392 = vand.u32 %v43, 4294901760
    %393 = vmatprep.subr.mxu0 %v392
    %v394 = vand.u32 %v42, 4294901760
    %395 = vmatpush1.msra.mxu0 %v394
    %396 = vmatprep.subr.mxu0 0.0
    %397 = vmatpush1.msra.mxu0 0.0
    %398 = vmatprep.subr.mxu0 0.0
    %399 = vmatpush1.msra.mxu0 0.0
    %400 = vmatprep.subr.mxu0 0.0
    %401 = vmatpush1.msra.mxu0 0.0
    %402 = vmatprep.subr.mxu0 0.0
    %403 = vmatpush1.msra.mxu0 0.0
    %404 = vmatprep.subr.mxu0 0.0
    %405 = vmatpush1.msra.mxu0 0.0
    %406 = vmatprep.subr.mxu0 0.0
    %407 = vmatpush1.msra.mxu0 0.0
    %408 = vmatprep.subr.mxu0 0.0
    %409 = vmatpush1.msra.mxu0 0.0
    %410 = vmatprep.subr.mxu0 0.0
    %411 = vmatpush1.msra.mxu0 0.0
    %412 = vmatprep.subr.mxu0 0.0
    %413 = vmatpush1.msra.mxu0 0.0
    %414 = vmatprep.subr.mxu0 0.0
    %415 = vmatpush1.msra.mxu0 0.0
    %416 = vmatprep.subr.mxu0 0.0
    %417 = vmatpush1.msra.mxu0 0.0
    %418 = vmatprep.subr.mxu0 0.0
    %419 = vmatpush1.msra.mxu0 0.0
    %420 = vmatprep.subr.mxu0 0.0
    %421 = vmatpush1.msra.mxu0 0.0
    %422 = vmatprep.subr.mxu0 0.0
    %423 = vmatpush1.msra.mxu0 0.0
    %424 = vmatprep.subr.mxu0 0.0
    %425 = vmatpush1.msra.mxu0 0.0
    %426 = vmatprep.subr.mxu0 0.0
    %427 = vmatpush1.msra.mxu0 0.0
    %428 = vmatprep.subr.mxu0 0.0
    %429 = vmatpush1.msra.mxu0 0.0
    %430 = vmatprep.subr.mxu0 0.0
    %431 = vmatpush1.msra.mxu0 0.0
    %432 = vmatprep.subr.mxu0 0.0
    %433 = vmatpush1.msra.mxu0 0.0
    %434 = vmatprep.subr.mxu0 0.0
    %435 = vmatpush1.msra.mxu0 0.0
    %436 = vmatprep.subr.mxu0 0.0
    %437 = vmatpush1.msra.mxu0 0.0
    %438 = vmatprep.subr.mxu0 0.0
    %439 = vmatpush1.msra.mxu0 0.0
    %440 = vmatprep.subr.mxu0 0.0
    %441 = vmatpush1.msra.mxu0 0.0
    %442 = vmatprep.subr.mxu0 0.0
    %443 = vmatpush1.msra.mxu0 0.0
    %444 = vmatprep.subr.mxu0 0.0
    %445 = vmatpush1.msra.mxu0 0.0
    %446 = vmatprep.subr.mxu0 0.0
    %447 = vmatpush1.msra.mxu0 0.0
    %448 = vmatprep.subr.mxu0 0.0
    %449 = vmatpush1.msra.mxu0 0.0
    %450 = vmatprep.subr.mxu0 0.0
    %451 = vmatpush1.msra.mxu0 0.0
    %452 = vmatprep.mubr.f32.mxu0 0.0
    %v453 = vand.u32 %v64, 4294901760
    %v454 = vsub.f32 %v64, %v453
    %v455 = vand.u32 %v454, 4294901760
    %456 = vmatmul.mubr.f32.gmra.mrb[0].mxu0 %v455
    %v457 = vpop.f32.mrb[0].mxu0
    %v458 = vadd.f32 %v368, %v457
    %v459 = vpop.f32.mrb[0].mxu0
    %v460 = vadd.f32 %v370, %v459
    %461 = vmatprep.mubr.f32.mxu0 0.0
    %v462 = vand.u32 %v67, 4294901760
    %v463 = vsub.f32 %v67, %v462
    %v464 = vand.u32 %v463, 4294901760
    %465 = vmatmul.mubr.f32.gmra.mrb[0].mxu0 %v464
    %v466 = vpop.f32.mrb[0].mxu0
    %v467 = vadd.f32 %v376, %v466
    %v468 = vpop.f32.mrb[0].mxu0
    %v469 = vadd.f32 %v378, %v468
    %470 = vdwg.mxu0
    %v471 = vand.u32 %v34, 4294901760
    %v472 = vsub.f32 %v34, %v471
    %v473 = vand.u32 %v472, 4294901760
    %474 = vmatprep.subr.mxu0 %v473
    %v475 = vand.u32 %v33, 4294901760
    %v476 = vsub.f32 %v33, %v475
    %v477 = vand.u32 %v476, 4294901760
    %478 = vmatpush1.msra.mxu0 %v477
    %v479 = vand.u32 %v37, 4294901760
    %v480 = vsub.f32 %v37, %v479
    %v481 = vand.u32 %v480, 4294901760
    %482 = vmatprep.subr.mxu0 %v481
    %v483 = vand.u32 %v36, 4294901760
    %v484 = vsub.f32 %v36, %v483
    %v485 = vand.u32 %v484, 4294901760
    %486 = vmatpush1.msra.mxu0 %v485
    %v487 = vand.u32 %v40, 4294901760
    %v488 = vsub.f32 %v40, %v487
    %v489 = vand.u32 %v488, 4294901760
    %490 = vmatprep.subr.mxu0 %v489
    %v491 = vand.u32 %v39, 4294901760
    %v492 = vsub.f32 %v39, %v491
    %v493 = vand.u32 %v492, 4294901760
    %494 = vmatpush1.msra.mxu0 %v493
    %v495 = vand.u32 %v43, 4294901760
    %v496 = vsub.f32 %v43, %v495
    %v497 = vand.u32 %v496, 4294901760
    %498 = vmatprep.subr.mxu0 %v497
    %v499 = vand.u32 %v42, 4294901760
    %v500 = vsub.f32 %v42, %v499
    %v501 = vand.u32 %v500, 4294901760
    %502 = vmatpush1.msra.mxu0 %v501
    %503 = vmatprep.subr.mxu0 0.0
    %504 = vmatpush1.msra.mxu0 0.0
    %505 = vmatprep.subr.mxu0 0.0
    %506 = vmatpush1.msra.mxu0 0.0
    %507 = vmatprep.subr.mxu0 0.0
    %508 = vmatpush1.msra.mxu0 0.0
    %509 = vmatprep.subr.mxu0 0.0
    %510 = vmatpush1.msra.mxu0 0.0
    %511 = vmatprep.subr.mxu0 0.0
    %512 = vmatpush1.msra.mxu0 0.0
    %513 = vmatprep.subr.mxu0 0.0
    %514 = vmatpush1.msra.mxu0 0.0
    %515 = vmatprep.subr.mxu0 0.0
    %516 = vmatpush1.msra.mxu0 0.0
    %517 = vmatprep.subr.mxu0 0.0
    %518 = vmatpush1.msra.mxu0 0.0
    %519 = vmatprep.subr.mxu0 0.0
    %520 = vmatpush1.msra.mxu0 0.0
    %521 = vmatprep.subr.mxu0 0.0
    %522 = vmatpush1.msra.mxu0 0.0
    %523 = vmatprep.subr.mxu0 0.0
    %524 = vmatpush1.msra.mxu0 0.0
    %525 = vmatprep.subr.mxu0 0.0
    %526 = vmatpush1.msra.mxu0 0.0
    %527 = vmatprep.subr.mxu0 0.0
    %528 = vmatpush1.msra.mxu0 0.0
    %529 = vmatprep.subr.mxu0 0.0
    %530 = vmatpush1.msra.mxu0 0.0
    %531 = vmatprep.subr.mxu0 0.0
    %532 = vmatpush1.msra.mxu0 0.0
    %533 = vmatprep.subr.mxu0 0.0
    %534 = vmatpush1.msra.mxu0 0.0
    %535 = vmatprep.subr.mxu0 0.0
    %536 = vmatpush1.msra.mxu0 0.0
    %537 = vmatprep.subr.mxu0 0.0
    %538 = vmatpush1.msra.mxu0 0.0
    %539 = vmatprep.subr.mxu0 0.0
    %540 = vmatpush1.msra.mxu0 0.0
    %541 = vmatprep.subr.mxu0 0.0
    %542 = vmatpush1.msra.mxu0 0.0
    %543 = vmatprep.subr.mxu0 0.0
    %544 = vmatpush1.msra.mxu0 0.0
    %545 = vmatprep.subr.mxu0 0.0
    %546 = vmatpush1.msra.mxu0 0.0
    %547 = vmatprep.subr.mxu0 0.0
    %548 = vmatpush1.msra.mxu0 0.0
    %549 = vmatprep.subr.mxu0 0.0
    %550 = vmatpush1.msra.mxu0 0.0
    %551 = vmatprep.subr.mxu0 0.0
    %552 = vmatpush1.msra.mxu0 0.0
    %553 = vmatprep.subr.mxu0 0.0
    %554 = vmatpush1.msra.mxu0 0.0
    %555 = vmatprep.subr.mxu0 0.0
    %556 = vmatpush1.msra.mxu0 0.0
    %557 = vmatprep.subr.mxu0 0.0
    %558 = vmatpush1.msra.mxu0 0.0
    %559 = vmatprep.mubr.f32.mxu0 0.0
    %v560 = vand.u32 %v64, 4294901760
    %561 = vmatmul.mubr.f32.gmra.mrb[0].mxu0 %v560
    %v562 = vpop.f32.mrb[0].mxu0
    %v563 = vadd.f32 %v458, %v562
    %v564 = vpop.f32.mrb[0].mxu0
    %v565 = vadd.f32 %v460, %v564
    %566 = vmatprep.mubr.f32.mxu0 0.0
    %v567 = vand.u32 %v67, 4294901760
    %568 = vmatmul.mubr.f32.gmra.mrb[0].mxu0 %v567
    %v569 = vpop.f32.mrb[0].mxu0
    %v570 = vadd.f32 %v467, %v569
    %v571 = vpop.f32.mrb[0].mxu0
    %v572 = vadd.f32 %v469, %v571
    %573 = vdwg.mxu0
    %v574 = vand.u32 %v34, 4294901760
    %575 = vmatprep.subr.mxu0 %v574
    %v576 = vand.u32 %v33, 4294901760
    %577 = vmatpush1.msra.mxu0 %v576
    %v578 = vand.u32 %v37, 4294901760
    %579 = vmatprep.subr.mxu0 %v578
    %v580 = vand.u32 %v36, 4294901760
    %581 = vmatpush1.msra.mxu0 %v580
    %v582 = vand.u32 %v40, 4294901760
    %583 = vmatprep.subr.mxu0 %v582
    %v584 = vand.u32 %v39, 4294901760
    %585 = vmatpush1.msra.mxu0 %v584
    %v586 = vand.u32 %v43, 4294901760
    %587 = vmatprep.subr.mxu0 %v586
    %v588 = vand.u32 %v42, 4294901760
    %589 = vmatpush1.msra.mxu0 %v588
    %590 = vmatprep.subr.mxu0 0.0
    %591 = vmatpush1.msra.mxu0 0.0
    %592 = vmatprep.subr.mxu0 0.0
    %593 = vmatpush1.msra.mxu0 0.0
    %594 = vmatprep.subr.mxu0 0.0
    %595 = vmatpush1.msra.mxu0 0.0
    %596 = vmatprep.subr.mxu0 0.0
    %597 = vmatpush1.msra.mxu0 0.0
    %598 = vmatprep.subr.mxu0 0.0
    %599 = vmatpush1.msra.mxu0 0.0
    %600 = vmatprep.subr.mxu0 0.0
    %601 = vmatpush1.msra.mxu0 0.0
    %602 = vmatprep.subr.mxu0 0.0
    %603 = vmatpush1.msra.mxu0 0.0
    %604 = vmatprep.subr.mxu0 0.0
    %605 = vmatpush1.msra.mxu0 0.0
    %606 = vmatprep.subr.mxu0 0.0
    %607 = vmatpush1.msra.mxu0 0.0
    %608 = vmatprep.subr.mxu0 0.0
    %609 = vmatpush1.msra.mxu0 0.0
    %610 = vmatprep.subr.mxu0 0.0
    %611 = vmatpush1.msra.mxu0 0.0
    %612 = vmatprep.subr.mxu0 0.0
    %613 = vmatpush1.msra.mxu0 0.0
    %614 = vmatprep.subr.mxu0 0.0
    %615 = vmatpush1.msra.mxu0 0.0
    %616 = vmatprep.subr.mxu0 0.0
    %617 = vmatpush1.msra.mxu0 0.0
    %618 = vmatprep.subr.mxu0 0.0
    %619 = vmatpush1.msra.mxu0 0.0
    %620 = vmatprep.subr.mxu0 0.0
    %621 = vmatpush1.msra.mxu0 0.0
    %622 = vmatprep.subr.mxu0 0.0
    %623 = vmatpush1.msra.mxu0 0.0
    %624 = vmatprep.subr.mxu0 0.0
    %625 = vmatpush1.msra.mxu0 0.0
    %626 = vmatprep.subr.mxu0 0.0
    %627 = vmatpush1.msra.mxu0 0.0
    %628 = vmatprep.subr.mxu0 0.0
    %629 = vmatpush1.msra.mxu0 0.0
    %630 = vmatprep.subr.mxu0 0.0
    %631 = vmatpush1.msra.mxu0 0.0
    %632 = vmatprep.subr.mxu0 0.0
    %633 = vmatpush1.msra.mxu0 0.0
    %634 = vmatprep.subr.mxu0 0.0
    %635 = vmatpush1.msra.mxu0 0.0
    %636 = vmatprep.subr.mxu0 0.0
    %637 = vmatpush1.msra.mxu0 0.0
    %638 = vmatprep.subr.mxu0 0.0
    %639 = vmatpush1.msra.mxu0 0.0
    %640 = vmatprep.subr.mxu0 0.0
    %641 = vmatpush1.msra.mxu0 0.0
    %642 = vmatprep.subr.mxu0 0.0
    %643 = vmatpush1.msra.mxu0 0.0
    %644 = vmatprep.subr.mxu0 0.0
    %645 = vmatpush1.msra.mxu0 0.0
    %646 = vmatprep.mubr.f32.mxu0 0.0
    %v647 = vand.u32 %v64, 4294901760
    %648 = vmatmul.mubr.f32.gmra.mrb[0].mxu0 %v647
    %v649 = vpop.f32.mrb[0].mxu0
    %v650 = vadd.f32 %v563, %v649
    %v651 = vpop.f32.mrb[0].mxu0
    %v652 = vadd.f32 %v565, %v651
    %653 = vmatprep.mubr.f32.mxu0 0.0
    %v654 = vand.u32 %v67, 4294901760
    %655 = vmatmul.mubr.f32.gmra.mrb[0].mxu0 %v654
    %v656 = vpop.f32.mrb[0].mxu0
    %v657 = vadd.f32 %v570, %v656
    %v658 = vpop.f32.mrb[0].mxu0
    %v659 = vadd.f32 %v572, %v658
    %660 = vdwg.mxu0
    %661 = vmatprep.subr.mxu0 0.0
    %v662 = vand.u32 %v35, 4294901760
    %663 = vmatpush1.msra.mxu0 %v662
    %664 = vmatprep.subr.mxu0 0.0
    %v665 = vand.u32 %v38, 4294901760
    %666 = vmatpush1.msra.mxu0 %v665
    %667 = vmatprep.subr.mxu0 0.0
    %v668 = vand.u32 %v41, 4294901760
    %669 = vmatpush1.msra.mxu0 %v668
    %670 = vmatprep.subr.mxu0 0.0
    %v671 = vand.u32 %v44, 4294901760
    %672 = vmatpush1.msra.mxu0 %v671
    %673 = vmatprep.subr.mxu0 0.0
    %674 = vmatpush1.msra.mxu0 0.0
    %675 = vmatprep.subr.mxu0 0.0
    %676 = vmatpush1.msra.mxu0 0.0
    %677 = vmatprep.subr.mxu0 0.0
    %678 = vmatpush1.msra.mxu0 0.0
    %679 = vmatprep.subr.mxu0 0.0
    %680 = vmatpush1.msra.mxu0 0.0
    %681 = vmatprep.subr.mxu0 0.0
    %682 = vmatpush1.msra.mxu0 0.0
    %683 = vmatprep.subr.mxu0 0.0
    %684 = vmatpush1.msra.mxu0 0.0
    %685 = vmatprep.subr.mxu0 0.0
    %686 = vmatpush1.msra.mxu0 0.0
    %687 = vmatprep.subr.mxu0 0.0
    %688 = vmatpush1.msra.mxu0 0.0
    %689 = vmatprep.subr.mxu0 0.0
    %690 = vmatpush1.msra.mxu0 0.0
    %691 = vmatprep.subr.mxu0 0.0
    %692 = vmatpush1.msra.mxu0 0.0
    %693 = vmatprep.subr.mxu0 0.0
    %694 = vmatpush1.msra.mxu0 0.0
    %695 = vmatprep.subr.mxu0 0.0
    %696 = vmatpush1.msra.mxu0 0.0
    %697 = vmatprep.subr.mxu0 0.0
    %698 = vmatpush1.msra.mxu0 0.0
    %699 = vmatprep.subr.mxu0 0.0
    %700 = vmatpush1.msra.mxu0 0.0
    %701 = vmatprep.subr.mxu0 0.0
    %702 = vmatpush1.msra.mxu0 0.0
    %703 = vmatprep.subr.mxu0 0.0
    %704 = vmatpush1.msra.mxu0 0.0
    %705 = vmatprep.subr.mxu0 0.0
    %706 = vmatpush1.msra.mxu0 0.0
    %707 = vmatprep.subr.mxu0 0.0
    %708 = vmatpush1.msra.mxu0 0.0
    %709 = vmatprep.subr.mxu0 0.0
    %710 = vmatpush1.msra.mxu0 0.0
    %711 = vmatprep.subr.mxu0 0.0
    %712 = vmatpush1.msra.mxu0 0.0
    %713 = vmatprep.subr.mxu0 0.0
    %714 = vmatpush1.msra.mxu0 0.0
    %715 = vmatprep.subr.mxu0 0.0
    %716 = vmatpush1.msra.mxu0 0.0
    %717 = vmatprep.subr.mxu0 0.0
    %718 = vmatpush1.msra.mxu0 0.0
    %719 = vmatprep.subr.mxu0 0.0
    %720 = vmatpush1.msra.mxu0 0.0
    %721 = vmatprep.subr.mxu0 0.0
    %722 = vmatpush1.msra.mxu0 0.0
    %723 = vmatprep.subr.mxu0 0.0
    %724 = vmatpush1.msra.mxu0 0.0
    %725 = vmatprep.subr.mxu0 0.0
    %726 = vmatpush1.msra.mxu0 0.0
    %727 = vmatprep.subr.mxu0 0.0
    %728 = vmatpush1.msra.mxu0 0.0
    %729 = vmatprep.mubr.f32.mxu0 0.0
    %v730 = vand.u32 %v64, 4294901760
    %v731 = vsub.f32 %v64, %v730
    %v732 = vand.u32 %v731, 4294901760
    %v733 = vsub.f32 %v731, %v732
    %v734 = vand.u32 %v733, 4294901760
    %735 = vmatmul.mubr.f32.gmra.mrb[0].mxu0 %v734
    %v736 = vpop.f32.mrb[0].mxu0
    %v737 = vadd.f32 %v58, %v736
    %v738 = vpop.f32.mrb[0].mxu0
    %739 = vmatprep.mubr.f32.mxu0 0.0
    %v740 = vand.u32 %v67, 4294901760
    %v741 = vsub.f32 %v67, %v740
    %v742 = vand.u32 %v741, 4294901760
    %v743 = vsub.f32 %v741, %v742
    %v744 = vand.u32 %v743, 4294901760
    %745 = vmatmul.mubr.f32.gmra.mrb[0].mxu0 %v744
    %v746 = vpop.f32.mrb[0].mxu0
    %v747 = vadd.f32 %v58, %v746
    %v748 = vpop.f32.mrb[0].mxu0
    %749 = vdwg.mxu0
    %750 = vmatprep.subr.mxu0 0.0
    %v751 = vand.u32 %v35, 4294901760
    %v752 = vsub.f32 %v35, %v751
    %v753 = vand.u32 %v752, 4294901760
    %v754 = vsub.f32 %v752, %v753
    %v755 = vand.u32 %v754, 4294901760
    %756 = vmatpush1.msra.mxu0 %v755
    %757 = vmatprep.subr.mxu0 0.0
    %v758 = vand.u32 %v38, 4294901760
    %v759 = vsub.f32 %v38, %v758
    %v760 = vand.u32 %v759, 4294901760
    %v761 = vsub.f32 %v759, %v760
    %v762 = vand.u32 %v761, 4294901760
    %763 = vmatpush1.msra.mxu0 %v762
    %764 = vmatprep.subr.mxu0 0.0
    %v765 = vand.u32 %v41, 4294901760
    %v766 = vsub.f32 %v41, %v765
    %v767 = vand.u32 %v766, 4294901760
    %v768 = vsub.f32 %v766, %v767
    %v769 = vand.u32 %v768, 4294901760
    %770 = vmatpush1.msra.mxu0 %v769
    %771 = vmatprep.subr.mxu0 0.0
    %v772 = vand.u32 %v44, 4294901760
    %v773 = vsub.f32 %v44, %v772
    %v774 = vand.u32 %v773, 4294901760
    %v775 = vsub.f32 %v773, %v774
    %v776 = vand.u32 %v775, 4294901760
    %777 = vmatpush1.msra.mxu0 %v776
    %778 = vmatprep.subr.mxu0 0.0
    %779 = vmatpush1.msra.mxu0 0.0
    %780 = vmatprep.subr.mxu0 0.0
    %781 = vmatpush1.msra.mxu0 0.0
    %782 = vmatprep.subr.mxu0 0.0
    %783 = vmatpush1.msra.mxu0 0.0
    %784 = vmatprep.subr.mxu0 0.0
    %785 = vmatpush1.msra.mxu0 0.0
    %786 = vmatprep.subr.mxu0 0.0
    %787 = vmatpush1.msra.mxu0 0.0
    %788 = vmatprep.subr.mxu0 0.0
    %789 = vmatpush1.msra.mxu0 0.0
    %790 = vmatprep.subr.mxu0 0.0
    %791 = vmatpush1.msra.mxu0 0.0
    %792 = vmatprep.subr.mxu0 0.0
    %793 = vmatpush1.msra.mxu0 0.0
    %794 = vmatprep.subr.mxu0 0.0
    %795 = vmatpush1.msra.mxu0 0.0
    %796 = vmatprep.subr.mxu0 0.0
    %797 = vmatpush1.msra.mxu0 0.0
    %798 = vmatprep.subr.mxu0 0.0
    %799 = vmatpush1.msra.mxu0 0.0
    %800 = vmatprep.subr.mxu0 0.0
    %801 = vmatpush1.msra.mxu0 0.0
    %802 = vmatprep.subr.mxu0 0.0
    %803 = vmatpush1.msra.mxu0 0.0
    %804 = vmatprep.subr.mxu0 0.0
    %805 = vmatpush1.msra.mxu0 0.0
    %806 = vmatprep.subr.mxu0 0.0
    %807 = vmatpush1.msra.mxu0 0.0
    %808 = vmatprep.subr.mxu0 0.0
    %809 = vmatpush1.msra.mxu0 0.0
    %810 = vmatprep.subr.mxu0 0.0
    %811 = vmatpush1.msra.mxu0 0.0
    %812 = vmatprep.subr.mxu0 0.0
    %813 = vmatpush1.msra.mxu0 0.0
    %814 = vmatprep.subr.mxu0 0.0
    %815 = vmatpush1.msra.mxu0 0.0
    %816 = vmatprep.subr.mxu0 0.0
    %817 = vmatpush1.msra.mxu0 0.0
    %818 = vmatprep.subr.mxu0 0.0
    %819 = vmatpush1.msra.mxu0 0.0
    %820 = vmatprep.subr.mxu0 0.0
    %821 = vmatpush1.msra.mxu0 0.0
    %822 = vmatprep.subr.mxu0 0.0
    %823 = vmatpush1.msra.mxu0 0.0
    %824 = vmatprep.subr.mxu0 0.0
    %825 = vmatpush1.msra.mxu0 0.0
    %826 = vmatprep.subr.mxu0 0.0
    %827 = vmatpush1.msra.mxu0 0.0
    %828 = vmatprep.subr.mxu0 0.0
    %829 = vmatpush1.msra.mxu0 0.0
    %830 = vmatprep.subr.mxu0 0.0
    %831 = vmatpush1.msra.mxu0 0.0
    %832 = vmatprep.subr.mxu0 0.0
    %833 = vmatpush1.msra.mxu0 0.0
    %834 = vmatprep.mubr.f32.mxu0 0.0
    %v835 = vand.u32 %v64, 4294901760
    %836 = vmatmul.mubr.f32.gmra.mrb[0].mxu0 %v835
    %v837 = vpop.f32.mrb[0].mxu0
    %v838 = vadd.f32 %v737, %v837
    %v839 = vpop.f32.mrb[0].mxu0
    %840 = vmatprep.mubr.f32.mxu0 0.0
    %v841 = vand.u32 %v67, 4294901760
    %842 = vmatmul.mubr.f32.gmra.mrb[0].mxu0 %v841
    %v843 = vpop.f32.mrb[0].mxu0
    %v844 = vadd.f32 %v747, %v843
    %v845 = vpop.f32.mrb[0].mxu0
    %846 = vdwg.mxu0
    %847 = vmatprep.subr.mxu0 0.0
    %v848 = vand.u32 %v35, 4294901760
    %v849 = vsub.f32 %v35, %v848
    %850 = vmatpush1.msra.mxu0 %v849
    %851 = vmatprep.subr.mxu0 0.0
    %v852 = vand.u32 %v38, 4294901760
    %v853 = vsub.f32 %v38, %v852
    %854 = vmatpush1.msra.mxu0 %v853
    %855 = vmatprep.subr.mxu0 0.0
    %v856 = vand.u32 %v41, 4294901760
    %v857 = vsub.f32 %v41, %v856
    %858 = vmatpush1.msra.mxu0 %v857
    %859 = vmatprep.subr.mxu0 0.0
    %v860 = vand.u32 %v44, 4294901760
    %v861 = vsub.f32 %v44, %v860
    %862 = vmatpush1.msra.mxu0 %v861
    %863 = vmatprep.subr.mxu0 0.0
    %864 = vmatpush1.msra.mxu0 0.0
    %865 = vmatprep.subr.mxu0 0.0
    %866 = vmatpush1.msra.mxu0 0.0
    %867 = vmatprep.subr.mxu0 0.0
    %868 = vmatpush1.msra.mxu0 0.0
    %869 = vmatprep.subr.mxu0 0.0
    %870 = vmatpush1.msra.mxu0 0.0
    %871 = vmatprep.subr.mxu0 0.0
    %872 = vmatpush1.msra.mxu0 0.0
    %873 = vmatprep.subr.mxu0 0.0
    %874 = vmatpush1.msra.mxu0 0.0
    %875 = vmatprep.subr.mxu0 0.0
    %876 = vmatpush1.msra.mxu0 0.0
    %877 = vmatprep.subr.mxu0 0.0
    %878 = vmatpush1.msra.mxu0 0.0
    %879 = vmatprep.subr.mxu0 0.0
    %880 = vmatpush1.msra.mxu0 0.0
    %881 = vmatprep.subr.mxu0 0.0
    %882 = vmatpush1.msra.mxu0 0.0
    %883 = vmatprep.subr.mxu0 0.0
    %884 = vmatpush1.msra.mxu0 0.0
    %885 = vmatprep.subr.mxu0 0.0
    %886 = vmatpush1.msra.mxu0 0.0
    %887 = vmatprep.subr.mxu0 0.0
    %888 = vmatpush1.msra.mxu0 0.0
    %889 = vmatprep.subr.mxu0 0.0
    %890 = vmatpush1.msra.mxu0 0.0
    %891 = vmatprep.subr.mxu0 0.0
    %892 = vmatpush1.msra.mxu0 0.0
    %893 = vmatprep.subr.mxu0 0.0
    %894 = vmatpush1.msra.mxu0 0.0
    %895 = vmatprep.subr.mxu0 0.0
    %896 = vmatpush1.msra.mxu0 0.0
    %897 = vmatprep.subr.mxu0 0.0
    %898 = vmatpush1.msra.mxu0 0.0
    %899 = vmatprep.subr.mxu0 0.0
    %900 = vmatpush1.msra.mxu0 0.0
    %901 = vmatprep.subr.mxu0 0.0
    %902 = vmatpush1.msra.mxu0 0.0
    %903 = vmatprep.subr.mxu0 0.0
    %904 = vmatpush1.msra.mxu0 0.0
    %905 = vmatprep.subr.mxu0 0.0
    %906 = vmatpush1.msra.mxu0 0.0
    %907 = vmatprep.subr.mxu0 0.0
    %908 = vmatpush1.msra.mxu0 0.0
    %909 = vmatprep.subr.mxu0 0.0
    %910 = vmatpush1.msra.mxu0 0.0
    %911 = vmatprep.subr.mxu0 0.0
    %912 = vmatpush1.msra.mxu0 0.0
    %913 = vmatprep.subr.mxu0 0.0
    %914 = vmatpush1.msra.mxu0 0.0
    %915 = vmatprep.subr.mxu0 0.0
    %916 = vmatpush1.msra.mxu0 0.0
    %917 = vmatprep.subr.mxu0 0.0
    %918 = vmatpush1.msra.mxu0 0.0
    %919 = vmatprep.mubr.f32.mxu0 0.0
    %v920 = vand.u32 %v64, 4294901760
    %v921 = vsub.f32 %v64, %v920
    %922 = vmatmul.mubr.f32.gmra.mrb[0].mxu0 %v921
    %v923 = vpop.f32.mrb[0].mxu0
    %v924 = vadd.f32 %v838, %v923
    %v925 = vpop.f32.mrb[0].mxu0
    %926 = vmatprep.mubr.f32.mxu0 0.0
    %v927 = vand.u32 %v67, 4294901760
    %v928 = vsub.f32 %v67, %v927
    %929 = vmatmul.mubr.f32.gmra.mrb[0].mxu0 %v928
    %v930 = vpop.f32.mrb[0].mxu0
    %v931 = vadd.f32 %v844, %v930
    %v932 = vpop.f32.mrb[0].mxu0
    %933 = vdwg.mxu0
    %934 = vmatprep.subr.mxu0 0.0
    %v935 = vand.u32 %v35, 4294901760
    %936 = vmatpush1.msra.mxu0 %v935
    %937 = vmatprep.subr.mxu0 0.0
    %v938 = vand.u32 %v38, 4294901760
    %939 = vmatpush1.msra.mxu0 %v938
    %940 = vmatprep.subr.mxu0 0.0
    %v941 = vand.u32 %v41, 4294901760
    %942 = vmatpush1.msra.mxu0 %v941
    %943 = vmatprep.subr.mxu0 0.0
    %v944 = vand.u32 %v44, 4294901760
    %945 = vmatpush1.msra.mxu0 %v944
    %946 = vmatprep.subr.mxu0 0.0
    %947 = vmatpush1.msra.mxu0 0.0
    %948 = vmatprep.subr.mxu0 0.0
    %949 = vmatpush1.msra.mxu0 0.0
    %950 = vmatprep.subr.mxu0 0.0
    %951 = vmatpush1.msra.mxu0 0.0
    %952 = vmatprep.subr.mxu0 0.0
    %953 = vmatpush1.msra.mxu0 0.0
    %954 = vmatprep.subr.mxu0 0.0
    %955 = vmatpush1.msra.mxu0 0.0
    %956 = vmatprep.subr.mxu0 0.0
    %957 = vmatpush1.msra.mxu0 0.0
    %958 = vmatprep.subr.mxu0 0.0
    %959 = vmatpush1.msra.mxu0 0.0
    %960 = vmatprep.subr.mxu0 0.0
    %961 = vmatpush1.msra.mxu0 0.0
    %962 = vmatprep.subr.mxu0 0.0
    %963 = vmatpush1.msra.mxu0 0.0
    %964 = vmatprep.subr.mxu0 0.0
    %965 = vmatpush1.msra.mxu0 0.0
    %966 = vmatprep.subr.mxu0 0.0
    %967 = vmatpush1.msra.mxu0 0.0
    %968 = vmatprep.subr.mxu0 0.0
    %969 = vmatpush1.msra.mxu0 0.0
    %970 = vmatprep.subr.mxu0 0.0
    %971 = vmatpush1.msra.mxu0 0.0
    %972 = vmatprep.subr.mxu0 0.0
    %973 = vmatpush1.msra.mxu0 0.0
    %974 = vmatprep.subr.mxu0 0.0
    %975 = vmatpush1.msra.mxu0 0.0
    %976 = vmatprep.subr.mxu0 0.0
    %977 = vmatpush1.msra.mxu0 0.0
    %978 = vmatprep.subr.mxu0 0.0
    %979 = vmatpush1.msra.mxu0 0.0
    %980 = vmatprep.subr.mxu0 0.0
    %981 = vmatpush1.msra.mxu0 0.0
    %982 = vmatprep.subr.mxu0 0.0
    %983 = vmatpush1.msra.mxu0 0.0
    %984 = vmatprep.subr.mxu0 0.0
    %985 = vmatpush1.msra.mxu0 0.0
    %986 = vmatprep.subr.mxu0 0.0
    %987 = vmatpush1.msra.mxu0 0.0
    %988 = vmatprep.subr.mxu0 0.0
    %989 = vmatpush1.msra.mxu0 0.0
    %990 = vmatprep.subr.mxu0 0.0
    %991 = vmatpush1.msra.mxu0 0.0
    %992 = vmatprep.subr.mxu0 0.0
    %993 = vmatpush1.msra.mxu0 0.0
    %994 = vmatprep.subr.mxu0 0.0
    %995 = vmatpush1.msra.mxu0 0.0
    %996 = vmatprep.subr.mxu0 0.0
    %997 = vmatpush1.msra.mxu0 0.0
    %998 = vmatprep.subr.mxu0 0.0
    %999 = vmatpush1.msra.mxu0 0.0
    %1000 = vmatprep.subr.mxu0 0.0
    %1001 = vmatpush1.msra.mxu0 0.0
    %1002 = vmatprep.mubr.f32.mxu0 0.0
    %v1003 = vand.u32 %v64, 4294901760
    %v1004 = vsub.f32 %v64, %v1003
    %v1005 = vand.u32 %v1004, 4294901760
    %1006 = vmatmul.mubr.f32.gmra.mrb[0].mxu0 %v1005
    %v1007 = vpop.f32.mrb[0].mxu0
    %v1008 = vadd.f32 %v924, %v1007
    %v1009 = vpop.f32.mrb[0].mxu0
    %1010 = vmatprep.mubr.f32.mxu0 0.0
    %v1011 = vand.u32 %v67, 4294901760
    %v1012 = vsub.f32 %v67, %v1011
    %v1013 = vand.u32 %v1012, 4294901760
    %1014 = vmatmul.mubr.f32.gmra.mrb[0].mxu0 %v1013
    %v1015 = vpop.f32.mrb[0].mxu0
    %v1016 = vadd.f32 %v931, %v1015
    %v1017 = vpop.f32.mrb[0].mxu0
    %1018 = vdwg.mxu0
    %1019 = vmatprep.subr.mxu0 0.0
    %v1020 = vand.u32 %v35, 4294901760
    %v1021 = vsub.f32 %v35, %v1020
    %v1022 = vand.u32 %v1021, 4294901760
    %1023 = vmatpush1.msra.mxu0 %v1022
    %1024 = vmatprep.subr.mxu0 0.0
    %v1025 = vand.u32 %v38, 4294901760
    %v1026 = vsub.f32 %v38, %v1025
    %v1027 = vand.u32 %v1026, 4294901760
    %1028 = vmatpush1.msra.mxu0 %v1027
    %1029 = vmatprep.subr.mxu0 0.0
    %v1030 = vand.u32 %v41, 4294901760
    %v1031 = vsub.f32 %v41, %v1030
    %v1032 = vand.u32 %v1031, 4294901760
    %1033 = vmatpush1.msra.mxu0 %v1032
    %1034 = vmatprep.subr.mxu0 0.0
    %v1035 = vand.u32 %v44, 4294901760
    %v1036 = vsub.f32 %v44, %v1035
    %v1037 = vand.u32 %v1036, 4294901760
    %1038 = vmatpush1.msra.mxu0 %v1037
    %1039 = vmatprep.subr.mxu0 0.0
    %1040 = vmatpush1.msra.mxu0 0.0
    %1041 = vmatprep.subr.mxu0 0.0
    %1042 = vmatpush1.msra.mxu0 0.0
    %1043 = vmatprep.subr.mxu0 0.0
    %1044 = vmatpush1.msra.mxu0 0.0
    %1045 = vmatprep.subr.mxu0 0.0
    %1046 = vmatpush1.msra.mxu0 0.0
    %1047 = vmatprep.subr.mxu0 0.0
    %1048 = vmatpush1.msra.mxu0 0.0
    %1049 = vmatprep.subr.mxu0 0.0
    %1050 = vmatpush1.msra.mxu0 0.0
    %1051 = vmatprep.subr.mxu0 0.0
    %1052 = vmatpush1.msra.mxu0 0.0
    %1053 = vmatprep.subr.mxu0 0.0
    %1054 = vmatpush1.msra.mxu0 0.0
    %1055 = vmatprep.subr.mxu0 0.0
    %1056 = vmatpush1.msra.mxu0 0.0
    %1057 = vmatprep.subr.mxu0 0.0
    %1058 = vmatpush1.msra.mxu0 0.0
    %1059 = vmatprep.subr.mxu0 0.0
    %1060 = vmatpush1.msra.mxu0 0.0
    %1061 = vmatprep.subr.mxu0 0.0
    %1062 = vmatpush1.msra.mxu0 0.0
    %1063 = vmatprep.subr.mxu0 0.0
    %1064 = vmatpush1.msra.mxu0 0.0
    %1065 = vmatprep.subr.mxu0 0.0
    %1066 = vmatpush1.msra.mxu0 0.0
    %1067 = vmatprep.subr.mxu0 0.0
    %1068 = vmatpush1.msra.mxu0 0.0
    %1069 = vmatprep.subr.mxu0 0.0
    %1070 = vmatpush1.msra.mxu0 0.0
    %1071 = vmatprep.subr.mxu0 0.0
    %1072 = vmatpush1.msra.mxu0 0.0
    %1073 = vmatprep.subr.mxu0 0.0
    %1074 = vmatpush1.msra.mxu0 0.0
    %1075 = vmatprep.subr.mxu0 0.0
    %1076 = vmatpush1.msra.mxu0 0.0
    %1077 = vmatprep.subr.mxu0 0.0
    %1078 = vmatpush1.msra.mxu0 0.0
    %1079 = vmatprep.subr.mxu0 0.0
    %1080 = vmatpush1.msra.mxu0 0.0
    %1081 = vmatprep.subr.mxu0 0.0
    %1082 = vmatpush1.msra.mxu0 0.0
    %1083 = vmatprep.subr.mxu0 0.0
    %1084 = vmatpush1.msra.mxu0 0.0
    %1085 = vmatprep.subr.mxu0 0.0
    %1086 = vmatpush1.msra.mxu0 0.0
    %1087 = vmatprep.subr.mxu0 0.0
    %1088 = vmatpush1.msra.mxu0 0.0
    %1089 = vmatprep.subr.mxu0 0.0
    %1090 = vmatpush1.msra.mxu0 0.0
    %1091 = vmatprep.subr.mxu0 0.0
    %1092 = vmatpush1.msra.mxu0 0.0
    %1093 = vmatprep.subr.mxu0 0.0
    %1094 = vmatpush1.msra.mxu0 0.0
    %1095 = vmatprep.mubr.f32.mxu0 0.0
    %v1096 = vand.u32 %v64, 4294901760
    %1097 = vmatmul.mubr.f32.gmra.mrb[0].mxu0 %v1096
    %v1098 = vpop.f32.mrb[0].mxu0
    %v1099 = vadd.f32 %v1008, %v1098
    %v1100 = vpop.f32.mrb[0].mxu0
    %1101 = vmatprep.mubr.f32.mxu0 0.0
    %v1102 = vand.u32 %v67, 4294901760
    %1103 = vmatmul.mubr.f32.gmra.mrb[0].mxu0 %v1102
    %v1104 = vpop.f32.mrb[0].mxu0
    %v1105 = vadd.f32 %v1016, %v1104
    %v1106 = vpop.f32.mrb[0].mxu0
    %1107 = vdwg.mxu0
    %1108 = vmatprep.subr.mxu0 0.0
    %v1109 = vand.u32 %v35, 4294901760
    %1110 = vmatpush1.msra.mxu0 %v1109
    %1111 = vmatprep.subr.mxu0 0.0
    %v1112 = vand.u32 %v38, 4294901760
    %1113 = vmatpush1.msra.mxu0 %v1112
    %1114 = vmatprep.subr.mxu0 0.0
    %v1115 = vand.u32 %v41, 4294901760
    %1116 = vmatpush1.msra.mxu0 %v1115
    %1117 = vmatprep.subr.mxu0 0.0
    %v1118 = vand.u32 %v44, 4294901760
    %1119 = vmatpush1.msra.mxu0 %v1118
    %1120 = vmatprep.subr.mxu0 0.0
    %1121 = vmatpush1.msra.mxu0 0.0
    %1122 = vmatprep.subr.mxu0 0.0
    %1123 = vmatpush1.msra.mxu0 0.0
    %1124 = vmatprep.subr.mxu0 0.0
    %1125 = vmatpush1.msra.mxu0 0.0
    %1126 = vmatprep.subr.mxu0 0.0
    %1127 = vmatpush1.msra.mxu0 0.0
    %1128 = vmatprep.subr.mxu0 0.0
    %1129 = vmatpush1.msra.mxu0 0.0
    %1130 = vmatprep.subr.mxu0 0.0
    %1131 = vmatpush1.msra.mxu0 0.0
    %1132 = vmatprep.subr.mxu0 0.0
    %1133 = vmatpush1.msra.mxu0 0.0
    %1134 = vmatprep.subr.mxu0 0.0
    %1135 = vmatpush1.msra.mxu0 0.0
    %1136 = vmatprep.subr.mxu0 0.0
    %1137 = vmatpush1.msra.mxu0 0.0
    %1138 = vmatprep.subr.mxu0 0.0
    %1139 = vmatpush1.msra.mxu0 0.0
    %1140 = vmatprep.subr.mxu0 0.0
    %1141 = vmatpush1.msra.mxu0 0.0
    %1142 = vmatprep.subr.mxu0 0.0
    %1143 = vmatpush1.msra.mxu0 0.0
    %1144 = vmatprep.subr.mxu0 0.0
    %1145 = vmatpush1.msra.mxu0 0.0
    %1146 = vmatprep.subr.mxu0 0.0
    %1147 = vmatpush1.msra.mxu0 0.0
    %1148 = vmatprep.subr.mxu0 0.0
    %1149 = vmatpush1.msra.mxu0 0.0
    %1150 = vmatprep.subr.mxu0 0.0
    %1151 = vmatpush1.msra.mxu0 0.0
    %1152 = vmatprep.subr.mxu0 0.0
    %1153 = vmatpush1.msra.mxu0 0.0
    %1154 = vmatprep.subr.mxu0 0.0
    %1155 = vmatpush1.msra.mxu0 0.0
    %1156 = vmatprep.subr.mxu0 0.0
    %1157 = vmatpush1.msra.mxu0 0.0
    %1158 = vmatprep.subr.mxu0 0.0
    %1159 = vmatpush1.msra.mxu0 0.0
    %1160 = vmatprep.subr.mxu0 0.0
    %1161 = vmatpush1.msra.mxu0 0.0
    %1162 = vmatprep.subr.mxu0 0.0
    %1163 = vmatpush1.msra.mxu0 0.0
    %1164 = vmatprep.subr.mxu0 0.0
    %1165 = vmatpush1.msra.mxu0 0.0
    %1166 = vmatprep.subr.mxu0 0.0
    %1167 = vmatpush1.msra.mxu0 0.0
    %1168 = vmatprep.subr.mxu0 0.0
    %1169 = vmatpush1.msra.mxu0 0.0
    %1170 = vmatprep.subr.mxu0 0.0
    %1171 = vmatpush1.msra.mxu0 0.0
    %1172 = vmatprep.subr.mxu0 0.0
    %1173 = vmatpush1.msra.mxu0 0.0
    %1174 = vmatprep.subr.mxu0 0.0
    %1175 = vmatpush1.msra.mxu0 0.0
    %1176 = vmatprep.mubr.f32.mxu0 0.0
    %v1177 = vand.u32 %v64, 4294901760
    %1178 = vmatmul.mubr.f32.gmra.mrb[0].mxu0 %v1177
    %v1179 = vpop.f32.mrb[0].mxu0
    %v1180 = vadd.f32 %v1099, %v1179
    %v1181 = vpop.f32.mrb[0].mxu0
    %1182 = vmatprep.mubr.f32.mxu0 0.0
    %v1183 = vand.u32 %v67, 4294901760
    %1184 = vmatmul.mubr.f32.gmra.mrb[0].mxu0 %v1183
    %v1185 = vpop.f32.mrb[0].mxu0
    %v1186 = vadd.f32 %v1105, %v1185
    %v1187 = vpop.f32.mrb[0].mxu0
    %1188 = vdwg.mxu0
    %v1189 = vld [vmem:[%s2] sm:$0xff]
    %v1190 = vld [vmem:[%s2 + $0x8] sm:$0xff]
    %v1191 = vld [vmem:[%s2 + $0x10] sm:$0xff]
    %v1192 = vld [vmem:[%s2 + $0x18] sm:$0xff]
    %v1193 = vmul.f32 %v650, %v1189
    %v1194 = vmul.f32 %v650, %v1190
    %v1195 = vmul.f32 %v650, %v1191
    %v1196 = vmul.f32 %v650, %v1192
    %v1197 = vmul.f32 %v657, %v1189
    %v1198 = vmul.f32 %v657, %v1190
    %v1199 = vmul.f32 %v657, %v1191
    %v1200 = vmul.f32 %v657, %v1192
    %1201 = vmatprep.subr.mxu0 0.0
    %v1202 = vand.u32 %v652, 4294901760
    %1203 = vmatpush1.xpose.msra.mxu0 %v1202
    %1204 = vmatprep.subr.mxu0 0.0
    %1205 = vmatpush1.xpose.msra.mxu0 0.0
    %1206 = vmatprep.subr.mxu0 0.0
    %1207 = vmatpush1.xpose.msra.mxu0 0.0
    %1208 = vmatprep.subr.mxu0 0.0
    %1209 = vmatpush1.xpose.msra.mxu0 0.0
    %1210 = vmatprep.subr.mxu0 0.0
    %1211 = vmatpush1.xpose.msra.mxu0 0.0
    %1212 = vmatprep.subr.mxu0 0.0
    %1213 = vmatpush1.xpose.msra.mxu0 0.0
    %1214 = vmatprep.subr.mxu0 0.0
    %1215 = vmatpush1.xpose.msra.mxu0 0.0
    %1216 = vmatprep.subr.mxu0 0.0
    %1217 = vmatpush1.xpose.msra.mxu0 0.0
    %1218 = vmatprep.subr.mxu0 0.0
    %1219 = vmatpush1.xpose.msra.mxu0 0.0
    %1220 = vmatprep.subr.mxu0 0.0
    %1221 = vmatpush1.xpose.msra.mxu0 0.0
    %1222 = vmatprep.subr.mxu0 0.0
    %1223 = vmatpush1.xpose.msra.mxu0 0.0
    %1224 = vmatprep.subr.mxu0 0.0
    %1225 = vmatpush1.xpose.msra.mxu0 0.0
    %1226 = vmatprep.subr.mxu0 0.0
    %1227 = vmatpush1.xpose.msra.mxu0 0.0
    %1228 = vmatprep.subr.mxu0 0.0
    %1229 = vmatpush1.xpose.msra.mxu0 0.0
    %1230 = vmatprep.subr.mxu0 0.0
    %1231 = vmatpush1.xpose.msra.mxu0 0.0
    %1232 = vmatprep.subr.mxu0 0.0
    %1233 = vmatpush1.xpose.msra.mxu0 0.0
    %1234 = vmatprep.subr.mxu0 0.0
    %1235 = vmatpush1.xpose.msra.mxu0 0.0
    %1236 = vmatprep.subr.mxu0 0.0
    %1237 = vmatpush1.xpose.msra.mxu0 0.0
    %1238 = vmatprep.subr.mxu0 0.0
    %1239 = vmatpush1.xpose.msra.mxu0 0.0
    %1240 = vmatprep.subr.mxu0 0.0
    %1241 = vmatpush1.xpose.msra.mxu0 0.0
    %1242 = vmatprep.subr.mxu0 0.0
    %1243 = vmatpush1.xpose.msra.mxu0 0.0
    %1244 = vmatprep.subr.mxu0 0.0
    %1245 = vmatpush1.xpose.msra.mxu0 0.0
    %1246 = vmatprep.subr.mxu0 0.0
    %1247 = vmatpush1.xpose.msra.mxu0 0.0
    %1248 = vmatprep.subr.mxu0 0.0
    %1249 = vmatpush1.xpose.msra.mxu0 0.0
    %1250 = vmatprep.subr.mxu0 0.0
    %1251 = vmatpush1.xpose.msra.mxu0 0.0
    %1252 = vmatprep.subr.mxu0 0.0
    %1253 = vmatpush1.xpose.msra.mxu0 0.0
    %1254 = vmatprep.subr.mxu0 0.0
    %1255 = vmatpush1.xpose.msra.mxu0 0.0
    %1256 = vmatprep.subr.mxu0 0.0
    %1257 = vmatpush1.xpose.msra.mxu0 0.0
    %1258 = vmatprep.subr.mxu0 0.0
    %1259 = vmatpush1.xpose.msra.mxu0 0.0
    %1260 = vmatprep.subr.mxu0 0.0
    %1261 = vmatpush1.xpose.msra.mxu0 0.0
    %1262 = vmatprep.subr.mxu0 0.0
    %1263 = vmatpush1.xpose.msra.mxu0 0.0
    %1264 = vmatprep.subr.mxu0 0.0
    %1265 = vmatpush1.xpose.msra.mxu0 0.0
    %1266 = vmatprep.mubr.f32.mxu0 0.0
    %v1267 = vand.u32 %v1193, 4294901760
    %v1268 = vsub.f32 %v1193, %v1267
    %v1269 = vand.u32 %v1268, 4294901760
    %v1270 = vsub.f32 %v1268, %v1269
    %v1271 = vand.u32 %v1270, 4294901760
    %1272 = vmatmul.mubr.f32.gmra.mrb[0].mxu0 %v1271
    %v1273 = vpop.f32.mrb[0].mxu0
    %v1274 = vadd.f32 0.0, %v1273
    %v1275 = vpop.f32.mrb[0].mxu0
    %1276 = vmatprep.mubr.f32.mxu0 0.0
    %v1277 = vand.u32 %v1194, 4294901760
    %v1278 = vsub.f32 %v1194, %v1277
    %v1279 = vand.u32 %v1278, 4294901760
    %v1280 = vsub.f32 %v1278, %v1279
    %v1281 = vand.u32 %v1280, 4294901760
    %1282 = vmatmul.mubr.f32.gmra.mrb[0].mxu0 %v1281
    %v1283 = vpop.f32.mrb[0].mxu0
    %v1284 = vadd.f32 0.0, %v1283
    %v1285 = vpop.f32.mrb[0].mxu0
    %1286 = vmatprep.mubr.f32.mxu0 0.0
    %v1287 = vand.u32 %v1195, 4294901760
    %v1288 = vsub.f32 %v1195, %v1287
    %v1289 = vand.u32 %v1288, 4294901760
    %v1290 = vsub.f32 %v1288, %v1289
    %v1291 = vand.u32 %v1290, 4294901760
    %1292 = vmatmul.mubr.f32.gmra.mrb[0].mxu0 %v1291
    %v1293 = vpop.f32.mrb[0].mxu0
    %v1294 = vadd.f32 0.0, %v1293
    %v1295 = vpop.f32.mrb[0].mxu0
    %1296 = vmatprep.mubr.f32.mxu0 0.0
    %v1297 = vand.u32 %v1196, 4294901760
    %v1298 = vsub.f32 %v1196, %v1297
    %v1299 = vand.u32 %v1298, 4294901760
    %v1300 = vsub.f32 %v1298, %v1299
    %v1301 = vand.u32 %v1300, 4294901760
    %1302 = vmatmul.mubr.f32.gmra.mrb[0].mxu0 %v1301
    %v1303 = vpop.f32.mrb[0].mxu0
    %v1304 = vadd.f32 0.0, %v1303
    %v1305 = vpop.f32.mrb[0].mxu0
    %1306 = vdwg.mxu0
    %1307 = vmatprep.subr.mxu0 0.0
    %v1308 = vand.u32 %v652, 4294901760
    %v1309 = vsub.f32 %v652, %v1308
    %v1310 = vand.u32 %v1309, 4294901760
    %v1311 = vsub.f32 %v1309, %v1310
    %v1312 = vand.u32 %v1311, 4294901760
    %1313 = vmatpush1.xpose.msra.mxu0 %v1312
    %1314 = vmatprep.subr.mxu0 0.0
    %1315 = vmatpush1.xpose.msra.mxu0 0.0
    %1316 = vmatprep.subr.mxu0 0.0
    %1317 = vmatpush1.xpose.msra.mxu0 0.0
    %1318 = vmatprep.subr.mxu0 0.0
    %1319 = vmatpush1.xpose.msra.mxu0 0.0
    %1320 = vmatprep.subr.mxu0 0.0
    %1321 = vmatpush1.xpose.msra.mxu0 0.0
    %1322 = vmatprep.subr.mxu0 0.0
    %1323 = vmatpush1.xpose.msra.mxu0 0.0
    %1324 = vmatprep.subr.mxu0 0.0
    %1325 = vmatpush1.xpose.msra.mxu0 0.0
    %1326 = vmatprep.subr.mxu0 0.0
    %1327 = vmatpush1.xpose.msra.mxu0 0.0
    %1328 = vmatprep.subr.mxu0 0.0
    %1329 = vmatpush1.xpose.msra.mxu0 0.0
    %1330 = vmatprep.subr.mxu0 0.0
    %1331 = vmatpush1.xpose.msra.mxu0 0.0
    %1332 = vmatprep.subr.mxu0 0.0
    %1333 = vmatpush1.xpose.msra.mxu0 0.0
    %1334 = vmatprep.subr.mxu0 0.0
    %1335 = vmatpush1.xpose.msra.mxu0 0.0
    %1336 = vmatprep.subr.mxu0 0.0
    %1337 = vmatpush1.xpose.msra.mxu0 0.0
    %1338 = vmatprep.subr.mxu0 0.0
    %1339 = vmatpush1.xpose.msra.mxu0 0.0
    %1340 = vmatprep.subr.mxu0 0.0
    %1341 = vmatpush1.xpose.msra.mxu0 0.0
    %1342 = vmatprep.subr.mxu0 0.0
    %1343 = vmatpush1.xpose.msra.mxu0 0.0
    %1344 = vmatprep.subr.mxu0 0.0
    %1345 = vmatpush1.xpose.msra.mxu0 0.0
    %1346 = vmatprep.subr.mxu0 0.0
    %1347 = vmatpush1.xpose.msra.mxu0 0.0
    %1348 = vmatprep.subr.mxu0 0.0
    %1349 = vmatpush1.xpose.msra.mxu0 0.0
    %1350 = vmatprep.subr.mxu0 0.0
    %1351 = vmatpush1.xpose.msra.mxu0 0.0
    %1352 = vmatprep.subr.mxu0 0.0
    %1353 = vmatpush1.xpose.msra.mxu0 0.0
    %1354 = vmatprep.subr.mxu0 0.0
    %1355 = vmatpush1.xpose.msra.mxu0 0.0
    %1356 = vmatprep.subr.mxu0 0.0
    %1357 = vmatpush1.xpose.msra.mxu0 0.0
    %1358 = vmatprep.subr.mxu0 0.0
    %1359 = vmatpush1.xpose.msra.mxu0 0.0
    %1360 = vmatprep.subr.mxu0 0.0
    %1361 = vmatpush1.xpose.msra.mxu0 0.0
    %1362 = vmatprep.subr.mxu0 0.0
    %1363 = vmatpush1.xpose.msra.mxu0 0.0
    %1364 = vmatprep.subr.mxu0 0.0
    %1365 = vmatpush1.xpose.msra.mxu0 0.0
    %1366 = vmatprep.subr.mxu0 0.0
    %1367 = vmatpush1.xpose.msra.mxu0 0.0
    %1368 = vmatprep.subr.mxu0 0.0
    %1369 = vmatpush1.xpose.msra.mxu0 0.0
    %1370 = vmatprep.subr.mxu0 0.0
    %1371 = vmatpush1.xpose.msra.mxu0 0.0
    %1372 = vmatprep.subr.mxu0 0.0
    %1373 = vmatpush1.xpose.msra.mxu0 0.0
    %1374 = vmatprep.subr.mxu0 0.0
    %1375 = vmatpush1.xpose.msra.mxu0 0.0
    %1376 = vmatprep.mubr.f32.mxu0 0.0
    %v1377 = vand.u32 %v1193, 4294901760
    %1378 = vmatmul.mubr.f32.gmra.mrb[0].mxu0 %v1377
    %v1379 = vpop.f32.mrb[0].mxu0
    %v1380 = vadd.f32 %v1274, %v1379
    %v1381 = vpop.f32.mrb[0].mxu0
    %1382 = vmatprep.mubr.f32.mxu0 0.0
    %v1383 = vand.u32 %v1194, 4294901760
    %1384 = vmatmul.mubr.f32.gmra.mrb[0].mxu0 %v1383
    %v1385 = vpop.f32.mrb[0].mxu0
    %v1386 = vadd.f32 %v1284, %v1385
    %v1387 = vpop.f32.mrb[0].mxu0
    %1388 = vmatprep.mubr.f32.mxu0 0.0
    %v1389 = vand.u32 %v1195, 4294901760
    %1390 = vmatmul.mubr.f32.gmra.mrb[0].mxu0 %v1389
    %v1391 = vpop.f32.mrb[0].mxu0
    %v1392 = vadd.f32 %v1294, %v1391
    %v1393 = vpop.f32.mrb[0].mxu0
    %1394 = vmatprep.mubr.f32.mxu0 0.0
    %v1395 = vand.u32 %v1196, 4294901760
    %1396 = vmatmul.mubr.f32.gmra.mrb[0].mxu0 %v1395
    %v1397 = vpop.f32.mrb[0].mxu0
    %v1398 = vadd.f32 %v1304, %v1397
    %v1399 = vpop.f32.mrb[0].mxu0
    %1400 = vdwg.mxu0
    %1401 = vmatprep.subr.mxu0 0.0
    %v1402 = vand.u32 %v652, 4294901760
    %v1403 = vsub.f32 %v652, %v1402
    %1404 = vmatpush1.xpose.msra.mxu0 %v1403
    %1405 = vmatprep.subr.mxu0 0.0
    %1406 = vmatpush1.xpose.msra.mxu0 0.0
    %1407 = vmatprep.subr.mxu0 0.0
    %1408 = vmatpush1.xpose.msra.mxu0 0.0
    %1409 = vmatprep.subr.mxu0 0.0
    %1410 = vmatpush1.xpose.msra.mxu0 0.0
    %1411 = vmatprep.subr.mxu0 0.0
    %1412 = vmatpush1.xpose.msra.mxu0 0.0
    %1413 = vmatprep.subr.mxu0 0.0
    %1414 = vmatpush1.xpose.msra.mxu0 0.0
    %1415 = vmatprep.subr.mxu0 0.0
    %1416 = vmatpush1.xpose.msra.mxu0 0.0
    %1417 = vmatprep.subr.mxu0 0.0
    %1418 = vmatpush1.xpose.msra.mxu0 0.0
    %1419 = vmatprep.subr.mxu0 0.0
    %1420 = vmatpush1.xpose.msra.mxu0 0.0
    %1421 = vmatprep.subr.mxu0 0.0
    %1422 = vmatpush1.xpose.msra.mxu0 0.0
    %1423 = vmatprep.subr.mxu0 0.0
    %1424 = vmatpush1.xpose.msra.mxu0 0.0
    %1425 = vmatprep.subr.mxu0 0.0
    %1426 = vmatpush1.xpose.msra.mxu0 0.0
    %1427 = vmatprep.subr.mxu0 0.0
    %1428 = vmatpush1.xpose.msra.mxu0 0.0
    %1429 = vmatprep.subr.mxu0 0.0
    %1430 = vmatpush1.xpose.msra.mxu0 0.0
    %1431 = vmatprep.subr.mxu0 0.0
    %1432 = vmatpush1.xpose.msra.mxu0 0.0
    %1433 = vmatprep.subr.mxu0 0.0
    %1434 = vmatpush1.xpose.msra.mxu0 0.0
    %1435 = vmatprep.subr.mxu0 0.0
    %1436 = vmatpush1.xpose.msra.mxu0 0.0
    %1437 = vmatprep.subr.mxu0 0.0
    %1438 = vmatpush1.xpose.msra.mxu0 0.0
    %1439 = vmatprep.subr.mxu0 0.0
    %1440 = vmatpush1.xpose.msra.mxu0 0.0
    %1441 = vmatprep.subr.mxu0 0.0
    %1442 = vmatpush1.xpose.msra.mxu0 0.0
    %1443 = vmatprep.subr.mxu0 0.0
    %1444 = vmatpush1.xpose.msra.mxu0 0.0
    %1445 = vmatprep.subr.mxu0 0.0
    %1446 = vmatpush1.xpose.msra.mxu0 0.0
    %1447 = vmatprep.subr.mxu0 0.0
    %1448 = vmatpush1.xpose.msra.mxu0 0.0
    %1449 = vmatprep.subr.mxu0 0.0
    %1450 = vmatpush1.xpose.msra.mxu0 0.0
    %1451 = vmatprep.subr.mxu0 0.0
    %1452 = vmatpush1.xpose.msra.mxu0 0.0
    %1453 = vmatprep.subr.mxu0 0.0
    %1454 = vmatpush1.xpose.msra.mxu0 0.0
    %1455 = vmatprep.subr.mxu0 0.0
    %1456 = vmatpush1.xpose.msra.mxu0 0.0
    %1457 = vmatprep.subr.mxu0 0.0
    %1458 = vmatpush1.xpose.msra.mxu0 0.0
    %1459 = vmatprep.subr.mxu0 0.0
    %1460 = vmatpush1.xpose.msra.mxu0 0.0
    %1461 = vmatprep.subr.mxu0 0.0
    %1462 = vmatpush1.xpose.msra.mxu0 0.0
    %1463 = vmatprep.subr.mxu0 0.0
    %1464 = vmatpush1.xpose.msra.mxu0 0.0
    %1465 = vmatprep.subr.mxu0 0.0
    %1466 = vmatpush1.xpose.msra.mxu0 0.0
    %1467 = vmatprep.mubr.f32.mxu0 0.0
    %v1468 = vand.u32 %v1193, 4294901760
    %v1469 = vsub.f32 %v1193, %v1468
    %1470 = vmatmul.mubr.f32.gmra.mrb[0].mxu0 %v1469
    %v1471 = vpop.f32.mrb[0].mxu0
    %v1472 = vadd.f32 %v1380, %v1471
    %v1473 = vpop.f32.mrb[0].mxu0
    %1474 = vmatprep.mubr.f32.mxu0 0.0
    %v1475 = vand.u32 %v1194, 4294901760
    %v1476 = vsub.f32 %v1194, %v1475
    %1477 = vmatmul.mubr.f32.gmra.mrb[0].mxu0 %v1476
    %v1478 = vpop.f32.mrb[0].mxu0
    %v1479 = vadd.f32 %v1386, %v1478
    %v1480 = vpop.f32.mrb[0].mxu0
    %1481 = vmatprep.mubr.f32.mxu0 0.0
    %v1482 = vand.u32 %v1195, 4294901760
    %v1483 = vsub.f32 %v1195, %v1482
    %1484 = vmatmul.mubr.f32.gmra.mrb[0].mxu0 %v1483
    %v1485 = vpop.f32.mrb[0].mxu0
    %v1486 = vadd.f32 %v1392, %v1485
    %v1487 = vpop.f32.mrb[0].mxu0
    %1488 = vmatprep.mubr.f32.mxu0 0.0
    %v1489 = vand.u32 %v1196, 4294901760
    %v1490 = vsub.f32 %v1196, %v1489
    %1491 = vmatmul.mubr.f32.gmra.mrb[0].mxu0 %v1490
    %v1492 = vpop.f32.mrb[0].mxu0
    %v1493 = vadd.f32 %v1398, %v1492
    %v1494 = vpop.f32.mrb[0].mxu0
    %1495 = vdwg.mxu0
    %1496 = vmatprep.subr.mxu0 0.0
    %v1497 = vand.u32 %v652, 4294901760
    %1498 = vmatpush1.xpose.msra.mxu0 %v1497
    %1499 = vmatprep.subr.mxu0 0.0
    %1500 = vmatpush1.xpose.msra.mxu0 0.0
    %1501 = vmatprep.subr.mxu0 0.0
    %1502 = vmatpush1.xpose.msra.mxu0 0.0
    %1503 = vmatprep.subr.mxu0 0.0
    %1504 = vmatpush1.xpose.msra.mxu0 0.0
    %1505 = vmatprep.subr.mxu0 0.0
    %1506 = vmatpush1.xpose.msra.mxu0 0.0
    %1507 = vmatprep.subr.mxu0 0.0
    %1508 = vmatpush1.xpose.msra.mxu0 0.0
    %1509 = vmatprep.subr.mxu0 0.0
    %1510 = vmatpush1.xpose.msra.mxu0 0.0
    %1511 = vmatprep.subr.mxu0 0.0
    %1512 = vmatpush1.xpose.msra.mxu0 0.0
    %1513 = vmatprep.subr.mxu0 0.0
    %1514 = vmatpush1.xpose.msra.mxu0 0.0
    %1515 = vmatprep.subr.mxu0 0.0
    %1516 = vmatpush1.xpose.msra.mxu0 0.0
    %1517 = vmatprep.subr.mxu0 0.0
    %1518 = vmatpush1.xpose.msra.mxu0 0.0
    %1519 = vmatprep.subr.mxu0 0.0
    %1520 = vmatpush1.xpose.msra.mxu0 0.0
    %1521 = vmatprep.subr.mxu0 0.0
    %1522 = vmatpush1.xpose.msra.mxu0 0.0
    %1523 = vmatprep.subr.mxu0 0.0
    %1524 = vmatpush1.xpose.msra.mxu0 0.0
    %1525 = vmatprep.subr.mxu0 0.0
    %1526 = vmatpush1.xpose.msra.mxu0 0.0
    %1527 = vmatprep.subr.mxu0 0.0
    %1528 = vmatpush1.xpose.msra.mxu0 0.0
    %1529 = vmatprep.subr.mxu0 0.0
    %1530 = vmatpush1.xpose.msra.mxu0 0.0
    %1531 = vmatprep.subr.mxu0 0.0
    %1532 = vmatpush1.xpose.msra.mxu0 0.0
    %1533 = vmatprep.subr.mxu0 0.0
    %1534 = vmatpush1.xpose.msra.mxu0 0.0
    %1535 = vmatprep.subr.mxu0 0.0
    %1536 = vmatpush1.xpose.msra.mxu0 0.0
    %1537 = vmatprep.subr.mxu0 0.0
    %1538 = vmatpush1.xpose.msra.mxu0 0.0
    %1539 = vmatprep.subr.mxu0 0.0
    %1540 = vmatpush1.xpose.msra.mxu0 0.0
    %1541 = vmatprep.subr.mxu0 0.0
    %1542 = vmatpush1.xpose.msra.mxu0 0.0
    %1543 = vmatprep.subr.mxu0 0.0
    %1544 = vmatpush1.xpose.msra.mxu0 0.0
    %1545 = vmatprep.subr.mxu0 0.0
    %1546 = vmatpush1.xpose.msra.mxu0 0.0
    %1547 = vmatprep.subr.mxu0 0.0
    %1548 = vmatpush1.xpose.msra.mxu0 0.0
    %1549 = vmatprep.subr.mxu0 0.0
    %1550 = vmatpush1.xpose.msra.mxu0 0.0
    %1551 = vmatprep.subr.mxu0 0.0
    %1552 = vmatpush1.xpose.msra.mxu0 0.0
    %1553 = vmatprep.subr.mxu0 0.0
    %1554 = vmatpush1.xpose.msra.mxu0 0.0
    %1555 = vmatprep.subr.mxu0 0.0
    %1556 = vmatpush1.xpose.msra.mxu0 0.0
    %1557 = vmatprep.subr.mxu0 0.0
    %1558 = vmatpush1.xpose.msra.mxu0 0.0
    %1559 = vmatprep.subr.mxu0 0.0
    %1560 = vmatpush1.xpose.msra.mxu0 0.0
    %1561 = vmatprep.mubr.f32.mxu0 0.0
    %v1562 = vand.u32 %v1193, 4294901760
    %v1563 = vsub.f32 %v1193, %v1562
    %v1564 = vand.u32 %v1563, 4294901760
    %1565 = vmatmul.mubr.f32.gmra.mrb[0].mxu0 %v1564
    %v1566 = vpop.f32.mrb[0].mxu0
    %v1567 = vadd.f32 %v1472, %v1566
    %v1568 = vpop.f32.mrb[0].mxu0
    %1569 = vmatprep.mubr.f32.mxu0 0.0
    %v1570 = vand.u32 %v1194, 4294901760
    %v1571 = vsub.f32 %v1194, %v1570
    %v1572 = vand.u32 %v1571, 4294901760
    %1573 = vmatmul.mubr.f32.gmra.mrb[0].mxu0 %v1572
    %v1574 = vpop.f32.mrb[0].mxu0
    %v1575 = vadd.f32 %v1479, %v1574
    %v1576 = vpop.f32.mrb[0].mxu0
    %1577 = vmatprep.mubr.f32.mxu0 0.0
    %v1578 = vand.u32 %v1195, 4294901760
    %v1579 = vsub.f32 %v1195, %v1578
    %v1580 = vand.u32 %v1579, 4294901760
    %1581 = vmatmul.mubr.f32.gmra.mrb[0].mxu0 %v1580
    %v1582 = vpop.f32.mrb[0].mxu0
    %v1583 = vadd.f32 %v1486, %v1582
    %v1584 = vpop.f32.mrb[0].mxu0
    %1585 = vmatprep.mubr.f32.mxu0 0.0
    %v1586 = vand.u32 %v1196, 4294901760
    %v1587 = vsub.f32 %v1196, %v1586
    %v1588 = vand.u32 %v1587, 4294901760
    %1589 = vmatmul.mubr.f32.gmra.mrb[0].mxu0 %v1588
    %v1590 = vpop.f32.mrb[0].mxu0
    %v1591 = vadd.f32 %v1493, %v1590
    %v1592 = vpop.f32.mrb[0].mxu0
    %1593 = vdwg.mxu0
    %1594 = vmatprep.subr.mxu0 0.0
    %v1595 = vand.u32 %v652, 4294901760
    %v1596 = vsub.f32 %v652, %v1595
    %v1597 = vand.u32 %v1596, 4294901760
    %1598 = vmatpush1.xpose.msra.mxu0 %v1597
    %1599 = vmatprep.subr.mxu0 0.0
    %1600 = vmatpush1.xpose.msra.mxu0 0.0
    %1601 = vmatprep.subr.mxu0 0.0
    %1602 = vmatpush1.xpose.msra.mxu0 0.0
    %1603 = vmatprep.subr.mxu0 0.0
    %1604 = vmatpush1.xpose.msra.mxu0 0.0
    %1605 = vmatprep.subr.mxu0 0.0
    %1606 = vmatpush1.xpose.msra.mxu0 0.0
    %1607 = vmatprep.subr.mxu0 0.0
    %1608 = vmatpush1.xpose.msra.mxu0 0.0
    %1609 = vmatprep.subr.mxu0 0.0
    %1610 = vmatpush1.xpose.msra.mxu0 0.0
    %1611 = vmatprep.subr.mxu0 0.0
    %1612 = vmatpush1.xpose.msra.mxu0 0.0
    %1613 = vmatprep.subr.mxu0 0.0
    %1614 = vmatpush1.xpose.msra.mxu0 0.0
    %1615 = vmatprep.subr.mxu0 0.0
    %1616 = vmatpush1.xpose.msra.mxu0 0.0
    %1617 = vmatprep.subr.mxu0 0.0
    %1618 = vmatpush1.xpose.msra.mxu0 0.0
    %1619 = vmatprep.subr.mxu0 0.0
    %1620 = vmatpush1.xpose.msra.mxu0 0.0
    %1621 = vmatprep.subr.mxu0 0.0
    %1622 = vmatpush1.xpose.msra.mxu0 0.0
    %1623 = vmatprep.subr.mxu0 0.0
    %1624 = vmatpush1.xpose.msra.mxu0 0.0
    %1625 = vmatprep.subr.mxu0 0.0
    %1626 = vmatpush1.xpose.msra.mxu0 0.0
    %1627 = vmatprep.subr.mxu0 0.0
    %1628 = vmatpush1.xpose.msra.mxu0 0.0
    %1629 = vmatprep.subr.mxu0 0.0
    %1630 = vmatpush1.xpose.msra.mxu0 0.0
    %1631 = vmatprep.subr.mxu0 0.0
    %1632 = vmatpush1.xpose.msra.mxu0 0.0
    %1633 = vmatprep.subr.mxu0 0.0
    %1634 = vmatpush1.xpose.msra.mxu0 0.0
    %1635 = vmatprep.subr.mxu0 0.0
    %1636 = vmatpush1.xpose.msra.mxu0 0.0
    %1637 = vmatprep.subr.mxu0 0.0
    %1638 = vmatpush1.xpose.msra.mxu0 0.0
    %1639 = vmatprep.subr.mxu0 0.0
    %1640 = vmatpush1.xpose.msra.mxu0 0.0
    %1641 = vmatprep.subr.mxu0 0.0
    %1642 = vmatpush1.xpose.msra.mxu0 0.0
    %1643 = vmatprep.subr.mxu0 0.0
    %1644 = vmatpush1.xpose.msra.mxu0 0.0
    %1645 = vmatprep.subr.mxu0 0.0
    %1646 = vmatpush1.xpose.msra.mxu0 0.0
    %1647 = vmatprep.subr.mxu0 0.0
    %1648 = vmatpush1.xpose.msra.mxu0 0.0
    %1649 = vmatprep.subr.mxu0 0.0
    %1650 = vmatpush1.xpose.msra.mxu0 0.0
    %1651 = vmatprep.subr.mxu0 0.0
    %1652 = vmatpush1.xpose.msra.mxu0 0.0
    %1653 = vmatprep.subr.mxu0 0.0
    %1654 = vmatpush1.xpose.msra.mxu0 0.0
    %1655 = vmatprep.subr.mxu0 0.0
    %1656 = vmatpush1.xpose.msra.mxu0 0.0
    %1657 = vmatprep.subr.mxu0 0.0
    %1658 = vmatpush1.xpose.msra.mxu0 0.0
    %1659 = vmatprep.subr.mxu0 0.0
    %1660 = vmatpush1.xpose.msra.mxu0 0.0
    %1661 = vmatprep.mubr.f32.mxu0 0.0
    %v1662 = vand.u32 %v1193, 4294901760
    %1663 = vmatmul.mubr.f32.gmra.mrb[0].mxu0 %v1662
    %v1664 = vpop.f32.mrb[0].mxu0
    %v1665 = vadd.f32 %v1567, %v1664
    %v1666 = vpop.f32.mrb[0].mxu0
    %1667 = vmatprep.mubr.f32.mxu0 0.0
    %v1668 = vand.u32 %v1194, 4294901760
    %1669 = vmatmul.mubr.f32.gmra.mrb[0].mxu0 %v1668
    %v1670 = vpop.f32.mrb[0].mxu0
    %v1671 = vadd.f32 %v1575, %v1670
    %v1672 = vpop.f32.mrb[0].mxu0
    %1673 = vmatprep.mubr.f32.mxu0 0.0
    %v1674 = vand.u32 %v1195, 4294901760
    %1675 = vmatmul.mubr.f32.gmra.mrb[0].mxu0 %v1674
    %v1676 = vpop.f32.mrb[0].mxu0
    %v1677 = vadd.f32 %v1583, %v1676
    %v1678 = vpop.f32.mrb[0].mxu0
    %1679 = vmatprep.mubr.f32.mxu0 0.0
    %v1680 = vand.u32 %v1196, 4294901760
    %1681 = vmatmul.mubr.f32.gmra.mrb[0].mxu0 %v1680
    %v1682 = vpop.f32.mrb[0].mxu0
    %v1683 = vadd.f32 %v1591, %v1682
    %v1684 = vpop.f32.mrb[0].mxu0
    %1685 = vdwg.mxu0
    %1686 = vmatprep.subr.mxu0 0.0
    %v1687 = vand.u32 %v652, 4294901760
    %1688 = vmatpush1.xpose.msra.mxu0 %v1687
    %1689 = vmatprep.subr.mxu0 0.0
    %1690 = vmatpush1.xpose.msra.mxu0 0.0
    %1691 = vmatprep.subr.mxu0 0.0
    %1692 = vmatpush1.xpose.msra.mxu0 0.0
    %1693 = vmatprep.subr.mxu0 0.0
    %1694 = vmatpush1.xpose.msra.mxu0 0.0
    %1695 = vmatprep.subr.mxu0 0.0
    %1696 = vmatpush1.xpose.msra.mxu0 0.0
    %1697 = vmatprep.subr.mxu0 0.0
    %1698 = vmatpush1.xpose.msra.mxu0 0.0
    %1699 = vmatprep.subr.mxu0 0.0
    %1700 = vmatpush1.xpose.msra.mxu0 0.0
    %1701 = vmatprep.subr.mxu0 0.0
    %1702 = vmatpush1.xpose.msra.mxu0 0.0
    %1703 = vmatprep.subr.mxu0 0.0
    %1704 = vmatpush1.xpose.msra.mxu0 0.0
    %1705 = vmatprep.subr.mxu0 0.0
    %1706 = vmatpush1.xpose.msra.mxu0 0.0
    %1707 = vmatprep.subr.mxu0 0.0
    %1708 = vmatpush1.xpose.msra.mxu0 0.0
    %1709 = vmatprep.subr.mxu0 0.0
    %1710 = vmatpush1.xpose.msra.mxu0 0.0
    %1711 = vmatprep.subr.mxu0 0.0
    %1712 = vmatpush1.xpose.msra.mxu0 0.0
    %1713 = vmatprep.subr.mxu0 0.0
    %1714 = vmatpush1.xpose.msra.mxu0 0.0
    %1715 = vmatprep.subr.mxu0 0.0
    %1716 = vmatpush1.xpose.msra.mxu0 0.0
    %1717 = vmatprep.subr.mxu0 0.0
    %1718 = vmatpush1.xpose.msra.mxu0 0.0
    %1719 = vmatprep.subr.mxu0 0.0
    %1720 = vmatpush1.xpose.msra.mxu0 0.0
    %1721 = vmatprep.subr.mxu0 0.0
    %1722 = vmatpush1.xpose.msra.mxu0 0.0
    %1723 = vmatprep.subr.mxu0 0.0
    %1724 = vmatpush1.xpose.msra.mxu0 0.0
    %1725 = vmatprep.subr.mxu0 0.0
    %1726 = vmatpush1.xpose.msra.mxu0 0.0
    %1727 = vmatprep.subr.mxu0 0.0
    %1728 = vmatpush1.xpose.msra.mxu0 0.0
    %1729 = vmatprep.subr.mxu0 0.0
    %1730 = vmatpush1.xpose.msra.mxu0 0.0
    %1731 = vmatprep.subr.mxu0 0.0
    %1732 = vmatpush1.xpose.msra.mxu0 0.0
    %1733 = vmatprep.subr.mxu0 0.0
    %1734 = vmatpush1.xpose.msra.mxu0 0.0
    %1735 = vmatprep.subr.mxu0 0.0
    %1736 = vmatpush1.xpose.msra.mxu0 0.0
    %1737 = vmatprep.subr.mxu0 0.0
    %1738 = vmatpush1.xpose.msra.mxu0 0.0
    %1739 = vmatprep.subr.mxu0 0.0
    %1740 = vmatpush1.xpose.msra.mxu0 0.0
    %1741 = vmatprep.subr.mxu0 0.0
    %1742 = vmatpush1.xpose.msra.mxu0 0.0
    %1743 = vmatprep.subr.mxu0 0.0
    %1744 = vmatpush1.xpose.msra.mxu0 0.0
    %1745 = vmatprep.subr.mxu0 0.0
    %1746 = vmatpush1.xpose.msra.mxu0 0.0
    %1747 = vmatprep.subr.mxu0 0.0
    %1748 = vmatpush1.xpose.msra.mxu0 0.0
    %1749 = vmatprep.subr.mxu0 0.0
    %1750 = vmatpush1.xpose.msra.mxu0 0.0
    %1751 = vmatprep.mubr.f32.mxu0 0.0
    %v1752 = vand.u32 %v1193, 4294901760
    %1753 = vmatmul.mubr.f32.gmra.mrb[0].mxu0 %v1752
    %v1754 = vpop.f32.mrb[0].mxu0
    %v1755 = vadd.f32 %v1665, %v1754
    %v1756 = vpop.f32.mrb[0].mxu0
    %1757 = vmatprep.mubr.f32.mxu0 0.0
    %v1758 = vand.u32 %v1194, 4294901760
    %1759 = vmatmul.mubr.f32.gmra.mrb[0].mxu0 %v1758
    %v1760 = vpop.f32.mrb[0].mxu0
    %v1761 = vadd.f32 %v1671, %v1760
    %v1762 = vpop.f32.mrb[0].mxu0
    %1763 = vmatprep.mubr.f32.mxu0 0.0
    %v1764 = vand.u32 %v1195, 4294901760
    %1765 = vmatmul.mubr.f32.gmra.mrb[0].mxu0 %v1764
    %v1766 = vpop.f32.mrb[0].mxu0
    %v1767 = vadd.f32 %v1677, %v1766
    %v1768 = vpop.f32.mrb[0].mxu0
    %1769 = vmatprep.mubr.f32.mxu0 0.0
    %v1770 = vand.u32 %v1196, 4294901760
    %1771 = vmatmul.mubr.f32.gmra.mrb[0].mxu0 %v1770
    %v1772 = vpop.f32.mrb[0].mxu0
    %v1773 = vadd.f32 %v1683, %v1772
    %v1774 = vpop.f32.mrb[0].mxu0
    %1775 = vdwg.mxu0
    %1776 = vmatprep.subr.mxu0 0.0
    %v1777 = vand.u32 %v659, 4294901760
    %1778 = vmatpush1.xpose.msra.mxu0 %v1777
    %1779 = vmatprep.subr.mxu0 0.0
    %1780 = vmatpush1.xpose.msra.mxu0 0.0
    %1781 = vmatprep.subr.mxu0 0.0
    %1782 = vmatpush1.xpose.msra.mxu0 0.0
    %1783 = vmatprep.subr.mxu0 0.0
    %1784 = vmatpush1.xpose.msra.mxu0 0.0
    %1785 = vmatprep.subr.mxu0 0.0
    %1786 = vmatpush1.xpose.msra.mxu0 0.0
    %1787 = vmatprep.subr.mxu0 0.0
    %1788 = vmatpush1.xpose.msra.mxu0 0.0
    %1789 = vmatprep.subr.mxu0 0.0
    %1790 = vmatpush1.xpose.msra.mxu0 0.0
    %1791 = vmatprep.subr.mxu0 0.0
    %1792 = vmatpush1.xpose.msra.mxu0 0.0
    %1793 = vmatprep.subr.mxu0 0.0
    %1794 = vmatpush1.xpose.msra.mxu0 0.0
    %1795 = vmatprep.subr.mxu0 0.0
    %1796 = vmatpush1.xpose.msra.mxu0 0.0
    %1797 = vmatprep.subr.mxu0 0.0
    %1798 = vmatpush1.xpose.msra.mxu0 0.0
    %1799 = vmatprep.subr.mxu0 0.0
    %1800 = vmatpush1.xpose.msra.mxu0 0.0
    %1801 = vmatprep.subr.mxu0 0.0
    %1802 = vmatpush1.xpose.msra.mxu0 0.0
    %1803 = vmatprep.subr.mxu0 0.0
    %1804 = vmatpush1.xpose.msra.mxu0 0.0
    %1805 = vmatprep.subr.mxu0 0.0
    %1806 = vmatpush1.xpose.msra.mxu0 0.0
    %1807 = vmatprep.subr.mxu0 0.0
    %1808 = vmatpush1.xpose.msra.mxu0 0.0
    %1809 = vmatprep.subr.mxu0 0.0
    %1810 = vmatpush1.xpose.msra.mxu0 0.0
    %1811 = vmatprep.subr.mxu0 0.0
    %1812 = vmatpush1.xpose.msra.mxu0 0.0
    %1813 = vmatprep.subr.mxu0 0.0
    %1814 = vmatpush1.xpose.msra.mxu0 0.0
    %1815 = vmatprep.subr.mxu0 0.0
    %1816 = vmatpush1.xpose.msra.mxu0 0.0
    %1817 = vmatprep.subr.mxu0 0.0
    %1818 = vmatpush1.xpose.msra.mxu0 0.0
    %1819 = vmatprep.subr.mxu0 0.0
    %1820 = vmatpush1.xpose.msra.mxu0 0.0
    %1821 = vmatprep.subr.mxu0 0.0
    %1822 = vmatpush1.xpose.msra.mxu0 0.0
    %1823 = vmatprep.subr.mxu0 0.0
    %1824 = vmatpush1.xpose.msra.mxu0 0.0
    %1825 = vmatprep.subr.mxu0 0.0
    %1826 = vmatpush1.xpose.msra.mxu0 0.0
    %1827 = vmatprep.subr.mxu0 0.0
    %1828 = vmatpush1.xpose.msra.mxu0 0.0
    %1829 = vmatprep.subr.mxu0 0.0
    %1830 = vmatpush1.xpose.msra.mxu0 0.0
    %1831 = vmatprep.subr.mxu0 0.0
    %1832 = vmatpush1.xpose.msra.mxu0 0.0
    %1833 = vmatprep.subr.mxu0 0.0
    %1834 = vmatpush1.xpose.msra.mxu0 0.0
    %1835 = vmatprep.subr.mxu0 0.0
    %1836 = vmatpush1.xpose.msra.mxu0 0.0
    %1837 = vmatprep.subr.mxu0 0.0
    %1838 = vmatpush1.xpose.msra.mxu0 0.0
    %1839 = vmatprep.subr.mxu0 0.0
    %1840 = vmatpush1.xpose.msra.mxu0 0.0
    %1841 = vmatprep.mubr.f32.mxu0 0.0
    %v1842 = vand.u32 %v1197, 4294901760
    %v1843 = vsub.f32 %v1197, %v1842
    %v1844 = vand.u32 %v1843, 4294901760
    %v1845 = vsub.f32 %v1843, %v1844
    %v1846 = vand.u32 %v1845, 4294901760
    %1847 = vmatmul.mubr.f32.gmra.mrb[0].mxu0 %v1846
    %v1848 = vpop.f32.mrb[0].mxu0
    %v1849 = vadd.f32 0.0, %v1848
    %v1850 = vpop.f32.mrb[0].mxu0
    %1851 = vmatprep.mubr.f32.mxu0 0.0
    %v1852 = vand.u32 %v1198, 4294901760
    %v1853 = vsub.f32 %v1198, %v1852
    %v1854 = vand.u32 %v1853, 4294901760
    %v1855 = vsub.f32 %v1853, %v1854
    %v1856 = vand.u32 %v1855, 4294901760
    %1857 = vmatmul.mubr.f32.gmra.mrb[0].mxu0 %v1856
    %v1858 = vpop.f32.mrb[0].mxu0
    %v1859 = vadd.f32 0.0, %v1858
    %v1860 = vpop.f32.mrb[0].mxu0
    %1861 = vmatprep.mubr.f32.mxu0 0.0
    %v1862 = vand.u32 %v1199, 4294901760
    %v1863 = vsub.f32 %v1199, %v1862
    %v1864 = vand.u32 %v1863, 4294901760
    %v1865 = vsub.f32 %v1863, %v1864
    %v1866 = vand.u32 %v1865, 4294901760
    %1867 = vmatmul.mubr.f32.gmra.mrb[0].mxu0 %v1866
    %v1868 = vpop.f32.mrb[0].mxu0
    %v1869 = vadd.f32 0.0, %v1868
    %v1870 = vpop.f32.mrb[0].mxu0
    %1871 = vmatprep.mubr.f32.mxu0 0.0
    %v1872 = vand.u32 %v1200, 4294901760
    %v1873 = vsub.f32 %v1200, %v1872
    %v1874 = vand.u32 %v1873, 4294901760
    %v1875 = vsub.f32 %v1873, %v1874
    %v1876 = vand.u32 %v1875, 4294901760
    %1877 = vmatmul.mubr.f32.gmra.mrb[0].mxu0 %v1876
    %v1878 = vpop.f32.mrb[0].mxu0
    %v1879 = vadd.f32 0.0, %v1878
    %v1880 = vpop.f32.mrb[0].mxu0
    %1881 = vdwg.mxu0
    %1882 = vmatprep.subr.mxu0 0.0
    %v1883 = vand.u32 %v659, 4294901760
    %v1884 = vsub.f32 %v659, %v1883
    %v1885 = vand.u32 %v1884, 4294901760
    %v1886 = vsub.f32 %v1884, %v1885
    %v1887 = vand.u32 %v1886, 4294901760
    %1888 = vmatpush1.xpose.msra.mxu0 %v1887
    %1889 = vmatprep.subr.mxu0 0.0
    %1890 = vmatpush1.xpose.msra.mxu0 0.0
    %1891 = vmatprep.subr.mxu0 0.0
    %1892 = vmatpush1.xpose.msra.mxu0 0.0
    %1893 = vmatprep.subr.mxu0 0.0
    %1894 = vmatpush1.xpose.msra.mxu0 0.0
    %1895 = vmatprep.subr.mxu0 0.0
    %1896 = vmatpush1.xpose.msra.mxu0 0.0
    %1897 = vmatprep.subr.mxu0 0.0
    %1898 = vmatpush1.xpose.msra.mxu0 0.0
    %1899 = vmatprep.subr.mxu0 0.0
    %1900 = vmatpush1.xpose.msra.mxu0 0.0
    %1901 = vmatprep.subr.mxu0 0.0
    %1902 = vmatpush1.xpose.msra.mxu0 0.0
    %1903 = vmatprep.subr.mxu0 0.0
    %1904 = vmatpush1.xpose.msra.mxu0 0.0
    %1905 = vmatprep.subr.mxu0 0.0
    %1906 = vmatpush1.xpose.msra.mxu0 0.0
    %1907 = vmatprep.subr.mxu0 0.0
    %1908 = vmatpush1.xpose.msra.mxu0 0.0
    %1909 = vmatprep.subr.mxu0 0.0
    %1910 = vmatpush1.xpose.msra.mxu0 0.0
    %1911 = vmatprep.subr.mxu0 0.0
    %1912 = vmatpush1.xpose.msra.mxu0 0.0
    %1913 = vmatprep.subr.mxu0 0.0
    %1914 = vmatpush1.xpose.msra.mxu0 0.0
    %1915 = vmatprep.subr.mxu0 0.0
    %1916 = vmatpush1.xpose.msra.mxu0 0.0
    %1917 = vmatprep.subr.mxu0 0.0
    %1918 = vmatpush1.xpose.msra.mxu0 0.0
    %1919 = vmatprep.subr.mxu0 0.0
    %1920 = vmatpush1.xpose.msra.mxu0 0.0
    %1921 = vmatprep.subr.mxu0 0.0
    %1922 = vmatpush1.xpose.msra.mxu0 0.0
    %1923 = vmatprep.subr.mxu0 0.0
    %1924 = vmatpush1.xpose.msra.mxu0 0.0
    %1925 = vmatprep.subr.mxu0 0.0
    %1926 = vmatpush1.xpose.msra.mxu0 0.0
    %1927 = vmatprep.subr.mxu0 0.0
    %1928 = vmatpush1.xpose.msra.mxu0 0.0
    %1929 = vmatprep.subr.mxu0 0.0
    %1930 = vmatpush1.xpose.msra.mxu0 0.0
    %1931 = vmatprep.subr.mxu0 0.0
    %1932 = vmatpush1.xpose.msra.mxu0 0.0
    %1933 = vmatprep.subr.mxu0 0.0
    %1934 = vmatpush1.xpose.msra.mxu0 0.0
    %1935 = vmatprep.subr.mxu0 0.0
    %1936 = vmatpush1.xpose.msra.mxu0 0.0
    %1937 = vmatprep.subr.mxu0 0.0
    %1938 = vmatpush1.xpose.msra.mxu0 0.0
    %1939 = vmatprep.subr.mxu0 0.0
    %1940 = vmatpush1.xpose.msra.mxu0 0.0
    %1941 = vmatprep.subr.mxu0 0.0
    %1942 = vmatpush1.xpose.msra.mxu0 0.0
    %1943 = vmatprep.subr.mxu0 0.0
    %1944 = vmatpush1.xpose.msra.mxu0 0.0
    %1945 = vmatprep.subr.mxu0 0.0
    %1946 = vmatpush1.xpose.msra.mxu0 0.0
    %1947 = vmatprep.subr.mxu0 0.0
    %1948 = vmatpush1.xpose.msra.mxu0 0.0
    %1949 = vmatprep.subr.mxu0 0.0
    %1950 = vmatpush1.xpose.msra.mxu0 0.0
    %1951 = vmatprep.mubr.f32.mxu0 0.0
    %v1952 = vand.u32 %v1197, 4294901760
    %1953 = vmatmul.mubr.f32.gmra.mrb[0].mxu0 %v1952
    %v1954 = vpop.f32.mrb[0].mxu0
    %v1955 = vadd.f32 %v1849, %v1954
    %v1956 = vpop.f32.mrb[0].mxu0
    %1957 = vmatprep.mubr.f32.mxu0 0.0
    %v1958 = vand.u32 %v1198, 4294901760
    %1959 = vmatmul.mubr.f32.gmra.mrb[0].mxu0 %v1958
    %v1960 = vpop.f32.mrb[0].mxu0
    %v1961 = vadd.f32 %v1859, %v1960
    %v1962 = vpop.f32.mrb[0].mxu0
    %1963 = vmatprep.mubr.f32.mxu0 0.0
    %v1964 = vand.u32 %v1199, 4294901760
    %1965 = vmatmul.mubr.f32.gmra.mrb[0].mxu0 %v1964
    %v1966 = vpop.f32.mrb[0].mxu0
    %v1967 = vadd.f32 %v1869, %v1966
    %v1968 = vpop.f32.mrb[0].mxu0
    %1969 = vmatprep.mubr.f32.mxu0 0.0
    %v1970 = vand.u32 %v1200, 4294901760
    %1971 = vmatmul.mubr.f32.gmra.mrb[0].mxu0 %v1970
    %v1972 = vpop.f32.mrb[0].mxu0
    %v1973 = vadd.f32 %v1879, %v1972
    %v1974 = vpop.f32.mrb[0].mxu0
    %1975 = vdwg.mxu0
    %1976 = vmatprep.subr.mxu0 0.0
    %v1977 = vand.u32 %v659, 4294901760
    %v1978 = vsub.f32 %v659, %v1977
    %1979 = vmatpush1.xpose.msra.mxu0 %v1978
    %1980 = vmatprep.subr.mxu0 0.0
    %1981 = vmatpush1.xpose.msra.mxu0 0.0
    %1982 = vmatprep.subr.mxu0 0.0
    %1983 = vmatpush1.xpose.msra.mxu0 0.0
    %1984 = vmatprep.subr.mxu0 0.0
    %1985 = vmatpush1.xpose.msra.mxu0 0.0
    %1986 = vmatprep.subr.mxu0 0.0
    %1987 = vmatpush1.xpose.msra.mxu0 0.0
    %1988 = vmatprep.subr.mxu0 0.0
    %1989 = vmatpush1.xpose.msra.mxu0 0.0
    %1990 = vmatprep.subr.mxu0 0.0
    %1991 = vmatpush1.xpose.msra.mxu0 0.0
    %1992 = vmatprep.subr.mxu0 0.0
    %1993 = vmatpush1.xpose.msra.mxu0 0.0
    %1994 = vmatprep.subr.mxu0 0.0
    %1995 = vmatpush1.xpose.msra.mxu0 0.0
    %1996 = vmatprep.subr.mxu0 0.0
    %1997 = vmatpush1.xpose.msra.mxu0 0.0
    %1998 = vmatprep.subr.mxu0 0.0
    %1999 = vmatpush1.xpose.msra.mxu0 0.0
    %2000 = vmatprep.subr.mxu0 0.0
    %2001 = vmatpush1.xpose.msra.mxu0 0.0
    %2002 = vmatprep.subr.mxu0 0.0
    %2003 = vmatpush1.xpose.msra.mxu0 0.0
    %2004 = vmatprep.subr.mxu0 0.0
    %2005 = vmatpush1.xpose.msra.mxu0 0.0
    %2006 = vmatprep.subr.mxu0 0.0
    %2007 = vmatpush1.xpose.msra.mxu0 0.0
    %2008 = vmatprep.subr.mxu0 0.0
    %2009 = vmatpush1.xpose.msra.mxu0 0.0
    %2010 = vmatprep.subr.mxu0 0.0
    %2011 = vmatpush1.xpose.msra.mxu0 0.0
    %2012 = vmatprep.subr.mxu0 0.0
    %2013 = vmatpush1.xpose.msra.mxu0 0.0
    %2014 = vmatprep.subr.mxu0 0.0
    %2015 = vmatpush1.xpose.msra.mxu0 0.0
    %2016 = vmatprep.subr.mxu0 0.0
    %2017 = vmatpush1.xpose.msra.mxu0 0.0
    %2018 = vmatprep.subr.mxu0 0.0
    %2019 = vmatpush1.xpose.msra.mxu0 0.0
    %2020 = vmatprep.subr.mxu0 0.0
    %2021 = vmatpush1.xpose.msra.mxu0 0.0
    %2022 = vmatprep.subr.mxu0 0.0
    %2023 = vmatpush1.xpose.msra.mxu0 0.0
    %2024 = vmatprep.subr.mxu0 0.0
    %2025 = vmatpush1.xpose.msra.mxu0 0.0
    %2026 = vmatprep.subr.mxu0 0.0
    %2027 = vmatpush1.xpose.msra.mxu0 0.0
    %2028 = vmatprep.subr.mxu0 0.0
    %2029 = vmatpush1.xpose.msra.mxu0 0.0
    %2030 = vmatprep.subr.mxu0 0.0
    %2031 = vmatpush1.xpose.msra.mxu0 0.0
    %2032 = vmatprep.subr.mxu0 0.0
    %2033 = vmatpush1.xpose.msra.mxu0 0.0
    %2034 = vmatprep.subr.mxu0 0.0
    %2035 = vmatpush1.xpose.msra.mxu0 0.0
    %2036 = vmatprep.subr.mxu0 0.0
    %2037 = vmatpush1.xpose.msra.mxu0 0.0
    %2038 = vmatprep.subr.mxu0 0.0
    %2039 = vmatpush1.xpose.msra.mxu0 0.0
    %2040 = vmatprep.subr.mxu0 0.0
    %2041 = vmatpush1.xpose.msra.mxu0 0.0
    %2042 = vmatprep.mubr.f32.mxu0 0.0
    %v2043 = vand.u32 %v1197, 4294901760
    %v2044 = vsub.f32 %v1197, %v2043
    %2045 = vmatmul.mubr.f32.gmra.mrb[0].mxu0 %v2044
    %v2046 = vpop.f32.mrb[0].mxu0
    %v2047 = vadd.f32 %v1955, %v2046
    %v2048 = vpop.f32.mrb[0].mxu0
    %2049 = vmatprep.mubr.f32.mxu0 0.0
    %v2050 = vand.u32 %v1198, 4294901760
    %v2051 = vsub.f32 %v1198, %v2050
    %2052 = vmatmul.mubr.f32.gmra.mrb[0].mxu0 %v2051
    %v2053 = vpop.f32.mrb[0].mxu0
    %v2054 = vadd.f32 %v1961, %v2053
    %v2055 = vpop.f32.mrb[0].mxu0
    %2056 = vmatprep.mubr.f32.mxu0 0.0
    %v2057 = vand.u32 %v1199, 4294901760
    %v2058 = vsub.f32 %v1199, %v2057
    %2059 = vmatmul.mubr.f32.gmra.mrb[0].mxu0 %v2058
    %v2060 = vpop.f32.mrb[0].mxu0
    %v2061 = vadd.f32 %v1967, %v2060
    %v2062 = vpop.f32.mrb[0].mxu0
    %2063 = vmatprep.mubr.f32.mxu0 0.0
    %v2064 = vand.u32 %v1200, 4294901760
    %v2065 = vsub.f32 %v1200, %v2064
    %2066 = vmatmul.mubr.f32.gmra.mrb[0].mxu0 %v2065
    %v2067 = vpop.f32.mrb[0].mxu0
    %v2068 = vadd.f32 %v1973, %v2067
    %v2069 = vpop.f32.mrb[0].mxu0
    %2070 = vdwg.mxu0
    %2071 = vmatprep.subr.mxu0 0.0
    %v2072 = vand.u32 %v659, 4294901760
    %2073 = vmatpush1.xpose.msra.mxu0 %v2072
    %2074 = vmatprep.subr.mxu0 0.0
    %2075 = vmatpush1.xpose.msra.mxu0 0.0
    %2076 = vmatprep.subr.mxu0 0.0
    %2077 = vmatpush1.xpose.msra.mxu0 0.0
    %2078 = vmatprep.subr.mxu0 0.0
    %2079 = vmatpush1.xpose.msra.mxu0 0.0
    %2080 = vmatprep.subr.mxu0 0.0
    %2081 = vmatpush1.xpose.msra.mxu0 0.0
    %2082 = vmatprep.subr.mxu0 0.0
    %2083 = vmatpush1.xpose.msra.mxu0 0.0
    %2084 = vmatprep.subr.mxu0 0.0
    %2085 = vmatpush1.xpose.msra.mxu0 0.0
    %2086 = vmatprep.subr.mxu0 0.0
    %2087 = vmatpush1.xpose.msra.mxu0 0.0
    %2088 = vmatprep.subr.mxu0 0.0
    %2089 = vmatpush1.xpose.msra.mxu0 0.0
    %2090 = vmatprep.subr.mxu0 0.0
    %2091 = vmatpush1.xpose.msra.mxu0 0.0
    %2092 = vmatprep.subr.mxu0 0.0
    %2093 = vmatpush1.xpose.msra.mxu0 0.0
    %2094 = vmatprep.subr.mxu0 0.0
    %2095 = vmatpush1.xpose.msra.mxu0 0.0
    %2096 = vmatprep.subr.mxu0 0.0
    %2097 = vmatpush1.xpose.msra.mxu0 0.0
    %2098 = vmatprep.subr.mxu0 0.0
    %2099 = vmatpush1.xpose.msra.mxu0 0.0
    %2100 = vmatprep.subr.mxu0 0.0
    %2101 = vmatpush1.xpose.msra.mxu0 0.0
    %2102 = vmatprep.subr.mxu0 0.0
    %2103 = vmatpush1.xpose.msra.mxu0 0.0
    %2104 = vmatprep.subr.mxu0 0.0
    %2105 = vmatpush1.xpose.msra.mxu0 0.0
    %2106 = vmatprep.subr.mxu0 0.0
    %2107 = vmatpush1.xpose.msra.mxu0 0.0
    %2108 = vmatprep.subr.mxu0 0.0
    %2109 = vmatpush1.xpose.msra.mxu0 0.0
    %2110 = vmatprep.subr.mxu0 0.0
    %2111 = vmatpush1.xpose.msra.mxu0 0.0
    %2112 = vmatprep.subr.mxu0 0.0
    %2113 = vmatpush1.xpose.msra.mxu0 0.0
    %2114 = vmatprep.subr.mxu0 0.0
    %2115 = vmatpush1.xpose.msra.mxu0 0.0
    %2116 = vmatprep.subr.mxu0 0.0
    %2117 = vmatpush1.xpose.msra.mxu0 0.0
    %2118 = vmatprep.subr.mxu0 0.0
    %2119 = vmatpush1.xpose.msra.mxu0 0.0
    %2120 = vmatprep.subr.mxu0 0.0
    %2121 = vmatpush1.xpose.msra.mxu0 0.0
    %2122 = vmatprep.subr.mxu0 0.0
    %2123 = vmatpush1.xpose.msra.mxu0 0.0
    %2124 = vmatprep.subr.mxu0 0.0
    %2125 = vmatpush1.xpose.msra.mxu0 0.0
    %2126 = vmatprep.subr.mxu0 0.0
    %2127 = vmatpush1.xpose.msra.mxu0 0.0
    %2128 = vmatprep.subr.mxu0 0.0
    %2129 = vmatpush1.xpose.msra.mxu0 0.0
    %2130 = vmatprep.subr.mxu0 0.0
    %2131 = vmatpush1.xpose.msra.mxu0 0.0
    %2132 = vmatprep.subr.mxu0 0.0
    %2133 = vmatpush1.xpose.msra.mxu0 0.0
    %2134 = vmatprep.subr.mxu0 0.0
    %2135 = vmatpush1.xpose.msra.mxu0 0.0
    %2136 = vmatprep.mubr.f32.mxu0 0.0
    %v2137 = vand.u32 %v1197, 4294901760
    %v2138 = vsub.f32 %v1197, %v2137
    %v2139 = vand.u32 %v2138, 4294901760
    %2140 = vmatmul.mubr.f32.gmra.mrb[0].mxu0 %v2139
    %v2141 = vpop.f32.mrb[0].mxu0
    %v2142 = vadd.f32 %v2047, %v2141
    %v2143 = vpop.f32.mrb[0].mxu0
    %2144 = vmatprep.mubr.f32.mxu0 0.0
    %v2145 = vand.u32 %v1198, 4294901760
    %v2146 = vsub.f32 %v1198, %v2145
    %v2147 = vand.u32 %v2146, 4294901760
    %2148 = vmatmul.mubr.f32.gmra.mrb[0].mxu0 %v2147
    %v2149 = vpop.f32.mrb[0].mxu0
    %v2150 = vadd.f32 %v2054, %v2149
    %v2151 = vpop.f32.mrb[0].mxu0
    %2152 = vmatprep.mubr.f32.mxu0 0.0
    %v2153 = vand.u32 %v1199, 4294901760
    %v2154 = vsub.f32 %v1199, %v2153
    %v2155 = vand.u32 %v2154, 4294901760
    %2156 = vmatmul.mubr.f32.gmra.mrb[0].mxu0 %v2155
    %v2157 = vpop.f32.mrb[0].mxu0
    %v2158 = vadd.f32 %v2061, %v2157
    %v2159 = vpop.f32.mrb[0].mxu0
    %2160 = vmatprep.mubr.f32.mxu0 0.0
    %v2161 = vand.u32 %v1200, 4294901760
    %v2162 = vsub.f32 %v1200, %v2161
    %v2163 = vand.u32 %v2162, 4294901760
    %2164 = vmatmul.mubr.f32.gmra.mrb[0].mxu0 %v2163
    %v2165 = vpop.f32.mrb[0].mxu0
    %v2166 = vadd.f32 %v2068, %v2165
    %v2167 = vpop.f32.mrb[0].mxu0
    %2168 = vdwg.mxu0
    %2169 = vmatprep.subr.mxu0 0.0
    %v2170 = vand.u32 %v659, 4294901760
    %v2171 = vsub.f32 %v659, %v2170
    %v2172 = vand.u32 %v2171, 4294901760
    %2173 = vmatpush1.xpose.msra.mxu0 %v2172
    %2174 = vmatprep.subr.mxu0 0.0
    %2175 = vmatpush1.xpose.msra.mxu0 0.0
    %2176 = vmatprep.subr.mxu0 0.0
    %2177 = vmatpush1.xpose.msra.mxu0 0.0
    %2178 = vmatprep.subr.mxu0 0.0
    %2179 = vmatpush1.xpose.msra.mxu0 0.0
    %2180 = vmatprep.subr.mxu0 0.0
    %2181 = vmatpush1.xpose.msra.mxu0 0.0
    %2182 = vmatprep.subr.mxu0 0.0
    %2183 = vmatpush1.xpose.msra.mxu0 0.0
    %2184 = vmatprep.subr.mxu0 0.0
    %2185 = vmatpush1.xpose.msra.mxu0 0.0
    %2186 = vmatprep.subr.mxu0 0.0
    %2187 = vmatpush1.xpose.msra.mxu0 0.0
    %2188 = vmatprep.subr.mxu0 0.0
    %2189 = vmatpush1.xpose.msra.mxu0 0.0
    %2190 = vmatprep.subr.mxu0 0.0
    %2191 = vmatpush1.xpose.msra.mxu0 0.0
    %2192 = vmatprep.subr.mxu0 0.0
    %2193 = vmatpush1.xpose.msra.mxu0 0.0
    %2194 = vmatprep.subr.mxu0 0.0
    %2195 = vmatpush1.xpose.msra.mxu0 0.0
    %2196 = vmatprep.subr.mxu0 0.0
    %2197 = vmatpush1.xpose.msra.mxu0 0.0
    %2198 = vmatprep.subr.mxu0 0.0
    %2199 = vmatpush1.xpose.msra.mxu0 0.0
    %2200 = vmatprep.subr.mxu0 0.0
    %2201 = vmatpush1.xpose.msra.mxu0 0.0
    %2202 = vmatprep.subr.mxu0 0.0
    %2203 = vmatpush1.xpose.msra.mxu0 0.0
    %2204 = vmatprep.subr.mxu0 0.0
    %2205 = vmatpush1.xpose.msra.mxu0 0.0
    %2206 = vmatprep.subr.mxu0 0.0
    %2207 = vmatpush1.xpose.msra.mxu0 0.0
    %2208 = vmatprep.subr.mxu0 0.0
    %2209 = vmatpush1.xpose.msra.mxu0 0.0
    %2210 = vmatprep.subr.mxu0 0.0
    %2211 = vmatpush1.xpose.msra.mxu0 0.0
    %2212 = vmatprep.subr.mxu0 0.0
    %2213 = vmatpush1.xpose.msra.mxu0 0.0
    %2214 = vmatprep.subr.mxu0 0.0
    %2215 = vmatpush1.xpose.msra.mxu0 0.0
    %2216 = vmatprep.subr.mxu0 0.0
    %2217 = vmatpush1.xpose.msra.mxu0 0.0
    %2218 = vmatprep.subr.mxu0 0.0
    %2219 = vmatpush1.xpose.msra.mxu0 0.0
    %2220 = vmatprep.subr.mxu0 0.0
    %2221 = vmatpush1.xpose.msra.mxu0 0.0
    %2222 = vmatprep.subr.mxu0 0.0
    %2223 = vmatpush1.xpose.msra.mxu0 0.0
    %2224 = vmatprep.subr.mxu0 0.0
    %2225 = vmatpush1.xpose.msra.mxu0 0.0
    %2226 = vmatprep.subr.mxu0 0.0
    %2227 = vmatpush1.xpose.msra.mxu0 0.0
    %2228 = vmatprep.subr.mxu0 0.0
    %2229 = vmatpush1.xpose.msra.mxu0 0.0
    %2230 = vmatprep.subr.mxu0 0.0
    %2231 = vmatpush1.xpose.msra.mxu0 0.0
    %2232 = vmatprep.subr.mxu0 0.0
    %2233 = vmatpush1.xpose.msra.mxu0 0.0
    %2234 = vmatprep.subr.mxu0 0.0
    %2235 = vmatpush1.xpose.msra.mxu0 0.0
    %2236 = vmatprep.mubr.f32.mxu0 0.0
    %v2237 = vand.u32 %v1197, 4294901760
    %2238 = vmatmul.mubr.f32.gmra.mrb[0].mxu0 %v2237
    %v2239 = vpop.f32.mrb[0].mxu0
    %v2240 = vadd.f32 %v2142, %v2239
    %v2241 = vpop.f32.mrb[0].mxu0
    %2242 = vmatprep.mubr.f32.mxu0 0.0
    %v2243 = vand.u32 %v1198, 4294901760
    %2244 = vmatmul.mubr.f32.gmra.mrb[0].mxu0 %v2243
    %v2245 = vpop.f32.mrb[0].mxu0
    %v2246 = vadd.f32 %v2150, %v2245
    %v2247 = vpop.f32.mrb[0].mxu0
    %2248 = vmatprep.mubr.f32.mxu0 0.0
    %v2249 = vand.u32 %v1199, 4294901760
    %2250 = vmatmul.mubr.f32.gmra.mrb[0].mxu0 %v2249
    %v2251 = vpop.f32.mrb[0].mxu0
    %v2252 = vadd.f32 %v2158, %v2251
    %v2253 = vpop.f32.mrb[0].mxu0
    %2254 = vmatprep.mubr.f32.mxu0 0.0
    %v2255 = vand.u32 %v1200, 4294901760
    %2256 = vmatmul.mubr.f32.gmra.mrb[0].mxu0 %v2255
    %v2257 = vpop.f32.mrb[0].mxu0
    %v2258 = vadd.f32 %v2166, %v2257
    %v2259 = vpop.f32.mrb[0].mxu0
    %2260 = vdwg.mxu0
    %2261 = vmatprep.subr.mxu0 0.0
    %v2262 = vand.u32 %v659, 4294901760
    %2263 = vmatpush1.xpose.msra.mxu0 %v2262
    %2264 = vmatprep.subr.mxu0 0.0
    %2265 = vmatpush1.xpose.msra.mxu0 0.0
    %2266 = vmatprep.subr.mxu0 0.0
    %2267 = vmatpush1.xpose.msra.mxu0 0.0
    %2268 = vmatprep.subr.mxu0 0.0
    %2269 = vmatpush1.xpose.msra.mxu0 0.0
    %2270 = vmatprep.subr.mxu0 0.0
    %2271 = vmatpush1.xpose.msra.mxu0 0.0
    %2272 = vmatprep.subr.mxu0 0.0
    %2273 = vmatpush1.xpose.msra.mxu0 0.0
    %2274 = vmatprep.subr.mxu0 0.0
    %2275 = vmatpush1.xpose.msra.mxu0 0.0
    %2276 = vmatprep.subr.mxu0 0.0
    %2277 = vmatpush1.xpose.msra.mxu0 0.0
    %2278 = vmatprep.subr.mxu0 0.0
    %2279 = vmatpush1.xpose.msra.mxu0 0.0
    %2280 = vmatprep.subr.mxu0 0.0
    %2281 = vmatpush1.xpose.msra.mxu0 0.0
    %2282 = vmatprep.subr.mxu0 0.0
    %2283 = vmatpush1.xpose.msra.mxu0 0.0
    %2284 = vmatprep.subr.mxu0 0.0
    %2285 = vmatpush1.xpose.msra.mxu0 0.0
    %2286 = vmatprep.subr.mxu0 0.0
    %2287 = vmatpush1.xpose.msra.mxu0 0.0
    %2288 = vmatprep.subr.mxu0 0.0
    %2289 = vmatpush1.xpose.msra.mxu0 0.0
    %2290 = vmatprep.subr.mxu0 0.0
    %2291 = vmatpush1.xpose.msra.mxu0 0.0
    %2292 = vmatprep.subr.mxu0 0.0
    %2293 = vmatpush1.xpose.msra.mxu0 0.0
    %2294 = vmatprep.subr.mxu0 0.0
    %2295 = vmatpush1.xpose.msra.mxu0 0.0
    %2296 = vmatprep.subr.mxu0 0.0
    %2297 = vmatpush1.xpose.msra.mxu0 0.0
    %2298 = vmatprep.subr.mxu0 0.0
    %2299 = vmatpush1.xpose.msra.mxu0 0.0
    %2300 = vmatprep.subr.mxu0 0.0
    %2301 = vmatpush1.xpose.msra.mxu0 0.0
    %2302 = vmatprep.subr.mxu0 0.0
    %2303 = vmatpush1.xpose.msra.mxu0 0.0
    %2304 = vmatprep.subr.mxu0 0.0
    %2305 = vmatpush1.xpose.msra.mxu0 0.0
    %2306 = vmatprep.subr.mxu0 0.0
    %2307 = vmatpush1.xpose.msra.mxu0 0.0
    %2308 = vmatprep.subr.mxu0 0.0
    %2309 = vmatpush1.xpose.msra.mxu0 0.0
    %2310 = vmatprep.subr.mxu0 0.0
    %2311 = vmatpush1.xpose.msra.mxu0 0.0
    %2312 = vmatprep.subr.mxu0 0.0
    %2313 = vmatpush1.xpose.msra.mxu0 0.0
    %2314 = vmatprep.subr.mxu0 0.0
    %2315 = vmatpush1.xpose.msra.mxu0 0.0
    %2316 = vmatprep.subr.mxu0 0.0
    %2317 = vmatpush1.xpose.msra.mxu0 0.0
    %2318 = vmatprep.subr.mxu0 0.0
    %2319 = vmatpush1.xpose.msra.mxu0 0.0
    %2320 = vmatprep.subr.mxu0 0.0
    %2321 = vmatpush1.xpose.msra.mxu0 0.0
    %2322 = vmatprep.subr.mxu0 0.0
    %2323 = vmatpush1.xpose.msra.mxu0 0.0
    %2324 = vmatprep.subr.mxu0 0.0
    %2325 = vmatpush1.xpose.msra.mxu0 0.0
    %2326 = vmatprep.mubr.f32.mxu0 0.0
    %v2327 = vand.u32 %v1197, 4294901760
    %2328 = vmatmul.mubr.f32.gmra.mrb[0].mxu0 %v2327
    %v2329 = vpop.f32.mrb[0].mxu0
    %v2330 = vadd.f32 %v2240, %v2329
    %v2331 = vpop.f32.mrb[0].mxu0
    %2332 = vmatprep.mubr.f32.mxu0 0.0
    %v2333 = vand.u32 %v1198, 4294901760
    %2334 = vmatmul.mubr.f32.gmra.mrb[0].mxu0 %v2333
    %v2335 = vpop.f32.mrb[0].mxu0
    %v2336 = vadd.f32 %v2246, %v2335
    %v2337 = vpop.f32.mrb[0].mxu0
    %2338 = vmatprep.mubr.f32.mxu0 0.0
    %v2339 = vand.u32 %v1199, 4294901760
    %2340 = vmatmul.mubr.f32.gmra.mrb[0].mxu0 %v2339
    %v2341 = vpop.f32.mrb[0].mxu0
    %v2342 = vadd.f32 %v2252, %v2341
    %v2343 = vpop.f32.mrb[0].mxu0
    %2344 = vmatprep.mubr.f32.mxu0 0.0
    %v2345 = vand.u32 %v1200, 4294901760
    %2346 = vmatmul.mubr.f32.gmra.mrb[0].mxu0 %v2345
    %v2347 = vpop.f32.mrb[0].mxu0
    %v2348 = vadd.f32 %v2258, %v2347
    %v2349 = vpop.f32.mrb[0].mxu0
    %2350 = vdwg.mxu0
    %v2351 = vmul.f32 %v1755, 0.17677669
    %v2352 = vmul.f32 %v1761, 0.17677669
    %v2353 = vmul.f32 %v1767, 0.17677669
    %v2354 = vmul.f32 %v1773, 0.17677669
    %v2355 = vmul.f32 %v2330, 0.17677669
    %v2356 = vmul.f32 %v2336, 0.17677669
    %v2357 = vmul.f32 %v2342, 0.17677669
    %v2358 = vmul.f32 %v2348, 0.17677669
    %vm2359 = vcmask 64512
    %v2360 = vsel %vm2359, %v2351, -inf
    %2361 = vmax.xlane.f32.xlu0 %v2360
    %v2362 = vpop.xlane.xlu0 %2361
    %v2363 = vsel %vm2359, %v2352, -inf
    %2364 = vmax.xlane.f32.xlu0 %v2363
    %v2365 = vpop.xlane.xlu0 %2364
    %v2366 = vsel %vm2359, %v2353, -inf
    %2367 = vmax.xlane.f32.xlu0 %v2366
    %v2368 = vpop.xlane.xlu0 %2367
    %v2369 = vsel %vm2359, %v2354, -inf
    %2370 = vmax.xlane.f32.xlu0 %v2369
    %v2371 = vpop.xlane.xlu0 %2370
    %v2372 = vsel %vm2359, %v2355, -inf
    %2373 = vmax.xlane.f32.xlu0 %v2372
    %v2374 = vpop.xlane.xlu0 %2373
    %v2375 = vsel %vm2359, %v2356, -inf
    %2376 = vmax.xlane.f32.xlu0 %v2375
    %v2377 = vpop.xlane.xlu0 %2376
    %v2378 = vsel %vm2359, %v2357, -inf
    %2379 = vmax.xlane.f32.xlu0 %v2378
    %v2380 = vpop.xlane.xlu0 %2379
    %v2381 = vsel %vm2359, %v2358, -inf
    %2382 = vmax.xlane.f32.xlu0 %v2381
    %v2383 = vpop.xlane.xlu0 %2382
    %v2384 = vsub.f32 %v2351, %v2362
    %v2385 = vsub.f32 %v2352, %v2365
    %v2386 = vsub.f32 %v2353, %v2368
    %v2387 = vsub.f32 %v2354, %v2371
    %v2388 = vsub.f32 %v2355, %v2374
    %v2389 = vsub.f32 %v2356, %v2377
    %v2390 = vsub.f32 %v2357, %v2380
    %v2391 = vsub.f32 %v2358, %v2383
    %v2392 = vmul.f32 %v2384, 1.442695
    %v2393 = vpow.pop %v2392
    %v2394 = vmul.f32 %v2385, 1.442695
    %v2395 = vpow.pop %v2394
    %v2396 = vmul.f32 %v2386, 1.442695
    %v2397 = vpow.pop %v2396
    %v2398 = vmul.f32 %v2387, 1.442695
    %v2399 = vpow.pop %v2398
    %v2400 = vmul.f32 %v2388, 1.442695
    %v2401 = vpow.pop %v2400
    %v2402 = vmul.f32 %v2389, 1.442695
    %v2403 = vpow.pop %v2402
    %v2404 = vmul.f32 %v2390, 1.442695
    %v2405 = vpow.pop %v2404
    %v2406 = vmul.f32 %v2391, 1.442695
    %v2407 = vpow.pop %v2406
    %v2408 = vsel %vm2359, %v2393, 0.0
    %2409 = vadd.xlane.f32.xlu0 %v2408
    %v2410 = vpop.xlane.xlu0 %2409
    %v2411 = vsel %vm2359, %v2395, 0.0
    %2412 = vadd.xlane.f32.xlu0 %v2411
    %v2413 = vpop.xlane.xlu0 %2412
    %v2414 = vsel %vm2359, %v2397, 0.0
    %2415 = vadd.xlane.f32.xlu0 %v2414
    %v2416 = vpop.xlane.xlu0 %2415
    %v2417 = vsel %vm2359, %v2399, 0.0
    %2418 = vadd.xlane.f32.xlu0 %v2417
    %v2419 = vpop.xlane.xlu0 %2418
    %v2420 = vsel %vm2359, %v2401, 0.0
    %2421 = vadd.xlane.f32.xlu0 %v2420
    %v2422 = vpop.xlane.xlu0 %2421
    %v2423 = vsel %vm2359, %v2403, 0.0
    %2424 = vadd.xlane.f32.xlu0 %v2423
    %v2425 = vpop.xlane.xlu0 %2424
    %v2426 = vsel %vm2359, %v2405, 0.0
    %2427 = vadd.xlane.f32.xlu0 %v2426
    %v2428 = vpop.xlane.xlu0 %2427
    %v2429 = vsel %vm2359, %v2407, 0.0
    %2430 = vadd.xlane.f32.xlu0 %v2429
    %v2431 = vpop.xlane.xlu0 %2430
    %v2432 = vrcp.pop %v2410
    %v2433 = vrcp.pop %v2413
    %v2434 = vrcp.pop %v2416
    %v2435 = vrcp.pop %v2419
    %v2436 = vrcp.pop %v2422
    %v2437 = vrcp.pop %v2425
    %v2438 = vrcp.pop %v2428
    %v2439 = vrcp.pop %v2431
    %v2440 = vmul.f32 %v2393, %v2432
    %v2441 = vmul.f32 %v2395, %v2433
    %v2442 = vmul.f32 %v2397, %v2434
    %v2443 = vmul.f32 %v2399, %v2435
    %v2444 = vmul.f32 %v2401, %v2436
    %v2445 = vmul.f32 %v2403, %v2437
    %v2446 = vmul.f32 %v2405, %v2438
    %v2447 = vmul.f32 %v2407, %v2439
    %v2449 = vsel %vm2359, %v2440, 0
    %v2452 = vsel %vm2359, %v2441, 0
    %v2455 = vsel %vm2359, %v2442, 0
    %v2458 = vsel %vm2359, %v2443, 0
    %2460 = vmatprep.subr.mxu0 0.0
    %v2461 = vand.u32 %v1180, 4294901760
    %2462 = vmatpush1.msra.mxu0 %v2461
    %2463 = vmatprep.subr.mxu0 0.0
    %2464 = vmatpush1.msra.mxu0 0.0
    %2465 = vmatprep.subr.mxu0 0.0
    %2466 = vmatpush1.msra.mxu0 0.0
    %2467 = vmatprep.subr.mxu0 0.0
    %2468 = vmatpush1.msra.mxu0 0.0
    %2469 = vmatprep.subr.mxu0 0.0
    %2470 = vmatpush1.msra.mxu0 0.0
    %2471 = vmatprep.subr.mxu0 0.0
    %2472 = vmatpush1.msra.mxu0 0.0
    %2473 = vmatprep.subr.mxu0 0.0
    %2474 = vmatpush1.msra.mxu0 0.0
    %2475 = vmatprep.subr.mxu0 0.0
    %2476 = vmatpush1.msra.mxu0 0.0
    %2477 = vmatprep.subr.mxu0 0.0
    %2478 = vmatpush1.msra.mxu0 0.0
    %2479 = vmatprep.subr.mxu0 0.0
    %2480 = vmatpush1.msra.mxu0 0.0
    %2481 = vmatprep.subr.mxu0 0.0
    %2482 = vmatpush1.msra.mxu0 0.0
    %2483 = vmatprep.subr.mxu0 0.0
    %2484 = vmatpush1.msra.mxu0 0.0
    %2485 = vmatprep.subr.mxu0 0.0
    %2486 = vmatpush1.msra.mxu0 0.0
    %2487 = vmatprep.subr.mxu0 0.0
    %2488 = vmatpush1.msra.mxu0 0.0
    %2489 = vmatprep.subr.mxu0 0.0
    %2490 = vmatpush1.msra.mxu0 0.0
    %2491 = vmatprep.subr.mxu0 0.0
    %2492 = vmatpush1.msra.mxu0 0.0
    %2493 = vmatprep.subr.mxu0 0.0
    %2494 = vmatpush1.msra.mxu0 0.0
    %2495 = vmatprep.subr.mxu0 0.0
    %2496 = vmatpush1.msra.mxu0 0.0
    %2497 = vmatprep.subr.mxu0 0.0
    %2498 = vmatpush1.msra.mxu0 0.0
    %2499 = vmatprep.subr.mxu0 0.0
    %2500 = vmatpush1.msra.mxu0 0.0
    %2501 = vmatprep.subr.mxu0 0.0
    %2502 = vmatpush1.msra.mxu0 0.0
    %2503 = vmatprep.subr.mxu0 0.0
    %2504 = vmatpush1.msra.mxu0 0.0
    %2505 = vmatprep.subr.mxu0 0.0
    %2506 = vmatpush1.msra.mxu0 0.0
    %2507 = vmatprep.subr.mxu0 0.0
    %2508 = vmatpush1.msra.mxu0 0.0
    %2509 = vmatprep.subr.mxu0 0.0
    %2510 = vmatpush1.msra.mxu0 0.0
    %2511 = vmatprep.subr.mxu0 0.0
    %2512 = vmatpush1.msra.mxu0 0.0
    %2513 = vmatprep.subr.mxu0 0.0
    %2514 = vmatpush1.msra.mxu0 0.0
    %2515 = vmatprep.subr.mxu0 0.0
    %2516 = vmatpush1.msra.mxu0 0.0
    %2517 = vmatprep.subr.mxu0 0.0
    %2518 = vmatpush1.msra.mxu0 0.0
    %2519 = vmatprep.subr.mxu0 0.0
    %2520 = vmatpush1.msra.mxu0 0.0
    %2521 = vmatprep.subr.mxu0 0.0
    %2522 = vmatpush1.msra.mxu0 0.0
    %2523 = vmatprep.subr.mxu0 0.0
    %2524 = vmatpush1.msra.mxu0 0.0
    %2525 = vmatprep.mubr.f32.mxu0 0.0
    %v2526 = vand.u32 %v2449, 4294901760
    %v2527 = vsub.f32 %v2449, %v2526
    %v2528 = vand.u32 %v2527, 4294901760
    %v2529 = vsub.f32 %v2527, %v2528
    %v2530 = vand.u32 %v2529, 4294901760
    %2531 = vmatmul.mubr.f32.gmra.mrb[0].mxu0 %v2530
    %v2532 = vpop.f32.mrb[0].mxu0
    %v2533 = vadd.f32 0.0, %v2532
    %v2534 = vpop.f32.mrb[0].mxu0
    %2535 = vmatprep.mubr.f32.mxu0 0.0
    %v2536 = vand.u32 %v2452, 4294901760
    %v2537 = vsub.f32 %v2452, %v2536
    %v2538 = vand.u32 %v2537, 4294901760
    %v2539 = vsub.f32 %v2537, %v2538
    %v2540 = vand.u32 %v2539, 4294901760
    %2541 = vmatmul.mubr.f32.gmra.mrb[0].mxu0 %v2540
    %v2542 = vpop.f32.mrb[0].mxu0
    %v2543 = vadd.f32 0.0, %v2542
    %v2544 = vpop.f32.mrb[0].mxu0
    %2545 = vmatprep.mubr.f32.mxu0 0.0
    %v2546 = vand.u32 %v2455, 4294901760
    %v2547 = vsub.f32 %v2455, %v2546
    %v2548 = vand.u32 %v2547, 4294901760
    %v2549 = vsub.f32 %v2547, %v2548
    %v2550 = vand.u32 %v2549, 4294901760
    %2551 = vmatmul.mubr.f32.gmra.mrb[0].mxu0 %v2550
    %v2552 = vpop.f32.mrb[0].mxu0
    %v2553 = vadd.f32 0.0, %v2552
    %v2554 = vpop.f32.mrb[0].mxu0
    %2555 = vmatprep.mubr.f32.mxu0 0.0
    %v2556 = vand.u32 %v2458, 4294901760
    %v2557 = vsub.f32 %v2458, %v2556
    %v2558 = vand.u32 %v2557, 4294901760
    %v2559 = vsub.f32 %v2557, %v2558
    %v2560 = vand.u32 %v2559, 4294901760
    %2561 = vmatmul.mubr.f32.gmra.mrb[0].mxu0 %v2560
    %v2562 = vpop.f32.mrb[0].mxu0
    %v2563 = vadd.f32 0.0, %v2562
    %v2564 = vpop.f32.mrb[0].mxu0
    %2565 = vdwg.mxu0
    %2566 = vmatprep.subr.mxu0 0.0
    %v2567 = vand.u32 %v1180, 4294901760
    %v2568 = vsub.f32 %v1180, %v2567
    %v2569 = vand.u32 %v2568, 4294901760
    %v2570 = vsub.f32 %v2568, %v2569
    %v2571 = vand.u32 %v2570, 4294901760
    %2572 = vmatpush1.msra.mxu0 %v2571
    %2573 = vmatprep.subr.mxu0 0.0
    %2574 = vmatpush1.msra.mxu0 0.0
    %2575 = vmatprep.subr.mxu0 0.0
    %2576 = vmatpush1.msra.mxu0 0.0
    %2577 = vmatprep.subr.mxu0 0.0
    %2578 = vmatpush1.msra.mxu0 0.0
    %2579 = vmatprep.subr.mxu0 0.0
    %2580 = vmatpush1.msra.mxu0 0.0
    %2581 = vmatprep.subr.mxu0 0.0
    %2582 = vmatpush1.msra.mxu0 0.0
    %2583 = vmatprep.subr.mxu0 0.0
    %2584 = vmatpush1.msra.mxu0 0.0
    %2585 = vmatprep.subr.mxu0 0.0
    %2586 = vmatpush1.msra.mxu0 0.0
    %2587 = vmatprep.subr.mxu0 0.0
    %2588 = vmatpush1.msra.mxu0 0.0
    %2589 = vmatprep.subr.mxu0 0.0
    %2590 = vmatpush1.msra.mxu0 0.0
    %2591 = vmatprep.subr.mxu0 0.0
    %2592 = vmatpush1.msra.mxu0 0.0
    %2593 = vmatprep.subr.mxu0 0.0
    %2594 = vmatpush1.msra.mxu0 0.0
    %2595 = vmatprep.subr.mxu0 0.0
    %2596 = vmatpush1.msra.mxu0 0.0
    %2597 = vmatprep.subr.mxu0 0.0
    %2598 = vmatpush1.msra.mxu0 0.0
    %2599 = vmatprep.subr.mxu0 0.0
    %2600 = vmatpush1.msra.mxu0 0.0
    %2601 = vmatprep.subr.mxu0 0.0
    %2602 = vmatpush1.msra.mxu0 0.0
    %2603 = vmatprep.subr.mxu0 0.0
    %2604 = vmatpush1.msra.mxu0 0.0
    %2605 = vmatprep.subr.mxu0 0.0
    %2606 = vmatpush1.msra.mxu0 0.0
    %2607 = vmatprep.subr.mxu0 0.0
    %2608 = vmatpush1.msra.mxu0 0.0
    %2609 = vmatprep.subr.mxu0 0.0
    %2610 = vmatpush1.msra.mxu0 0.0
    %2611 = vmatprep.subr.mxu0 0.0
    %2612 = vmatpush1.msra.mxu0 0.0
    %2613 = vmatprep.subr.mxu0 0.0
    %2614 = vmatpush1.msra.mxu0 0.0
    %2615 = vmatprep.subr.mxu0 0.0
    %2616 = vmatpush1.msra.mxu0 0.0
    %2617 = vmatprep.subr.mxu0 0.0
    %2618 = vmatpush1.msra.mxu0 0.0
    %2619 = vmatprep.subr.mxu0 0.0
    %2620 = vmatpush1.msra.mxu0 0.0
    %2621 = vmatprep.subr.mxu0 0.0
    %2622 = vmatpush1.msra.mxu0 0.0
    %2623 = vmatprep.subr.mxu0 0.0
    %2624 = vmatpush1.msra.mxu0 0.0
    %2625 = vmatprep.subr.mxu0 0.0
    %2626 = vmatpush1.msra.mxu0 0.0
    %2627 = vmatprep.subr.mxu0 0.0
    %2628 = vmatpush1.msra.mxu0 0.0
    %2629 = vmatprep.subr.mxu0 0.0
    %2630 = vmatpush1.msra.mxu0 0.0
    %2631 = vmatprep.subr.mxu0 0.0
    %2632 = vmatpush1.msra.mxu0 0.0
    %2633 = vmatprep.subr.mxu0 0.0
    %2634 = vmatpush1.msra.mxu0 0.0
    %2635 = vmatprep.mubr.f32.mxu0 0.0
    %v2636 = vand.u32 %v2449, 4294901760
    %2637 = vmatmul.mubr.f32.gmra.mrb[0].mxu0 %v2636
    %v2638 = vpop.f32.mrb[0].mxu0
    %v2639 = vadd.f32 %v2533, %v2638
    %v2640 = vpop.f32.mrb[0].mxu0
    %2641 = vmatprep.mubr.f32.mxu0 0.0
    %v2642 = vand.u32 %v2452, 4294901760
    %2643 = vmatmul.mubr.f32.gmra.mrb[0].mxu0 %v2642
    %v2644 = vpop.f32.mrb[0].mxu0
    %v2645 = vadd.f32 %v2543, %v2644
    %v2646 = vpop.f32.mrb[0].mxu0
    %2647 = vmatprep.mubr.f32.mxu0 0.0
    %v2648 = vand.u32 %v2455, 4294901760
    %2649 = vmatmul.mubr.f32.gmra.mrb[0].mxu0 %v2648
    %v2650 = vpop.f32.mrb[0].mxu0
    %v2651 = vadd.f32 %v2553, %v2650
    %v2652 = vpop.f32.mrb[0].mxu0
    %2653 = vmatprep.mubr.f32.mxu0 0.0
    %v2654 = vand.u32 %v2458, 4294901760
    %2655 = vmatmul.mubr.f32.gmra.mrb[0].mxu0 %v2654
    %v2656 = vpop.f32.mrb[0].mxu0
    %v2657 = vadd.f32 %v2563, %v2656
    %v2658 = vpop.f32.mrb[0].mxu0
    %2659 = vdwg.mxu0
    %2660 = vmatprep.subr.mxu0 0.0
    %v2661 = vand.u32 %v1180, 4294901760
    %v2662 = vsub.f32 %v1180, %v2661
    %2663 = vmatpush1.msra.mxu0 %v2662
    %2664 = vmatprep.subr.mxu0 0.0
    %2665 = vmatpush1.msra.mxu0 0.0
    %2666 = vmatprep.subr.mxu0 0.0
    %2667 = vmatpush1.msra.mxu0 0.0
    %2668 = vmatprep.subr.mxu0 0.0
    %2669 = vmatpush1.msra.mxu0 0.0
    %2670 = vmatprep.subr.mxu0 0.0
    %2671 = vmatpush1.msra.mxu0 0.0
    %2672 = vmatprep.subr.mxu0 0.0
    %2673 = vmatpush1.msra.mxu0 0.0
    %2674 = vmatprep.subr.mxu0 0.0
    %2675 = vmatpush1.msra.mxu0 0.0
    %2676 = vmatprep.subr.mxu0 0.0
    %2677 = vmatpush1.msra.mxu0 0.0
    %2678 = vmatprep.subr.mxu0 0.0
    %2679 = vmatpush1.msra.mxu0 0.0
    %2680 = vmatprep.subr.mxu0 0.0
    %2681 = vmatpush1.msra.mxu0 0.0
    %2682 = vmatprep.subr.mxu0 0.0
    %2683 = vmatpush1.msra.mxu0 0.0
    %2684 = vmatprep.subr.mxu0 0.0
    %2685 = vmatpush1.msra.mxu0 0.0
    %2686 = vmatprep.subr.mxu0 0.0
    %2687 = vmatpush1.msra.mxu0 0.0
    %2688 = vmatprep.subr.mxu0 0.0
    %2689 = vmatpush1.msra.mxu0 0.0
    %2690 = vmatprep.subr.mxu0 0.0
    %2691 = vmatpush1.msra.mxu0 0.0
    %2692 = vmatprep.subr.mxu0 0.0
    %2693 = vmatpush1.msra.mxu0 0.0
    %2694 = vmatprep.subr.mxu0 0.0
    %2695 = vmatpush1.msra.mxu0 0.0
    %2696 = vmatprep.subr.mxu0 0.0
    %2697 = vmatpush1.msra.mxu0 0.0
    %2698 = vmatprep.subr.mxu0 0.0
    %2699 = vmatpush1.msra.mxu0 0.0
    %2700 = vmatprep.subr.mxu0 0.0
    %2701 = vmatpush1.msra.mxu0 0.0
    %2702 = vmatprep.subr.mxu0 0.0
    %2703 = vmatpush1.msra.mxu0 0.0
    %2704 = vmatprep.subr.mxu0 0.0
    %2705 = vmatpush1.msra.mxu0 0.0
    %2706 = vmatprep.subr.mxu0 0.0
    %2707 = vmatpush1.msra.mxu0 0.0
    %2708 = vmatprep.subr.mxu0 0.0
    %2709 = vmatpush1.msra.mxu0 0.0
    %2710 = vmatprep.subr.mxu0 0.0
    %2711 = vmatpush1.msra.mxu0 0.0
    %2712 = vmatprep.subr.mxu0 0.0
    %2713 = vmatpush1.msra.mxu0 0.0
    %2714 = vmatprep.subr.mxu0 0.0
    %2715 = vmatpush1.msra.mxu0 0.0
    %2716 = vmatprep.subr.mxu0 0.0
    %2717 = vmatpush1.msra.mxu0 0.0
    %2718 = vmatprep.subr.mxu0 0.0
    %2719 = vmatpush1.msra.mxu0 0.0
    %2720 = vmatprep.subr.mxu0 0.0
    %2721 = vmatpush1.msra.mxu0 0.0
    %2722 = vmatprep.subr.mxu0 0.0
    %2723 = vmatpush1.msra.mxu0 0.0
    %2724 = vmatprep.subr.mxu0 0.0
    %2725 = vmatpush1.msra.mxu0 0.0
    %2726 = vmatprep.mubr.f32.mxu0 0.0
    %v2727 = vand.u32 %v2449, 4294901760
    %v2728 = vsub.f32 %v2449, %v2727
    %2729 = vmatmul.mubr.f32.gmra.mrb[0].mxu0 %v2728
    %v2730 = vpop.f32.mrb[0].mxu0
    %v2731 = vadd.f32 %v2639, %v2730
    %v2732 = vpop.f32.mrb[0].mxu0
    %2733 = vmatprep.mubr.f32.mxu0 0.0
    %v2734 = vand.u32 %v2452, 4294901760
    %v2735 = vsub.f32 %v2452, %v2734
    %2736 = vmatmul.mubr.f32.gmra.mrb[0].mxu0 %v2735
    %v2737 = vpop.f32.mrb[0].mxu0
    %v2738 = vadd.f32 %v2645, %v2737
    %v2739 = vpop.f32.mrb[0].mxu0
    %2740 = vmatprep.mubr.f32.mxu0 0.0
    %v2741 = vand.u32 %v2455, 4294901760
    %v2742 = vsub.f32 %v2455, %v2741
    %2743 = vmatmul.mubr.f32.gmra.mrb[0].mxu0 %v2742
    %v2744 = vpop.f32.mrb[0].mxu0
    %v2745 = vadd.f32 %v2651, %v2744
    %v2746 = vpop.f32.mrb[0].mxu0
    %2747 = vmatprep.mubr.f32.mxu0 0.0
    %v2748 = vand.u32 %v2458, 4294901760
    %v2749 = vsub.f32 %v2458, %v2748
    %2750 = vmatmul.mubr.f32.gmra.mrb[0].mxu0 %v2749
    %v2751 = vpop.f32.mrb[0].mxu0
    %v2752 = vadd.f32 %v2657, %v2751
    %v2753 = vpop.f32.mrb[0].mxu0
    %2754 = vdwg.mxu0
    %2755 = vmatprep.subr.mxu0 0.0
    %v2756 = vand.u32 %v1180, 4294901760
    %2757 = vmatpush1.msra.mxu0 %v2756
    %2758 = vmatprep.subr.mxu0 0.0
    %2759 = vmatpush1.msra.mxu0 0.0
    %2760 = vmatprep.subr.mxu0 0.0
    %2761 = vmatpush1.msra.mxu0 0.0
    %2762 = vmatprep.subr.mxu0 0.0
    %2763 = vmatpush1.msra.mxu0 0.0
    %2764 = vmatprep.subr.mxu0 0.0
    %2765 = vmatpush1.msra.mxu0 0.0
    %2766 = vmatprep.subr.mxu0 0.0
    %2767 = vmatpush1.msra.mxu0 0.0
    %2768 = vmatprep.subr.mxu0 0.0
    %2769 = vmatpush1.msra.mxu0 0.0
    %2770 = vmatprep.subr.mxu0 0.0
    %2771 = vmatpush1.msra.mxu0 0.0
    %2772 = vmatprep.subr.mxu0 0.0
    %2773 = vmatpush1.msra.mxu0 0.0
    %2774 = vmatprep.subr.mxu0 0.0
    %2775 = vmatpush1.msra.mxu0 0.0
    %2776 = vmatprep.subr.mxu0 0.0
    %2777 = vmatpush1.msra.mxu0 0.0
    %2778 = vmatprep.subr.mxu0 0.0
    %2779 = vmatpush1.msra.mxu0 0.0
    %2780 = vmatprep.subr.mxu0 0.0
    %2781 = vmatpush1.msra.mxu0 0.0
    %2782 = vmatprep.subr.mxu0 0.0
    %2783 = vmatpush1.msra.mxu0 0.0
    %2784 = vmatprep.subr.mxu0 0.0
    %2785 = vmatpush1.msra.mxu0 0.0
    %2786 = vmatprep.subr.mxu0 0.0
    %2787 = vmatpush1.msra.mxu0 0.0
    %2788 = vmatprep.subr.mxu0 0.0
    %2789 = vmatpush1.msra.mxu0 0.0
    %2790 = vmatprep.subr.mxu0 0.0
    %2791 = vmatpush1.msra.mxu0 0.0
    %2792 = vmatprep.subr.mxu0 0.0
    %2793 = vmatpush1.msra.mxu0 0.0
    %2794 = vmatprep.subr.mxu0 0.0
    %2795 = vmatpush1.msra.mxu0 0.0
    %2796 = vmatprep.subr.mxu0 0.0
    %2797 = vmatpush1.msra.mxu0 0.0
    %2798 = vmatprep.subr.mxu0 0.0
    %2799 = vmatpush1.msra.mxu0 0.0
    %2800 = vmatprep.subr.mxu0 0.0
    %2801 = vmatpush1.msra.mxu0 0.0
    %2802 = vmatprep.subr.mxu0 0.0
    %2803 = vmatpush1.msra.mxu0 0.0
    %2804 = vmatprep.subr.mxu0 0.0
    %2805 = vmatpush1.msra.mxu0 0.0
    %2806 = vmatprep.subr.mxu0 0.0
    %2807 = vmatpush1.msra.mxu0 0.0
    %2808 = vmatprep.subr.mxu0 0.0
    %2809 = vmatpush1.msra.mxu0 0.0
    %2810 = vmatprep.subr.mxu0 0.0
    %2811 = vmatpush1.msra.mxu0 0.0
    %2812 = vmatprep.subr.mxu0 0.0
    %2813 = vmatpush1.msra.mxu0 0.0
    %2814 = vmatprep.subr.mxu0 0.0
    %2815 = vmatpush1.msra.mxu0 0.0
    %2816 = vmatprep.subr.mxu0 0.0
    %2817 = vmatpush1.msra.mxu0 0.0
    %2818 = vmatprep.subr.mxu0 0.0
    %2819 = vmatpush1.msra.mxu0 0.0
    %2820 = vmatprep.mubr.f32.mxu0 0.0
    %v2821 = vand.u32 %v2449, 4294901760
    %v2822 = vsub.f32 %v2449, %v2821
    %v2823 = vand.u32 %v2822, 4294901760
    %2824 = vmatmul.mubr.f32.gmra.mrb[0].mxu0 %v2823
    %v2825 = vpop.f32.mrb[0].mxu0
    %v2826 = vadd.f32 %v2731, %v2825
    %v2827 = vpop.f32.mrb[0].mxu0
    %2828 = vmatprep.mubr.f32.mxu0 0.0
    %v2829 = vand.u32 %v2452, 4294901760
    %v2830 = vsub.f32 %v2452, %v2829
    %v2831 = vand.u32 %v2830, 4294901760
    %2832 = vmatmul.mubr.f32.gmra.mrb[0].mxu0 %v2831
    %v2833 = vpop.f32.mrb[0].mxu0
    %v2834 = vadd.f32 %v2738, %v2833
    %v2835 = vpop.f32.mrb[0].mxu0
    %2836 = vmatprep.mubr.f32.mxu0 0.0
    %v2837 = vand.u32 %v2455, 4294901760
    %v2838 = vsub.f32 %v2455, %v2837
    %v2839 = vand.u32 %v2838, 4294901760
    %2840 = vmatmul.mubr.f32.gmra.mrb[0].mxu0 %v2839
    %v2841 = vpop.f32.mrb[0].mxu0
    %v2842 = vadd.f32 %v2745, %v2841
    %v2843 = vpop.f32.mrb[0].mxu0
    %2844 = vmatprep.mubr.f32.mxu0 0.0
    %v2845 = vand.u32 %v2458, 4294901760
    %v2846 = vsub.f32 %v2458, %v2845
    %v2847 = vand.u32 %v2846, 4294901760
    %2848 = vmatmul.mubr.f32.gmra.mrb[0].mxu0 %v2847
    %v2849 = vpop.f32.mrb[0].mxu0
    %v2850 = vadd.f32 %v2752, %v2849
    %v2851 = vpop.f32.mrb[0].mxu0
    %2852 = vdwg.mxu0
    %2853 = vmatprep.subr.mxu0 0.0
    %v2854 = vand.u32 %v1180, 4294901760
    %v2855 = vsub.f32 %v1180, %v2854
    %v2856 = vand.u32 %v2855, 4294901760
    %2857 = vmatpush1.msra.mxu0 %v2856
    %2858 = vmatprep.subr.mxu0 0.0
    %2859 = vmatpush1.msra.mxu0 0.0
    %2860 = vmatprep.subr.mxu0 0.0
    %2861 = vmatpush1.msra.mxu0 0.0
    %2862 = vmatprep.subr.mxu0 0.0
    %2863 = vmatpush1.msra.mxu0 0.0
    %2864 = vmatprep.subr.mxu0 0.0
    %2865 = vmatpush1.msra.mxu0 0.0
    %2866 = vmatprep.subr.mxu0 0.0
    %2867 = vmatpush1.msra.mxu0 0.0
    %2868 = vmatprep.subr.mxu0 0.0
    %2869 = vmatpush1.msra.mxu0 0.0
    %2870 = vmatprep.subr.mxu0 0.0
    %2871 = vmatpush1.msra.mxu0 0.0
    %2872 = vmatprep.subr.mxu0 0.0
    %2873 = vmatpush1.msra.mxu0 0.0
    %2874 = vmatprep.subr.mxu0 0.0
    %2875 = vmatpush1.msra.mxu0 0.0
    %2876 = vmatprep.subr.mxu0 0.0
    %2877 = vmatpush1.msra.mxu0 0.0
    %2878 = vmatprep.subr.mxu0 0.0
    %2879 = vmatpush1.msra.mxu0 0.0
    %2880 = vmatprep.subr.mxu0 0.0
    %2881 = vmatpush1.msra.mxu0 0.0
    %2882 = vmatprep.subr.mxu0 0.0
    %2883 = vmatpush1.msra.mxu0 0.0
    %2884 = vmatprep.subr.mxu0 0.0
    %2885 = vmatpush1.msra.mxu0 0.0
    %2886 = vmatprep.subr.mxu0 0.0
    %2887 = vmatpush1.msra.mxu0 0.0
    %2888 = vmatprep.subr.mxu0 0.0
    %2889 = vmatpush1.msra.mxu0 0.0
    %2890 = vmatprep.subr.mxu0 0.0
    %2891 = vmatpush1.msra.mxu0 0.0
    %2892 = vmatprep.subr.mxu0 0.0
    %2893 = vmatpush1.msra.mxu0 0.0
    %2894 = vmatprep.subr.mxu0 0.0
    %2895 = vmatpush1.msra.mxu0 0.0
    %2896 = vmatprep.subr.mxu0 0.0
    %2897 = vmatpush1.msra.mxu0 0.0
    %2898 = vmatprep.subr.mxu0 0.0
    %2899 = vmatpush1.msra.mxu0 0.0
    %2900 = vmatprep.subr.mxu0 0.0
    %2901 = vmatpush1.msra.mxu0 0.0
    %2902 = vmatprep.subr.mxu0 0.0
    %2903 = vmatpush1.msra.mxu0 0.0
    %2904 = vmatprep.subr.mxu0 0.0
    %2905 = vmatpush1.msra.mxu0 0.0
    %2906 = vmatprep.subr.mxu0 0.0
    %2907 = vmatpush1.msra.mxu0 0.0
    %2908 = vmatprep.subr.mxu0 0.0
    %2909 = vmatpush1.msra.mxu0 0.0
    %2910 = vmatprep.subr.mxu0 0.0
    %2911 = vmatpush1.msra.mxu0 0.0
    %2912 = vmatprep.subr.mxu0 0.0
    %2913 = vmatpush1.msra.mxu0 0.0
    %2914 = vmatprep.subr.mxu0 0.0
    %2915 = vmatpush1.msra.mxu0 0.0
    %2916 = vmatprep.subr.mxu0 0.0
    %2917 = vmatpush1.msra.mxu0 0.0
    %2918 = vmatprep.subr.mxu0 0.0
    %2919 = vmatpush1.msra.mxu0 0.0
    %2920 = vmatprep.mubr.f32.mxu0 0.0
    %v2921 = vand.u32 %v2449, 4294901760
    %2922 = vmatmul.mubr.f32.gmra.mrb[0].mxu0 %v2921
    %v2923 = vpop.f32.mrb[0].mxu0
    %v2924 = vadd.f32 %v2826, %v2923
    %v2925 = vpop.f32.mrb[0].mxu0
    %2926 = vmatprep.mubr.f32.mxu0 0.0
    %v2927 = vand.u32 %v2452, 4294901760
    %2928 = vmatmul.mubr.f32.gmra.mrb[0].mxu0 %v2927
    %v2929 = vpop.f32.mrb[0].mxu0
    %v2930 = vadd.f32 %v2834, %v2929
    %v2931 = vpop.f32.mrb[0].mxu0
    %2932 = vmatprep.mubr.f32.mxu0 0.0
    %v2933 = vand.u32 %v2455, 4294901760
    %2934 = vmatmul.mubr.f32.gmra.mrb[0].mxu0 %v2933
    %v2935 = vpop.f32.mrb[0].mxu0
    %v2936 = vadd.f32 %v2842, %v2935
    %v2937 = vpop.f32.mrb[0].mxu0
    %2938 = vmatprep.mubr.f32.mxu0 0.0
    %v2939 = vand.u32 %v2458, 4294901760
    %2940 = vmatmul.mubr.f32.gmra.mrb[0].mxu0 %v2939
    %v2941 = vpop.f32.mrb[0].mxu0
    %v2942 = vadd.f32 %v2850, %v2941
    %v2943 = vpop.f32.mrb[0].mxu0
    %2944 = vdwg.mxu0
    %2945 = vmatprep.subr.mxu0 0.0
    %v2946 = vand.u32 %v1180, 4294901760
    %2947 = vmatpush1.msra.mxu0 %v2946
    %2948 = vmatprep.subr.mxu0 0.0
    %2949 = vmatpush1.msra.mxu0 0.0
    %2950 = vmatprep.subr.mxu0 0.0
    %2951 = vmatpush1.msra.mxu0 0.0
    %2952 = vmatprep.subr.mxu0 0.0
    %2953 = vmatpush1.msra.mxu0 0.0
    %2954 = vmatprep.subr.mxu0 0.0
    %2955 = vmatpush1.msra.mxu0 0.0
    %2956 = vmatprep.subr.mxu0 0.0
    %2957 = vmatpush1.msra.mxu0 0.0
    %2958 = vmatprep.subr.mxu0 0.0
    %2959 = vmatpush1.msra.mxu0 0.0
    %2960 = vmatprep.subr.mxu0 0.0
    %2961 = vmatpush1.msra.mxu0 0.0
    %2962 = vmatprep.subr.mxu0 0.0
    %2963 = vmatpush1.msra.mxu0 0.0
    %2964 = vmatprep.subr.mxu0 0.0
    %2965 = vmatpush1.msra.mxu0 0.0
    %2966 = vmatprep.subr.mxu0 0.0
    %2967 = vmatpush1.msra.mxu0 0.0
    %2968 = vmatprep.subr.mxu0 0.0
    %2969 = vmatpush1.msra.mxu0 0.0
    %2970 = vmatprep.subr.mxu0 0.0
    %2971 = vmatpush1.msra.mxu0 0.0
    %2972 = vmatprep.subr.mxu0 0.0
    %2973 = vmatpush1.msra.mxu0 0.0
    %2974 = vmatprep.subr.mxu0 0.0
    %2975 = vmatpush1.msra.mxu0 0.0
    %2976 = vmatprep.subr.mxu0 0.0
    %2977 = vmatpush1.msra.mxu0 0.0
    %2978 = vmatprep.subr.mxu0 0.0
    %2979 = vmatpush1.msra.mxu0 0.0
    %2980 = vmatprep.subr.mxu0 0.0
    %2981 = vmatpush1.msra.mxu0 0.0
    %2982 = vmatprep.subr.mxu0 0.0
    %2983 = vmatpush1.msra.mxu0 0.0
    %2984 = vmatprep.subr.mxu0 0.0
    %2985 = vmatpush1.msra.mxu0 0.0
    %2986 = vmatprep.subr.mxu0 0.0
    %2987 = vmatpush1.msra.mxu0 0.0
    %2988 = vmatprep.subr.mxu0 0.0
    %2989 = vmatpush1.msra.mxu0 0.0
    %2990 = vmatprep.subr.mxu0 0.0
    %2991 = vmatpush1.msra.mxu0 0.0
    %2992 = vmatprep.subr.mxu0 0.0
    %2993 = vmatpush1.msra.mxu0 0.0
    %2994 = vmatprep.subr.mxu0 0.0
    %2995 = vmatpush1.msra.mxu0 0.0
    %2996 = vmatprep.subr.mxu0 0.0
    %2997 = vmatpush1.msra.mxu0 0.0
    %2998 = vmatprep.subr.mxu0 0.0
    %2999 = vmatpush1.msra.mxu0 0.0
    %3000 = vmatprep.subr.mxu0 0.0
    %3001 = vmatpush1.msra.mxu0 0.0
    %3002 = vmatprep.subr.mxu0 0.0
    %3003 = vmatpush1.msra.mxu0 0.0
    %3004 = vmatprep.subr.mxu0 0.0
    %3005 = vmatpush1.msra.mxu0 0.0
    %3006 = vmatprep.subr.mxu0 0.0
    %3007 = vmatpush1.msra.mxu0 0.0
    %3008 = vmatprep.subr.mxu0 0.0
    %3009 = vmatpush1.msra.mxu0 0.0
    %3010 = vmatprep.mubr.f32.mxu0 0.0
    %v3011 = vand.u32 %v2449, 4294901760
    %3012 = vmatmul.mubr.f32.gmra.mrb[0].mxu0 %v3011
    %v3013 = vpop.f32.mrb[0].mxu0
    %v3014 = vadd.f32 %v2924, %v3013
    %v3015 = vpop.f32.mrb[0].mxu0
    %3016 = vmatprep.mubr.f32.mxu0 0.0
    %v3017 = vand.u32 %v2452, 4294901760
    %3018 = vmatmul.mubr.f32.gmra.mrb[0].mxu0 %v3017
    %v3019 = vpop.f32.mrb[0].mxu0
    %v3020 = vadd.f32 %v2930, %v3019
    %v3021 = vpop.f32.mrb[0].mxu0
    %3022 = vmatprep.mubr.f32.mxu0 0.0
    %v3023 = vand.u32 %v2455, 4294901760
    %3024 = vmatmul.mubr.f32.gmra.mrb[0].mxu0 %v3023
    %v3025 = vpop.f32.mrb[0].mxu0
    %v3026 = vadd.f32 %v2936, %v3025
    %v3027 = vpop.f32.mrb[0].mxu0
    %3028 = vmatprep.mubr.f32.mxu0 0.0
    %v3029 = vand.u32 %v2458, 4294901760
    %3030 = vmatmul.mubr.f32.gmra.mrb[0].mxu0 %v3029
    %v3031 = vpop.f32.mrb[0].mxu0
    %v3032 = vadd.f32 %v2942, %v3031
    %v3033 = vpop.f32.mrb[0].mxu0
    %3034 = vdwg.mxu0
    %v3036 = vsel %vm2359, %v2444, 0
    %v3039 = vsel %vm2359, %v2445, 0
    %v3042 = vsel %vm2359, %v2446, 0
    %v3045 = vsel %vm2359, %v2447, 0
    %3047 = vmatprep.subr.mxu0 0.0
    %v3048 = vand.u32 %v1186, 4294901760
    %3049 = vmatpush1.msra.mxu0 %v3048
    %3050 = vmatprep.subr.mxu0 0.0
    %3051 = vmatpush1.msra.mxu0 0.0
    %3052 = vmatprep.subr.mxu0 0.0
    %3053 = vmatpush1.msra.mxu0 0.0
    %3054 = vmatprep.subr.mxu0 0.0
    %3055 = vmatpush1.msra.mxu0 0.0
    %3056 = vmatprep.subr.mxu0 0.0
    %3057 = vmatpush1.msra.mxu0 0.0
    %3058 = vmatprep.subr.mxu0 0.0
    %3059 = vmatpush1.msra.mxu0 0.0
    %3060 = vmatprep.subr.mxu0 0.0
    %3061 = vmatpush1.msra.mxu0 0.0
    %3062 = vmatprep.subr.mxu0 0.0
    %3063 = vmatpush1.msra.mxu0 0.0
    %3064 = vmatprep.subr.mxu0 0.0
    %3065 = vmatpush1.msra.mxu0 0.0
    %3066 = vmatprep.subr.mxu0 0.0
    %3067 = vmatpush1.msra.mxu0 0.0
    %3068 = vmatprep.subr.mxu0 0.0
    %3069 = vmatpush1.msra.mxu0 0.0
    %3070 = vmatprep.subr.mxu0 0.0
    %3071 = vmatpush1.msra.mxu0 0.0
    %3072 = vmatprep.subr.mxu0 0.0
    %3073 = vmatpush1.msra.mxu0 0.0
    %3074 = vmatprep.subr.mxu0 0.0
    %3075 = vmatpush1.msra.mxu0 0.0
    %3076 = vmatprep.subr.mxu0 0.0
    %3077 = vmatpush1.msra.mxu0 0.0
    %3078 = vmatprep.subr.mxu0 0.0
    %3079 = vmatpush1.msra.mxu0 0.0
    %3080 = vmatprep.subr.mxu0 0.0
    %3081 = vmatpush1.msra.mxu0 0.0
    %3082 = vmatprep.subr.mxu0 0.0
    %3083 = vmatpush1.msra.mxu0 0.0
    %3084 = vmatprep.subr.mxu0 0.0
    %3085 = vmatpush1.msra.mxu0 0.0
    %3086 = vmatprep.subr.mxu0 0.0
    %3087 = vmatpush1.msra.mxu0 0.0
    %3088 = vmatprep.subr.mxu0 0.0
    %3089 = vmatpush1.msra.mxu0 0.0
    %3090 = vmatprep.subr.mxu0 0.0
    %3091 = vmatpush1.msra.mxu0 0.0
    %3092 = vmatprep.subr.mxu0 0.0
    %3093 = vmatpush1.msra.mxu0 0.0
    %3094 = vmatprep.subr.mxu0 0.0
    %3095 = vmatpush1.msra.mxu0 0.0
    %3096 = vmatprep.subr.mxu0 0.0
    %3097 = vmatpush1.msra.mxu0 0.0
    %3098 = vmatprep.subr.mxu0 0.0
    %3099 = vmatpush1.msra.mxu0 0.0
    %3100 = vmatprep.subr.mxu0 0.0
    %3101 = vmatpush1.msra.mxu0 0.0
    %3102 = vmatprep.subr.mxu0 0.0
    %3103 = vmatpush1.msra.mxu0 0.0
    %3104 = vmatprep.subr.mxu0 0.0
    %3105 = vmatpush1.msra.mxu0 0.0
    %3106 = vmatprep.subr.mxu0 0.0
    %3107 = vmatpush1.msra.mxu0 0.0
    %3108 = vmatprep.subr.mxu0 0.0
    %3109 = vmatpush1.msra.mxu0 0.0
    %3110 = vmatprep.subr.mxu0 0.0
    %3111 = vmatpush1.msra.mxu0 0.0
    %3112 = vmatprep.mubr.f32.mxu0 0.0
    %v3113 = vand.u32 %v3036, 4294901760
    %v3114 = vsub.f32 %v3036, %v3113
    %v3115 = vand.u32 %v3114, 4294901760
    %v3116 = vsub.f32 %v3114, %v3115
    %v3117 = vand.u32 %v3116, 4294901760
    %3118 = vmatmul.mubr.f32.gmra.mrb[0].mxu0 %v3117
    %v3119 = vpop.f32.mrb[0].mxu0
    %v3120 = vadd.f32 0.0, %v3119
    %v3121 = vpop.f32.mrb[0].mxu0
    %3122 = vmatprep.mubr.f32.mxu0 0.0
    %v3123 = vand.u32 %v3039, 4294901760
    %v3124 = vsub.f32 %v3039, %v3123
    %v3125 = vand.u32 %v3124, 4294901760
    %v3126 = vsub.f32 %v3124, %v3125
    %v3127 = vand.u32 %v3126, 4294901760
    %3128 = vmatmul.mubr.f32.gmra.mrb[0].mxu0 %v3127
    %v3129 = vpop.f32.mrb[0].mxu0
    %v3130 = vadd.f32 0.0, %v3129
    %v3131 = vpop.f32.mrb[0].mxu0
    %3132 = vmatprep.mubr.f32.mxu0 0.0
    %v3133 = vand.u32 %v3042, 4294901760
    %v3134 = vsub.f32 %v3042, %v3133
    %v3135 = vand.u32 %v3134, 4294901760
    %v3136 = vsub.f32 %v3134, %v3135
    %v3137 = vand.u32 %v3136, 4294901760
    %3138 = vmatmul.mubr.f32.gmra.mrb[0].mxu0 %v3137
    %v3139 = vpop.f32.mrb[0].mxu0
    %v3140 = vadd.f32 0.0, %v3139
    %v3141 = vpop.f32.mrb[0].mxu0
    %3142 = vmatprep.mubr.f32.mxu0 0.0
    %v3143 = vand.u32 %v3045, 4294901760
    %v3144 = vsub.f32 %v3045, %v3143
    %v3145 = vand.u32 %v3144, 4294901760
    %v3146 = vsub.f32 %v3144, %v3145
    %v3147 = vand.u32 %v3146, 4294901760
    %3148 = vmatmul.mubr.f32.gmra.mrb[0].mxu0 %v3147
    %v3149 = vpop.f32.mrb[0].mxu0
    %v3150 = vadd.f32 0.0, %v3149
    %v3151 = vpop.f32.mrb[0].mxu0
    %3152 = vdwg.mxu0
    %3153 = vmatprep.subr.mxu0 0.0
    %v3154 = vand.u32 %v1186, 4294901760
    %v3155 = vsub.f32 %v1186, %v3154
    %v3156 = vand.u32 %v3155, 4294901760
    %v3157 = vsub.f32 %v3155, %v3156
    %v3158 = vand.u32 %v3157, 4294901760
    %3159 = vmatpush1.msra.mxu0 %v3158
    %3160 = vmatprep.subr.mxu0 0.0
    %3161 = vmatpush1.msra.mxu0 0.0
    %3162 = vmatprep.subr.mxu0 0.0
    %3163 = vmatpush1.msra.mxu0 0.0
    %3164 = vmatprep.subr.mxu0 0.0
    %3165 = vmatpush1.msra.mxu0 0.0
    %3166 = vmatprep.subr.mxu0 0.0
    %3167 = vmatpush1.msra.mxu0 0.0
    %3168 = vmatprep.subr.mxu0 0.0
    %3169 = vmatpush1.msra.mxu0 0.0
    %3170 = vmatprep.subr.mxu0 0.0
    %3171 = vmatpush1.msra.mxu0 0.0
    %3172 = vmatprep.subr.mxu0 0.0
    %3173 = vmatpush1.msra.mxu0 0.0
    %3174 = vmatprep.subr.mxu0 0.0
    %3175 = vmatpush1.msra.mxu0 0.0
    %3176 = vmatprep.subr.mxu0 0.0
    %3177 = vmatpush1.msra.mxu0 0.0
    %3178 = vmatprep.subr.mxu0 0.0
    %3179 = vmatpush1.msra.mxu0 0.0
    %3180 = vmatprep.subr.mxu0 0.0
    %3181 = vmatpush1.msra.mxu0 0.0
    %3182 = vmatprep.subr.mxu0 0.0
    %3183 = vmatpush1.msra.mxu0 0.0
    %3184 = vmatprep.subr.mxu0 0.0
    %3185 = vmatpush1.msra.mxu0 0.0
    %3186 = vmatprep.subr.mxu0 0.0
    %3187 = vmatpush1.msra.mxu0 0.0
    %3188 = vmatprep.subr.mxu0 0.0
    %3189 = vmatpush1.msra.mxu0 0.0
    %3190 = vmatprep.subr.mxu0 0.0
    %3191 = vmatpush1.msra.mxu0 0.0
    %3192 = vmatprep.subr.mxu0 0.0
    %3193 = vmatpush1.msra.mxu0 0.0
    %3194 = vmatprep.subr.mxu0 0.0
    %3195 = vmatpush1.msra.mxu0 0.0
    %3196 = vmatprep.subr.mxu0 0.0
    %3197 = vmatpush1.msra.mxu0 0.0
    %3198 = vmatprep.subr.mxu0 0.0
    %3199 = vmatpush1.msra.mxu0 0.0
    %3200 = vmatprep.subr.mxu0 0.0
    %3201 = vmatpush1.msra.mxu0 0.0
    %3202 = vmatprep.subr.mxu0 0.0
    %3203 = vmatpush1.msra.mxu0 0.0
    %3204 = vmatprep.subr.mxu0 0.0
    %3205 = vmatpush1.msra.mxu0 0.0
    %3206 = vmatprep.subr.mxu0 0.0
    %3207 = vmatpush1.msra.mxu0 0.0
    %3208 = vmatprep.subr.mxu0 0.0
    %3209 = vmatpush1.msra.mxu0 0.0
    %3210 = vmatprep.subr.mxu0 0.0
    %3211 = vmatpush1.msra.mxu0 0.0
    %3212 = vmatprep.subr.mxu0 0.0
    %3213 = vmatpush1.msra.mxu0 0.0
    %3214 = vmatprep.subr.mxu0 0.0
    %3215 = vmatpush1.msra.mxu0 0.0
    %3216 = vmatprep.subr.mxu0 0.0
    %3217 = vmatpush1.msra.mxu0 0.0
    %3218 = vmatprep.subr.mxu0 0.0
    %3219 = vmatpush1.msra.mxu0 0.0
    %3220 = vmatprep.subr.mxu0 0.0
    %3221 = vmatpush1.msra.mxu0 0.0
    %3222 = vmatprep.mubr.f32.mxu0 0.0
    %v3223 = vand.u32 %v3036, 4294901760
    %3224 = vmatmul.mubr.f32.gmra.mrb[0].mxu0 %v3223
    %v3225 = vpop.f32.mrb[0].mxu0
    %v3226 = vadd.f32 %v3120, %v3225
    %v3227 = vpop.f32.mrb[0].mxu0
    %3228 = vmatprep.mubr.f32.mxu0 0.0
    %v3229 = vand.u32 %v3039, 4294901760
    %3230 = vmatmul.mubr.f32.gmra.mrb[0].mxu0 %v3229
    %v3231 = vpop.f32.mrb[0].mxu0
    %v3232 = vadd.f32 %v3130, %v3231
    %v3233 = vpop.f32.mrb[0].mxu0
    %3234 = vmatprep.mubr.f32.mxu0 0.0
    %v3235 = vand.u32 %v3042, 4294901760
    %3236 = vmatmul.mubr.f32.gmra.mrb[0].mxu0 %v3235
    %v3237 = vpop.f32.mrb[0].mxu0
    %v3238 = vadd.f32 %v3140, %v3237
    %v3239 = vpop.f32.mrb[0].mxu0
    %3240 = vmatprep.mubr.f32.mxu0 0.0
    %v3241 = vand.u32 %v3045, 4294901760
    %3242 = vmatmul.mubr.f32.gmra.mrb[0].mxu0 %v3241
    %v3243 = vpop.f32.mrb[0].mxu0
    %v3244 = vadd.f32 %v3150, %v3243
    %v3245 = vpop.f32.mrb[0].mxu0
    %3246 = vdwg.mxu0
    %3247 = vmatprep.subr.mxu0 0.0
    %v3248 = vand.u32 %v1186, 4294901760
    %v3249 = vsub.f32 %v1186, %v3248
    %3250 = vmatpush1.msra.mxu0 %v3249
    %3251 = vmatprep.subr.mxu0 0.0
    %3252 = vmatpush1.msra.mxu0 0.0
    %3253 = vmatprep.subr.mxu0 0.0
    %3254 = vmatpush1.msra.mxu0 0.0
    %3255 = vmatprep.subr.mxu0 0.0
    %3256 = vmatpush1.msra.mxu0 0.0
    %3257 = vmatprep.subr.mxu0 0.0
    %3258 = vmatpush1.msra.mxu0 0.0
    %3259 = vmatprep.subr.mxu0 0.0
    %3260 = vmatpush1.msra.mxu0 0.0
    %3261 = vmatprep.subr.mxu0 0.0
    %3262 = vmatpush1.msra.mxu0 0.0
    %3263 = vmatprep.subr.mxu0 0.0
    %3264 = vmatpush1.msra.mxu0 0.0
    %3265 = vmatprep.subr.mxu0 0.0
    %3266 = vmatpush1.msra.mxu0 0.0
    %3267 = vmatprep.subr.mxu0 0.0
    %3268 = vmatpush1.msra.mxu0 0.0
    %3269 = vmatprep.subr.mxu0 0.0
    %3270 = vmatpush1.msra.mxu0 0.0
    %3271 = vmatprep.subr.mxu0 0.0
    %3272 = vmatpush1.msra.mxu0 0.0
    %3273 = vmatprep.subr.mxu0 0.0
    %3274 = vmatpush1.msra.mxu0 0.0
    %3275 = vmatprep.subr.mxu0 0.0
    %3276 = vmatpush1.msra.mxu0 0.0
    %3277 = vmatprep.subr.mxu0 0.0
    %3278 = vmatpush1.msra.mxu0 0.0
    %3279 = vmatprep.subr.mxu0 0.0
    %3280 = vmatpush1.msra.mxu0 0.0
    %3281 = vmatprep.subr.mxu0 0.0
    %3282 = vmatpush1.msra.mxu0 0.0
    %3283 = vmatprep.subr.mxu0 0.0
    %3284 = vmatpush1.msra.mxu0 0.0
    %3285 = vmatprep.subr.mxu0 0.0
    %3286 = vmatpush1.msra.mxu0 0.0
    %3287 = vmatprep.subr.mxu0 0.0
    %3288 = vmatpush1.msra.mxu0 0.0
    %3289 = vmatprep.subr.mxu0 0.0
    %3290 = vmatpush1.msra.mxu0 0.0
    %3291 = vmatprep.subr.mxu0 0.0
    %3292 = vmatpush1.msra.mxu0 0.0
    %3293 = vmatprep.subr.mxu0 0.0
    %3294 = vmatpush1.msra.mxu0 0.0
    %3295 = vmatprep.subr.mxu0 0.0
    %3296 = vmatpush1.msra.mxu0 0.0
    %3297 = vmatprep.subr.mxu0 0.0
    %3298 = vmatpush1.msra.mxu0 0.0
    %3299 = vmatprep.subr.mxu0 0.0
    %3300 = vmatpush1.msra.mxu0 0.0
    %3301 = vmatprep.subr.mxu0 0.0
    %3302 = vmatpush1.msra.mxu0 0.0
    %3303 = vmatprep.subr.mxu0 0.0
    %3304 = vmatpush1.msra.mxu0 0.0
    %3305 = vmatprep.subr.mxu0 0.0
    %3306 = vmatpush1.msra.mxu0 0.0
    %3307 = vmatprep.subr.mxu0 0.0
    %3308 = vmatpush1.msra.mxu0 0.0
    %3309 = vmatprep.subr.mxu0 0.0
    %3310 = vmatpush1.msra.mxu0 0.0
    %3311 = vmatprep.subr.mxu0 0.0
    %3312 = vmatpush1.msra.mxu0 0.0
    %3313 = vmatprep.mubr.f32.mxu0 0.0
    %v3314 = vand.u32 %v3036, 4294901760
    %v3315 = vsub.f32 %v3036, %v3314
    %3316 = vmatmul.mubr.f32.gmra.mrb[0].mxu0 %v3315
    %v3317 = vpop.f32.mrb[0].mxu0
    %v3318 = vadd.f32 %v3226, %v3317
    %v3319 = vpop.f32.mrb[0].mxu0
    %3320 = vmatprep.mubr.f32.mxu0 0.0
    %v3321 = vand.u32 %v3039, 4294901760
    %v3322 = vsub.f32 %v3039, %v3321
    %3323 = vmatmul.mubr.f32.gmra.mrb[0].mxu0 %v3322
    %v3324 = vpop.f32.mrb[0].mxu0
    %v3325 = vadd.f32 %v3232, %v3324
    %v3326 = vpop.f32.mrb[0].mxu0
    %3327 = vmatprep.mubr.f32.mxu0 0.0
    %v3328 = vand.u32 %v3042, 4294901760
    %v3329 = vsub.f32 %v3042, %v3328
    %3330 = vmatmul.mubr.f32.gmra.mrb[0].mxu0 %v3329
    %v3331 = vpop.f32.mrb[0].mxu0
    %v3332 = vadd.f32 %v3238, %v3331
    %v3333 = vpop.f32.mrb[0].mxu0
    %3334 = vmatprep.mubr.f32.mxu0 0.0
    %v3335 = vand.u32 %v3045, 4294901760
    %v3336 = vsub.f32 %v3045, %v3335
    %3337 = vmatmul.mubr.f32.gmra.mrb[0].mxu0 %v3336
    %v3338 = vpop.f32.mrb[0].mxu0
    %v3339 = vadd.f32 %v3244, %v3338
    %v3340 = vpop.f32.mrb[0].mxu0
    %3341 = vdwg.mxu0
    %3342 = vmatprep.subr.mxu0 0.0
    %v3343 = vand.u32 %v1186, 4294901760
    %3344 = vmatpush1.msra.mxu0 %v3343
    %3345 = vmatprep.subr.mxu0 0.0
    %3346 = vmatpush1.msra.mxu0 0.0
    %3347 = vmatprep.subr.mxu0 0.0
    %3348 = vmatpush1.msra.mxu0 0.0
    %3349 = vmatprep.subr.mxu0 0.0
    %3350 = vmatpush1.msra.mxu0 0.0
    %3351 = vmatprep.subr.mxu0 0.0
    %3352 = vmatpush1.msra.mxu0 0.0
    %3353 = vmatprep.subr.mxu0 0.0
    %3354 = vmatpush1.msra.mxu0 0.0
    %3355 = vmatprep.subr.mxu0 0.0
    %3356 = vmatpush1.msra.mxu0 0.0
    %3357 = vmatprep.subr.mxu0 0.0
    %3358 = vmatpush1.msra.mxu0 0.0
    %3359 = vmatprep.subr.mxu0 0.0
    %3360 = vmatpush1.msra.mxu0 0.0
    %3361 = vmatprep.subr.mxu0 0.0
    %3362 = vmatpush1.msra.mxu0 0.0
    %3363 = vmatprep.subr.mxu0 0.0
    %3364 = vmatpush1.msra.mxu0 0.0
    %3365 = vmatprep.subr.mxu0 0.0
    %3366 = vmatpush1.msra.mxu0 0.0
    %3367 = vmatprep.subr.mxu0 0.0
    %3368 = vmatpush1.msra.mxu0 0.0
    %3369 = vmatprep.subr.mxu0 0.0
    %3370 = vmatpush1.msra.mxu0 0.0
    %3371 = vmatprep.subr.mxu0 0.0
    %3372 = vmatpush1.msra.mxu0 0.0
    %3373 = vmatprep.subr.mxu0 0.0
    %3374 = vmatpush1.msra.mxu0 0.0
    %3375 = vmatprep.subr.mxu0 0.0
    %3376 = vmatpush1.msra.mxu0 0.0
    %3377 = vmatprep.subr.mxu0 0.0
    %3378 = vmatpush1.msra.mxu0 0.0
    %3379 = vmatprep.subr.mxu0 0.0
    %3380 = vmatpush1.msra.mxu0 0.0
    %3381 = vmatprep.subr.mxu0 0.0
    %3382 = vmatpush1.msra.mxu0 0.0
    %3383 = vmatprep.subr.mxu0 0.0
    %3384 = vmatpush1.msra.mxu0 0.0
    %3385 = vmatprep.subr.mxu0 0.0
    %3386 = vmatpush1.msra.mxu0 0.0
    %3387 = vmatprep.subr.mxu0 0.0
    %3388 = vmatpush1.msra.mxu0 0.0
    %3389 = vmatprep.subr.mxu0 0.0
    %3390 = vmatpush1.msra.mxu0 0.0
    %3391 = vmatprep.subr.mxu0 0.0
    %3392 = vmatpush1.msra.mxu0 0.0
    %3393 = vmatprep.subr.mxu0 0.0
    %3394 = vmatpush1.msra.mxu0 0.0
    %3395 = vmatprep.subr.mxu0 0.0
    %3396 = vmatpush1.msra.mxu0 0.0
    %3397 = vmatprep.subr.mxu0 0.0
    %3398 = vmatpush1.msra.mxu0 0.0
    %3399 = vmatprep.subr.mxu0 0.0
    %3400 = vmatpush1.msra.mxu0 0.0
    %3401 = vmatprep.subr.mxu0 0.0
    %3402 = vmatpush1.msra.mxu0 0.0
    %3403 = vmatprep.subr.mxu0 0.0
    %3404 = vmatpush1.msra.mxu0 0.0
    %3405 = vmatprep.subr.mxu0 0.0
    %3406 = vmatpush1.msra.mxu0 0.0
    %3407 = vmatprep.mubr.f32.mxu0 0.0
    %v3408 = vand.u32 %v3036, 4294901760
    %v3409 = vsub.f32 %v3036, %v3408
    %v3410 = vand.u32 %v3409, 4294901760
    %3411 = vmatmul.mubr.f32.gmra.mrb[0].mxu0 %v3410
    %v3412 = vpop.f32.mrb[0].mxu0
    %v3413 = vadd.f32 %v3318, %v3412
    %v3414 = vpop.f32.mrb[0].mxu0
    %3415 = vmatprep.mubr.f32.mxu0 0.0
    %v3416 = vand.u32 %v3039, 4294901760
    %v3417 = vsub.f32 %v3039, %v3416
    %v3418 = vand.u32 %v3417, 4294901760
    %3419 = vmatmul.mubr.f32.gmra.mrb[0].mxu0 %v3418
    %v3420 = vpop.f32.mrb[0].mxu0
    %v3421 = vadd.f32 %v3325, %v3420
    %v3422 = vpop.f32.mrb[0].mxu0
    %3423 = vmatprep.mubr.f32.mxu0 0.0
    %v3424 = vand.u32 %v3042, 4294901760
    %v3425 = vsub.f32 %v3042, %v3424
    %v3426 = vand.u32 %v3425, 4294901760
    %3427 = vmatmul.mubr.f32.gmra.mrb[0].mxu0 %v3426
    %v3428 = vpop.f32.mrb[0].mxu0
    %v3429 = vadd.f32 %v3332, %v3428
    %v3430 = vpop.f32.mrb[0].mxu0
    %3431 = vmatprep.mubr.f32.mxu0 0.0
    %v3432 = vand.u32 %v3045, 4294901760
    %v3433 = vsub.f32 %v3045, %v3432
    %v3434 = vand.u32 %v3433, 4294901760
    %3435 = vmatmul.mubr.f32.gmra.mrb[0].mxu0 %v3434
    %v3436 = vpop.f32.mrb[0].mxu0
    %v3437 = vadd.f32 %v3339, %v3436
    %v3438 = vpop.f32.mrb[0].mxu0
    %3439 = vdwg.mxu0
    %3440 = vmatprep.subr.mxu0 0.0
    %v3441 = vand.u32 %v1186, 4294901760
    %v3442 = vsub.f32 %v1186, %v3441
    %v3443 = vand.u32 %v3442, 4294901760
    %3444 = vmatpush1.msra.mxu0 %v3443
    %3445 = vmatprep.subr.mxu0 0.0
    %3446 = vmatpush1.msra.mxu0 0.0
    %3447 = vmatprep.subr.mxu0 0.0
    %3448 = vmatpush1.msra.mxu0 0.0
    %3449 = vmatprep.subr.mxu0 0.0
    %3450 = vmatpush1.msra.mxu0 0.0
    %3451 = vmatprep.subr.mxu0 0.0
    %3452 = vmatpush1.msra.mxu0 0.0
    %3453 = vmatprep.subr.mxu0 0.0
    %3454 = vmatpush1.msra.mxu0 0.0
    %3455 = vmatprep.subr.mxu0 0.0
    %3456 = vmatpush1.msra.mxu0 0.0
    %3457 = vmatprep.subr.mxu0 0.0
    %3458 = vmatpush1.msra.mxu0 0.0
    %3459 = vmatprep.subr.mxu0 0.0
    %3460 = vmatpush1.msra.mxu0 0.0
    %3461 = vmatprep.subr.mxu0 0.0
    %3462 = vmatpush1.msra.mxu0 0.0
    %3463 = vmatprep.subr.mxu0 0.0
    %3464 = vmatpush1.msra.mxu0 0.0
    %3465 = vmatprep.subr.mxu0 0.0
    %3466 = vmatpush1.msra.mxu0 0.0
    %3467 = vmatprep.subr.mxu0 0.0
    %3468 = vmatpush1.msra.mxu0 0.0
    %3469 = vmatprep.subr.mxu0 0.0
    %3470 = vmatpush1.msra.mxu0 0.0
    %3471 = vmatprep.subr.mxu0 0.0
    %3472 = vmatpush1.msra.mxu0 0.0
    %3473 = vmatprep.subr.mxu0 0.0
    %3474 = vmatpush1.msra.mxu0 0.0
    %3475 = vmatprep.subr.mxu0 0.0
    %3476 = vmatpush1.msra.mxu0 0.0
    %3477 = vmatprep.subr.mxu0 0.0
    %3478 = vmatpush1.msra.mxu0 0.0
    %3479 = vmatprep.subr.mxu0 0.0
    %3480 = vmatpush1.msra.mxu0 0.0
    %3481 = vmatprep.subr.mxu0 0.0
    %3482 = vmatpush1.msra.mxu0 0.0
    %3483 = vmatprep.subr.mxu0 0.0
    %3484 = vmatpush1.msra.mxu0 0.0
    %3485 = vmatprep.subr.mxu0 0.0
    %3486 = vmatpush1.msra.mxu0 0.0
    %3487 = vmatprep.subr.mxu0 0.0
    %3488 = vmatpush1.msra.mxu0 0.0
    %3489 = vmatprep.subr.mxu0 0.0
    %3490 = vmatpush1.msra.mxu0 0.0
    %3491 = vmatprep.subr.mxu0 0.0
    %3492 = vmatpush1.msra.mxu0 0.0
    %3493 = vmatprep.subr.mxu0 0.0
    %3494 = vmatpush1.msra.mxu0 0.0
    %3495 = vmatprep.subr.mxu0 0.0
    %3496 = vmatpush1.msra.mxu0 0.0
    %3497 = vmatprep.subr.mxu0 0.0
    %3498 = vmatpush1.msra.mxu0 0.0
    %3499 = vmatprep.subr.mxu0 0.0
    %3500 = vmatpush1.msra.mxu0 0.0
    %3501 = vmatprep.subr.mxu0 0.0
    %3502 = vmatpush1.msra.mxu0 0.0
    %3503 = vmatprep.subr.mxu0 0.0
    %3504 = vmatpush1.msra.mxu0 0.0
    %3505 = vmatprep.subr.mxu0 0.0
    %3506 = vmatpush1.msra.mxu0 0.0
    %3507 = vmatprep.mubr.f32.mxu0 0.0
    %v3508 = vand.u32 %v3036, 4294901760
    %3509 = vmatmul.mubr.f32.gmra.mrb[0].mxu0 %v3508
    %v3510 = vpop.f32.mrb[0].mxu0
    %v3511 = vadd.f32 %v3413, %v3510
    %v3512 = vpop.f32.mrb[0].mxu0
    %3513 = vmatprep.mubr.f32.mxu0 0.0
    %v3514 = vand.u32 %v3039, 4294901760
    %3515 = vmatmul.mubr.f32.gmra.mrb[0].mxu0 %v3514
    %v3516 = vpop.f32.mrb[0].mxu0
    %v3517 = vadd.f32 %v3421, %v3516
    %v3518 = vpop.f32.mrb[0].mxu0
    %3519 = vmatprep.mubr.f32.mxu0 0.0
    %v3520 = vand.u32 %v3042, 4294901760
    %3521 = vmatmul.mubr.f32.gmra.mrb[0].mxu0 %v3520
    %v3522 = vpop.f32.mrb[0].mxu0
    %v3523 = vadd.f32 %v3429, %v3522
    %v3524 = vpop.f32.mrb[0].mxu0
    %3525 = vmatprep.mubr.f32.mxu0 0.0
    %v3526 = vand.u32 %v3045, 4294901760
    %3527 = vmatmul.mubr.f32.gmra.mrb[0].mxu0 %v3526
    %v3528 = vpop.f32.mrb[0].mxu0
    %v3529 = vadd.f32 %v3437, %v3528
    %v3530 = vpop.f32.mrb[0].mxu0
    %3531 = vdwg.mxu0
    %3532 = vmatprep.subr.mxu0 0.0
    %v3533 = vand.u32 %v1186, 4294901760
    %3534 = vmatpush1.msra.mxu0 %v3533
    %3535 = vmatprep.subr.mxu0 0.0
    %3536 = vmatpush1.msra.mxu0 0.0
    %3537 = vmatprep.subr.mxu0 0.0
    %3538 = vmatpush1.msra.mxu0 0.0
    %3539 = vmatprep.subr.mxu0 0.0
    %3540 = vmatpush1.msra.mxu0 0.0
    %3541 = vmatprep.subr.mxu0 0.0
    %3542 = vmatpush1.msra.mxu0 0.0
    %3543 = vmatprep.subr.mxu0 0.0
    %3544 = vmatpush1.msra.mxu0 0.0
    %3545 = vmatprep.subr.mxu0 0.0
    %3546 = vmatpush1.msra.mxu0 0.0
    %3547 = vmatprep.subr.mxu0 0.0
    %3548 = vmatpush1.msra.mxu0 0.0
    %3549 = vmatprep.subr.mxu0 0.0
    %3550 = vmatpush1.msra.mxu0 0.0
    %3551 = vmatprep.subr.mxu0 0.0
    %3552 = vmatpush1.msra.mxu0 0.0
    %3553 = vmatprep.subr.mxu0 0.0
    %3554 = vmatpush1.msra.mxu0 0.0
    %3555 = vmatprep.subr.mxu0 0.0
    %3556 = vmatpush1.msra.mxu0 0.0
    %3557 = vmatprep.subr.mxu0 0.0
    %3558 = vmatpush1.msra.mxu0 0.0
    %3559 = vmatprep.subr.mxu0 0.0
    %3560 = vmatpush1.msra.mxu0 0.0
    %3561 = vmatprep.subr.mxu0 0.0
    %3562 = vmatpush1.msra.mxu0 0.0
    %3563 = vmatprep.subr.mxu0 0.0
    %3564 = vmatpush1.msra.mxu0 0.0
    %3565 = vmatprep.subr.mxu0 0.0
    %3566 = vmatpush1.msra.mxu0 0.0
    %3567 = vmatprep.subr.mxu0 0.0
    %3568 = vmatpush1.msra.mxu0 0.0
    %3569 = vmatprep.subr.mxu0 0.0
    %3570 = vmatpush1.msra.mxu0 0.0
    %3571 = vmatprep.subr.mxu0 0.0
    %3572 = vmatpush1.msra.mxu0 0.0
    %3573 = vmatprep.subr.mxu0 0.0
    %3574 = vmatpush1.msra.mxu0 0.0
    %3575 = vmatprep.subr.mxu0 0.0
    %3576 = vmatpush1.msra.mxu0 0.0
    %3577 = vmatprep.subr.mxu0 0.0
    %3578 = vmatpush1.msra.mxu0 0.0
    %3579 = vmatprep.subr.mxu0 0.0
    %3580 = vmatpush1.msra.mxu0 0.0
    %3581 = vmatprep.subr.mxu0 0.0
    %3582 = vmatpush1.msra.mxu0 0.0
    %3583 = vmatprep.subr.mxu0 0.0
    %3584 = vmatpush1.msra.mxu0 0.0
    %3585 = vmatprep.subr.mxu0 0.0
    %3586 = vmatpush1.msra.mxu0 0.0
    %3587 = vmatprep.subr.mxu0 0.0
    %3588 = vmatpush1.msra.mxu0 0.0
    %3589 = vmatprep.subr.mxu0 0.0
    %3590 = vmatpush1.msra.mxu0 0.0
    %3591 = vmatprep.subr.mxu0 0.0
    %3592 = vmatpush1.msra.mxu0 0.0
    %3593 = vmatprep.subr.mxu0 0.0
    %3594 = vmatpush1.msra.mxu0 0.0
    %3595 = vmatprep.subr.mxu0 0.0
    %3596 = vmatpush1.msra.mxu0 0.0
    %3597 = vmatprep.mubr.f32.mxu0 0.0
    %v3598 = vand.u32 %v3036, 4294901760
    %3599 = vmatmul.mubr.f32.gmra.mrb[0].mxu0 %v3598
    %v3600 = vpop.f32.mrb[0].mxu0
    %v3601 = vadd.f32 %v3511, %v3600
    %v3602 = vpop.f32.mrb[0].mxu0
    %3603 = vmatprep.mubr.f32.mxu0 0.0
    %v3604 = vand.u32 %v3039, 4294901760
    %3605 = vmatmul.mubr.f32.gmra.mrb[0].mxu0 %v3604
    %v3606 = vpop.f32.mrb[0].mxu0
    %v3607 = vadd.f32 %v3517, %v3606
    %v3608 = vpop.f32.mrb[0].mxu0
    %3609 = vmatprep.mubr.f32.mxu0 0.0
    %v3610 = vand.u32 %v3042, 4294901760
    %3611 = vmatmul.mubr.f32.gmra.mrb[0].mxu0 %v3610
    %v3612 = vpop.f32.mrb[0].mxu0
    %v3613 = vadd.f32 %v3523, %v3612
    %v3614 = vpop.f32.mrb[0].mxu0
    %3615 = vmatprep.mubr.f32.mxu0 0.0
    %v3616 = vand.u32 %v3045, 4294901760
    %3617 = vmatmul.mubr.f32.gmra.mrb[0].mxu0 %v3616
    %v3618 = vpop.f32.mrb[0].mxu0
    %v3619 = vadd.f32 %v3529, %v3618
    %v3620 = vpop.f32.mrb[0].mxu0
    %3621 = vdwg.mxu0
    %v3622 = vmul.f32 %v3014, %v1189
    %v3623 = vmul.f32 %v3020, %v1190
    %v3624 = vmul.f32 %v3026, %v1191
    %v3625 = vmul.f32 %v3032, %v1192
    %v3626 = vmul.f32 %v3601, %v1189
    %v3627 = vmul.f32 %v3607, %v1190
    %v3628 = vmul.f32 %v3613, %v1191
    %v3629 = vmul.f32 %v3619, %v1192
    %v3630 = vadd.f32 %v3622, %v3623
    %v3631 = vadd.f32 %v3626, %v3627
    %v3632 = vadd.f32 %v3630, %v3624
    %v3633 = vadd.f32 %v3631, %v3628
    %v3634 = vadd.f32 %v3632, %v3625
    %v3635 = vadd.f32 %v3633, %v3629
    %v3636 = vld [vmem:[%s5] sm:$0xff]
    %v3637 = vld [vmem:[%s5 + $0x8] sm:$0xff]
    %v3638 = vld [vmem:[%s5 + $0x10] sm:$0xff]
    %v3639 = vld [vmem:[%s5 + $0x18] sm:$0xff]
    %v3640 = vld [vmem:[%s5 + $0x20] sm:$0xff]
    %v3641 = vld [vmem:[%s5 + $0x28] sm:$0xff]
    %v3642 = vld [vmem:[%s5 + $0x30] sm:$0xff]
    %v3643 = vld [vmem:[%s5 + $0x38] sm:$0xff]
    %v3644 = vld [vmem:[%s5 + $0x40] sm:$0xff]
    %v3645 = vld [vmem:[%s5 + $0x48] sm:$0xff]
    %v3646 = vld [vmem:[%s5 + $0x50] sm:$0xff]
    %v3647 = vld [vmem:[%s5 + $0x58] sm:$0xff]
    %v3648 = vld [vmem:[%s5 + $0x60] sm:$0xff]
    %v3649 = vld [vmem:[%s5 + $0x68] sm:$0xff]
    %v3650 = vld [vmem:[%s5 + $0x70] sm:$0xff]
    %v3651 = vld [vmem:[%s5 + $0x78] sm:$0xff]
    %v3652 = vld [vmem:[%s6] sm:$0x1]
    %v3654 = vlaneseq
    %v3655 = vshrl.u32 %v3654, 7
    %v3656 = vsub.s32 0, %v3655
    %v3657 = vrot.slane %v3652, %v3656
    %3659 = vmatprep.subr.mxu0 0.0
    %v3660 = vand.u32 %v3636, 4294901760
    %3661 = vmatpush1.msra.mxu0 %v3660
    %3662 = vmatprep.subr.mxu0 0.0
    %v3663 = vand.u32 %v3637, 4294901760
    %3664 = vmatpush1.msra.mxu0 %v3663
    %3665 = vmatprep.subr.mxu0 0.0
    %v3666 = vand.u32 %v3638, 4294901760
    %3667 = vmatpush1.msra.mxu0 %v3666
    %3668 = vmatprep.subr.mxu0 0.0
    %v3669 = vand.u32 %v3639, 4294901760
    %3670 = vmatpush1.msra.mxu0 %v3669
    %3671 = vmatprep.subr.mxu0 0.0
    %v3672 = vand.u32 %v3640, 4294901760
    %3673 = vmatpush1.msra.mxu0 %v3672
    %3674 = vmatprep.subr.mxu0 0.0
    %v3675 = vand.u32 %v3641, 4294901760
    %3676 = vmatpush1.msra.mxu0 %v3675
    %3677 = vmatprep.subr.mxu0 0.0
    %v3678 = vand.u32 %v3642, 4294901760
    %3679 = vmatpush1.msra.mxu0 %v3678
    %3680 = vmatprep.subr.mxu0 0.0
    %v3681 = vand.u32 %v3643, 4294901760
    %3682 = vmatpush1.msra.mxu0 %v3681
    %3683 = vmatprep.subr.mxu0 0.0
    %v3684 = vand.u32 %v3644, 4294901760
    %3685 = vmatpush1.msra.mxu0 %v3684
    %3686 = vmatprep.subr.mxu0 0.0
    %v3687 = vand.u32 %v3645, 4294901760
    %3688 = vmatpush1.msra.mxu0 %v3687
    %3689 = vmatprep.subr.mxu0 0.0
    %v3690 = vand.u32 %v3646, 4294901760
    %3691 = vmatpush1.msra.mxu0 %v3690
    %3692 = vmatprep.subr.mxu0 0.0
    %v3693 = vand.u32 %v3647, 4294901760
    %3694 = vmatpush1.msra.mxu0 %v3693
    %3695 = vmatprep.subr.mxu0 0.0
    %v3696 = vand.u32 %v3648, 4294901760
    %3697 = vmatpush1.msra.mxu0 %v3696
    %3698 = vmatprep.subr.mxu0 0.0
    %v3699 = vand.u32 %v3649, 4294901760
    %3700 = vmatpush1.msra.mxu0 %v3699
    %3701 = vmatprep.subr.mxu0 0.0
    %v3702 = vand.u32 %v3650, 4294901760
    %3703 = vmatpush1.msra.mxu0 %v3702
    %3704 = vmatprep.subr.mxu0 0.0
    %v3705 = vand.u32 %v3651, 4294901760
    %3706 = vmatpush1.msra.mxu0 %v3705
    %3707 = vmatprep.subr.mxu0 0.0
    %3708 = vmatpush1.msra.mxu0 0.0
    %3709 = vmatprep.subr.mxu0 0.0
    %3710 = vmatpush1.msra.mxu0 0.0
    %3711 = vmatprep.subr.mxu0 0.0
    %3712 = vmatpush1.msra.mxu0 0.0
    %3713 = vmatprep.subr.mxu0 0.0
    %3714 = vmatpush1.msra.mxu0 0.0
    %3715 = vmatprep.subr.mxu0 0.0
    %3716 = vmatpush1.msra.mxu0 0.0
    %3717 = vmatprep.subr.mxu0 0.0
    %3718 = vmatpush1.msra.mxu0 0.0
    %3719 = vmatprep.subr.mxu0 0.0
    %3720 = vmatpush1.msra.mxu0 0.0
    %3721 = vmatprep.subr.mxu0 0.0
    %3722 = vmatpush1.msra.mxu0 0.0
    %3723 = vmatprep.subr.mxu0 0.0
    %3724 = vmatpush1.msra.mxu0 0.0
    %3725 = vmatprep.subr.mxu0 0.0
    %3726 = vmatpush1.msra.mxu0 0.0
    %3727 = vmatprep.subr.mxu0 0.0
    %3728 = vmatpush1.msra.mxu0 0.0
    %3729 = vmatprep.subr.mxu0 0.0
    %3730 = vmatpush1.msra.mxu0 0.0
    %3731 = vmatprep.subr.mxu0 0.0
    %3732 = vmatpush1.msra.mxu0 0.0
    %3733 = vmatprep.subr.mxu0 0.0
    %3734 = vmatpush1.msra.mxu0 0.0
    %3735 = vmatprep.subr.mxu0 0.0
    %3736 = vmatpush1.msra.mxu0 0.0
    %3737 = vmatprep.subr.mxu0 0.0
    %3738 = vmatpush1.msra.mxu0 0.0
    %3739 = vmatprep.mubr.f32.mxu0 0.0
    %v3740 = vand.u32 %v3634, 4294901760
    %v3741 = vsub.f32 %v3634, %v3740
    %v3742 = vand.u32 %v3741, 4294901760
    %v3743 = vsub.f32 %v3741, %v3742
    %v3744 = vand.u32 %v3743, 4294901760
    %3745 = vmatmul.mubr.f32.gmra.mrb[0].mxu0 %v3744
    %v3746 = vpop.f32.mrb[0].mxu0
    %v3747 = vadd.f32 %v3657, %v3746
    %v3748 = vpop.f32.mrb[0].mxu0
    %3749 = vmatprep.mubr.f32.mxu0 0.0
    %v3750 = vand.u32 %v3635, 4294901760
    %v3751 = vsub.f32 %v3635, %v3750
    %v3752 = vand.u32 %v3751, 4294901760
    %v3753 = vsub.f32 %v3751, %v3752
    %v3754 = vand.u32 %v3753, 4294901760
    %3755 = vmatmul.mubr.f32.gmra.mrb[0].mxu0 %v3754
    %v3756 = vpop.f32.mrb[0].mxu0
    %v3757 = vadd.f32 %v3657, %v3756
    %v3758 = vpop.f32.mrb[0].mxu0
    %3759 = vdwg.mxu0
    %3760 = vmatprep.subr.mxu0 0.0
    %v3761 = vand.u32 %v3636, 4294901760
    %v3762 = vsub.f32 %v3636, %v3761
    %v3763 = vand.u32 %v3762, 4294901760
    %v3764 = vsub.f32 %v3762, %v3763
    %v3765 = vand.u32 %v3764, 4294901760
    %3766 = vmatpush1.msra.mxu0 %v3765
    %3767 = vmatprep.subr.mxu0 0.0
    %v3768 = vand.u32 %v3637, 4294901760
    %v3769 = vsub.f32 %v3637, %v3768
    %v3770 = vand.u32 %v3769, 4294901760
    %v3771 = vsub.f32 %v3769, %v3770
    %v3772 = vand.u32 %v3771, 4294901760
    %3773 = vmatpush1.msra.mxu0 %v3772
    %3774 = vmatprep.subr.mxu0 0.0
    %v3775 = vand.u32 %v3638, 4294901760
    %v3776 = vsub.f32 %v3638, %v3775
    %v3777 = vand.u32 %v3776, 4294901760
    %v3778 = vsub.f32 %v3776, %v3777
    %v3779 = vand.u32 %v3778, 4294901760
    %3780 = vmatpush1.msra.mxu0 %v3779
    %3781 = vmatprep.subr.mxu0 0.0
    %v3782 = vand.u32 %v3639, 4294901760
    %v3783 = vsub.f32 %v3639, %v3782
    %v3784 = vand.u32 %v3783, 4294901760
    %v3785 = vsub.f32 %v3783, %v3784
    %v3786 = vand.u32 %v3785, 4294901760
    %3787 = vmatpush1.msra.mxu0 %v3786
    %3788 = vmatprep.subr.mxu0 0.0
    %v3789 = vand.u32 %v3640, 4294901760
    %v3790 = vsub.f32 %v3640, %v3789
    %v3791 = vand.u32 %v3790, 4294901760
    %v3792 = vsub.f32 %v3790, %v3791
    %v3793 = vand.u32 %v3792, 4294901760
    %3794 = vmatpush1.msra.mxu0 %v3793
    %3795 = vmatprep.subr.mxu0 0.0
    %v3796 = vand.u32 %v3641, 4294901760
    %v3797 = vsub.f32 %v3641, %v3796
    %v3798 = vand.u32 %v3797, 4294901760
    %v3799 = vsub.f32 %v3797, %v3798
    %v3800 = vand.u32 %v3799, 4294901760
    %3801 = vmatpush1.msra.mxu0 %v3800
    %3802 = vmatprep.subr.mxu0 0.0
    %v3803 = vand.u32 %v3642, 4294901760
    %v3804 = vsub.f32 %v3642, %v3803
    %v3805 = vand.u32 %v3804, 4294901760
    %v3806 = vsub.f32 %v3804, %v3805
    %v3807 = vand.u32 %v3806, 4294901760
    %3808 = vmatpush1.msra.mxu0 %v3807
    %3809 = vmatprep.subr.mxu0 0.0
    %v3810 = vand.u32 %v3643, 4294901760
    %v3811 = vsub.f32 %v3643, %v3810
    %v3812 = vand.u32 %v3811, 4294901760
    %v3813 = vsub.f32 %v3811, %v3812
    %v3814 = vand.u32 %v3813, 4294901760
    %3815 = vmatpush1.msra.mxu0 %v3814
    %3816 = vmatprep.subr.mxu0 0.0
    %v3817 = vand.u32 %v3644, 4294901760
    %v3818 = vsub.f32 %v3644, %v3817
    %v3819 = vand.u32 %v3818, 4294901760
    %v3820 = vsub.f32 %v3818, %v3819
    %v3821 = vand.u32 %v3820, 4294901760
    %3822 = vmatpush1.msra.mxu0 %v3821
    %3823 = vmatprep.subr.mxu0 0.0
    %v3824 = vand.u32 %v3645, 4294901760
    %v3825 = vsub.f32 %v3645, %v3824
    %v3826 = vand.u32 %v3825, 4294901760
    %v3827 = vsub.f32 %v3825, %v3826
    %v3828 = vand.u32 %v3827, 4294901760
    %3829 = vmatpush1.msra.mxu0 %v3828
    %3830 = vmatprep.subr.mxu0 0.0
    %v3831 = vand.u32 %v3646, 4294901760
    %v3832 = vsub.f32 %v3646, %v3831
    %v3833 = vand.u32 %v3832, 4294901760
    %v3834 = vsub.f32 %v3832, %v3833
    %v3835 = vand.u32 %v3834, 4294901760
    %3836 = vmatpush1.msra.mxu0 %v3835
    %3837 = vmatprep.subr.mxu0 0.0
    %v3838 = vand.u32 %v3647, 4294901760
    %v3839 = vsub.f32 %v3647, %v3838
    %v3840 = vand.u32 %v3839, 4294901760
    %v3841 = vsub.f32 %v3839, %v3840
    %v3842 = vand.u32 %v3841, 4294901760
    %3843 = vmatpush1.msra.mxu0 %v3842
    %3844 = vmatprep.subr.mxu0 0.0
    %v3845 = vand.u32 %v3648, 4294901760
    %v3846 = vsub.f32 %v3648, %v3845
    %v3847 = vand.u32 %v3846, 4294901760
    %v3848 = vsub.f32 %v3846, %v3847
    %v3849 = vand.u32 %v3848, 4294901760
    %3850 = vmatpush1.msra.mxu0 %v3849
    %3851 = vmatprep.subr.mxu0 0.0
    %v3852 = vand.u32 %v3649, 4294901760
    %v3853 = vsub.f32 %v3649, %v3852
    %v3854 = vand.u32 %v3853, 4294901760
    %v3855 = vsub.f32 %v3853, %v3854
    %v3856 = vand.u32 %v3855, 4294901760
    %3857 = vmatpush1.msra.mxu0 %v3856
    %3858 = vmatprep.subr.mxu0 0.0
    %v3859 = vand.u32 %v3650, 4294901760
    %v3860 = vsub.f32 %v3650, %v3859
    %v3861 = vand.u32 %v3860, 4294901760
    %v3862 = vsub.f32 %v3860, %v3861
    %v3863 = vand.u32 %v3862, 4294901760
    %3864 = vmatpush1.msra.mxu0 %v3863
    %3865 = vmatprep.subr.mxu0 0.0
    %v3866 = vand.u32 %v3651, 4294901760
    %v3867 = vsub.f32 %v3651, %v3866
    %v3868 = vand.u32 %v3867, 4294901760
    %v3869 = vsub.f32 %v3867, %v3868
    %v3870 = vand.u32 %v3869, 4294901760
    %3871 = vmatpush1.msra.mxu0 %v3870
    %3872 = vmatprep.subr.mxu0 0.0
    %3873 = vmatpush1.msra.mxu0 0.0
    %3874 = vmatprep.subr.mxu0 0.0
    %3875 = vmatpush1.msra.mxu0 0.0
    %3876 = vmatprep.subr.mxu0 0.0
    %3877 = vmatpush1.msra.mxu0 0.0
    %3878 = vmatprep.subr.mxu0 0.0
    %3879 = vmatpush1.msra.mxu0 0.0
    %3880 = vmatprep.subr.mxu0 0.0
    %3881 = vmatpush1.msra.mxu0 0.0
    %3882 = vmatprep.subr.mxu0 0.0
    %3883 = vmatpush1.msra.mxu0 0.0
    %3884 = vmatprep.subr.mxu0 0.0
    %3885 = vmatpush1.msra.mxu0 0.0
    %3886 = vmatprep.subr.mxu0 0.0
    %3887 = vmatpush1.msra.mxu0 0.0
    %3888 = vmatprep.subr.mxu0 0.0
    %3889 = vmatpush1.msra.mxu0 0.0
    %3890 = vmatprep.subr.mxu0 0.0
    %3891 = vmatpush1.msra.mxu0 0.0
    %3892 = vmatprep.subr.mxu0 0.0
    %3893 = vmatpush1.msra.mxu0 0.0
    %3894 = vmatprep.subr.mxu0 0.0
    %3895 = vmatpush1.msra.mxu0 0.0
    %3896 = vmatprep.subr.mxu0 0.0
    %3897 = vmatpush1.msra.mxu0 0.0
    %3898 = vmatprep.subr.mxu0 0.0
    %3899 = vmatpush1.msra.mxu0 0.0
    %3900 = vmatprep.subr.mxu0 0.0
    %3901 = vmatpush1.msra.mxu0 0.0
    %3902 = vmatprep.subr.mxu0 0.0
    %3903 = vmatpush1.msra.mxu0 0.0
    %3904 = vmatprep.mubr.f32.mxu0 0.0
    %v3905 = vand.u32 %v3634, 4294901760
    %3906 = vmatmul.mubr.f32.gmra.mrb[0].mxu0 %v3905
    %v3907 = vpop.f32.mrb[0].mxu0
    %v3908 = vadd.f32 %v3747, %v3907
    %v3909 = vpop.f32.mrb[0].mxu0
    %3910 = vmatprep.mubr.f32.mxu0 0.0
    %v3911 = vand.u32 %v3635, 4294901760
    %3912 = vmatmul.mubr.f32.gmra.mrb[0].mxu0 %v3911
    %v3913 = vpop.f32.mrb[0].mxu0
    %v3914 = vadd.f32 %v3757, %v3913
    %v3915 = vpop.f32.mrb[0].mxu0
    %3916 = vdwg.mxu0
    %3917 = vmatprep.subr.mxu0 0.0
    %v3918 = vand.u32 %v3636, 4294901760
    %v3919 = vsub.f32 %v3636, %v3918
    %3920 = vmatpush1.msra.mxu0 %v3919
    %3921 = vmatprep.subr.mxu0 0.0
    %v3922 = vand.u32 %v3637, 4294901760
    %v3923 = vsub.f32 %v3637, %v3922
    %3924 = vmatpush1.msra.mxu0 %v3923
    %3925 = vmatprep.subr.mxu0 0.0
    %v3926 = vand.u32 %v3638, 4294901760
    %v3927 = vsub.f32 %v3638, %v3926
    %3928 = vmatpush1.msra.mxu0 %v3927
    %3929 = vmatprep.subr.mxu0 0.0
    %v3930 = vand.u32 %v3639, 4294901760
    %v3931 = vsub.f32 %v3639, %v3930
    %3932 = vmatpush1.msra.mxu0 %v3931
    %3933 = vmatprep.subr.mxu0 0.0
    %v3934 = vand.u32 %v3640, 4294901760
    %v3935 = vsub.f32 %v3640, %v3934
    %3936 = vmatpush1.msra.mxu0 %v3935
    %3937 = vmatprep.subr.mxu0 0.0
    %v3938 = vand.u32 %v3641, 4294901760
    %v3939 = vsub.f32 %v3641, %v3938
    %3940 = vmatpush1.msra.mxu0 %v3939
    %3941 = vmatprep.subr.mxu0 0.0
    %v3942 = vand.u32 %v3642, 4294901760
    %v3943 = vsub.f32 %v3642, %v3942
    %3944 = vmatpush1.msra.mxu0 %v3943
    %3945 = vmatprep.subr.mxu0 0.0
    %v3946 = vand.u32 %v3643, 4294901760
    %v3947 = vsub.f32 %v3643, %v3946
    %3948 = vmatpush1.msra.mxu0 %v3947
    %3949 = vmatprep.subr.mxu0 0.0
    %v3950 = vand.u32 %v3644, 4294901760
    %v3951 = vsub.f32 %v3644, %v3950
    %3952 = vmatpush1.msra.mxu0 %v3951
    %3953 = vmatprep.subr.mxu0 0.0
    %v3954 = vand.u32 %v3645, 4294901760
    %v3955 = vsub.f32 %v3645, %v3954
    %3956 = vmatpush1.msra.mxu0 %v3955
    %3957 = vmatprep.subr.mxu0 0.0
    %v3958 = vand.u32 %v3646, 4294901760
    %v3959 = vsub.f32 %v3646, %v3958
    %3960 = vmatpush1.msra.mxu0 %v3959
    %3961 = vmatprep.subr.mxu0 0.0
    %v3962 = vand.u32 %v3647, 4294901760
    %v3963 = vsub.f32 %v3647, %v3962
    %3964 = vmatpush1.msra.mxu0 %v3963
    %3965 = vmatprep.subr.mxu0 0.0
    %v3966 = vand.u32 %v3648, 4294901760
    %v3967 = vsub.f32 %v3648, %v3966
    %3968 = vmatpush1.msra.mxu0 %v3967
    %3969 = vmatprep.subr.mxu0 0.0
    %v3970 = vand.u32 %v3649, 4294901760
    %v3971 = vsub.f32 %v3649, %v3970
    %3972 = vmatpush1.msra.mxu0 %v3971
    %3973 = vmatprep.subr.mxu0 0.0
    %v3974 = vand.u32 %v3650, 4294901760
    %v3975 = vsub.f32 %v3650, %v3974
    %3976 = vmatpush1.msra.mxu0 %v3975
    %3977 = vmatprep.subr.mxu0 0.0
    %v3978 = vand.u32 %v3651, 4294901760
    %v3979 = vsub.f32 %v3651, %v3978
    %3980 = vmatpush1.msra.mxu0 %v3979
    %3981 = vmatprep.subr.mxu0 0.0
    %3982 = vmatpush1.msra.mxu0 0.0
    %3983 = vmatprep.subr.mxu0 0.0
    %3984 = vmatpush1.msra.mxu0 0.0
    %3985 = vmatprep.subr.mxu0 0.0
    %3986 = vmatpush1.msra.mxu0 0.0
    %3987 = vmatprep.subr.mxu0 0.0
    %3988 = vmatpush1.msra.mxu0 0.0
    %3989 = vmatprep.subr.mxu0 0.0
    %3990 = vmatpush1.msra.mxu0 0.0
    %3991 = vmatprep.subr.mxu0 0.0
    %3992 = vmatpush1.msra.mxu0 0.0
    %3993 = vmatprep.subr.mxu0 0.0
    %3994 = vmatpush1.msra.mxu0 0.0
    %3995 = vmatprep.subr.mxu0 0.0
    %3996 = vmatpush1.msra.mxu0 0.0
    %3997 = vmatprep.subr.mxu0 0.0
    %3998 = vmatpush1.msra.mxu0 0.0
    %3999 = vmatprep.subr.mxu0 0.0
    %4000 = vmatpush1.msra.mxu0 0.0
    %4001 = vmatprep.subr.mxu0 0.0
    %4002 = vmatpush1.msra.mxu0 0.0
    %4003 = vmatprep.subr.mxu0 0.0
    %4004 = vmatpush1.msra.mxu0 0.0
    %4005 = vmatprep.subr.mxu0 0.0
    %4006 = vmatpush1.msra.mxu0 0.0
    %4007 = vmatprep.subr.mxu0 0.0
    %4008 = vmatpush1.msra.mxu0 0.0
    %4009 = vmatprep.subr.mxu0 0.0
    %4010 = vmatpush1.msra.mxu0 0.0
    %4011 = vmatprep.subr.mxu0 0.0
    %4012 = vmatpush1.msra.mxu0 0.0
    %4013 = vmatprep.mubr.f32.mxu0 0.0
    %v4014 = vand.u32 %v3634, 4294901760
    %v4015 = vsub.f32 %v3634, %v4014
    %4016 = vmatmul.mubr.f32.gmra.mrb[0].mxu0 %v4015
    %v4017 = vpop.f32.mrb[0].mxu0
    %v4018 = vadd.f32 %v3908, %v4017
    %v4019 = vpop.f32.mrb[0].mxu0
    %4020 = vmatprep.mubr.f32.mxu0 0.0
    %v4021 = vand.u32 %v3635, 4294901760
    %v4022 = vsub.f32 %v3635, %v4021
    %4023 = vmatmul.mubr.f32.gmra.mrb[0].mxu0 %v4022
    %v4024 = vpop.f32.mrb[0].mxu0
    %v4025 = vadd.f32 %v3914, %v4024
    %v4026 = vpop.f32.mrb[0].mxu0
    %4027 = vdwg.mxu0
    %4028 = vmatprep.subr.mxu0 0.0
    %v4029 = vand.u32 %v3636, 4294901760
    %4030 = vmatpush1.msra.mxu0 %v4029
    %4031 = vmatprep.subr.mxu0 0.0
    %v4032 = vand.u32 %v3637, 4294901760
    %4033 = vmatpush1.msra.mxu0 %v4032
    %4034 = vmatprep.subr.mxu0 0.0
    %v4035 = vand.u32 %v3638, 4294901760
    %4036 = vmatpush1.msra.mxu0 %v4035
    %4037 = vmatprep.subr.mxu0 0.0
    %v4038 = vand.u32 %v3639, 4294901760
    %4039 = vmatpush1.msra.mxu0 %v4038
    %4040 = vmatprep.subr.mxu0 0.0
    %v4041 = vand.u32 %v3640, 4294901760
    %4042 = vmatpush1.msra.mxu0 %v4041
    %4043 = vmatprep.subr.mxu0 0.0
    %v4044 = vand.u32 %v3641, 4294901760
    %4045 = vmatpush1.msra.mxu0 %v4044
    %4046 = vmatprep.subr.mxu0 0.0
    %v4047 = vand.u32 %v3642, 4294901760
    %4048 = vmatpush1.msra.mxu0 %v4047
    %4049 = vmatprep.subr.mxu0 0.0
    %v4050 = vand.u32 %v3643, 4294901760
    %4051 = vmatpush1.msra.mxu0 %v4050
    %4052 = vmatprep.subr.mxu0 0.0
    %v4053 = vand.u32 %v3644, 4294901760
    %4054 = vmatpush1.msra.mxu0 %v4053
    %4055 = vmatprep.subr.mxu0 0.0
    %v4056 = vand.u32 %v3645, 4294901760
    %4057 = vmatpush1.msra.mxu0 %v4056
    %4058 = vmatprep.subr.mxu0 0.0
    %v4059 = vand.u32 %v3646, 4294901760
    %4060 = vmatpush1.msra.mxu0 %v4059
    %4061 = vmatprep.subr.mxu0 0.0
    %v4062 = vand.u32 %v3647, 4294901760
    %4063 = vmatpush1.msra.mxu0 %v4062
    %4064 = vmatprep.subr.mxu0 0.0
    %v4065 = vand.u32 %v3648, 4294901760
    %4066 = vmatpush1.msra.mxu0 %v4065
    %4067 = vmatprep.subr.mxu0 0.0
    %v4068 = vand.u32 %v3649, 4294901760
    %4069 = vmatpush1.msra.mxu0 %v4068
    %4070 = vmatprep.subr.mxu0 0.0
    %v4071 = vand.u32 %v3650, 4294901760
    %4072 = vmatpush1.msra.mxu0 %v4071
    %4073 = vmatprep.subr.mxu0 0.0
    %v4074 = vand.u32 %v3651, 4294901760
    %4075 = vmatpush1.msra.mxu0 %v4074
    %4076 = vmatprep.subr.mxu0 0.0
    %4077 = vmatpush1.msra.mxu0 0.0
    %4078 = vmatprep.subr.mxu0 0.0
    %4079 = vmatpush1.msra.mxu0 0.0
    %4080 = vmatprep.subr.mxu0 0.0
    %4081 = vmatpush1.msra.mxu0 0.0
    %4082 = vmatprep.subr.mxu0 0.0
    %4083 = vmatpush1.msra.mxu0 0.0
    %4084 = vmatprep.subr.mxu0 0.0
    %4085 = vmatpush1.msra.mxu0 0.0
    %4086 = vmatprep.subr.mxu0 0.0
    %4087 = vmatpush1.msra.mxu0 0.0
    %4088 = vmatprep.subr.mxu0 0.0
    %4089 = vmatpush1.msra.mxu0 0.0
    %4090 = vmatprep.subr.mxu0 0.0
    %4091 = vmatpush1.msra.mxu0 0.0
    %4092 = vmatprep.subr.mxu0 0.0
    %4093 = vmatpush1.msra.mxu0 0.0
    %4094 = vmatprep.subr.mxu0 0.0
    %4095 = vmatpush1.msra.mxu0 0.0
    %4096 = vmatprep.subr.mxu0 0.0
    %4097 = vmatpush1.msra.mxu0 0.0
    %4098 = vmatprep.subr.mxu0 0.0
    %4099 = vmatpush1.msra.mxu0 0.0
    %4100 = vmatprep.subr.mxu0 0.0
    %4101 = vmatpush1.msra.mxu0 0.0
    %4102 = vmatprep.subr.mxu0 0.0
    %4103 = vmatpush1.msra.mxu0 0.0
    %4104 = vmatprep.subr.mxu0 0.0
    %4105 = vmatpush1.msra.mxu0 0.0
    %4106 = vmatprep.subr.mxu0 0.0
    %4107 = vmatpush1.msra.mxu0 0.0
    %4108 = vmatprep.mubr.f32.mxu0 0.0
    %v4109 = vand.u32 %v3634, 4294901760
    %v4110 = vsub.f32 %v3634, %v4109
    %v4111 = vand.u32 %v4110, 4294901760
    %4112 = vmatmul.mubr.f32.gmra.mrb[0].mxu0 %v4111
    %v4113 = vpop.f32.mrb[0].mxu0
    %v4114 = vadd.f32 %v4018, %v4113
    %v4115 = vpop.f32.mrb[0].mxu0
    %4116 = vmatprep.mubr.f32.mxu0 0.0
    %v4117 = vand.u32 %v3635, 4294901760
    %v4118 = vsub.f32 %v3635, %v4117
    %v4119 = vand.u32 %v4118, 4294901760
    %4120 = vmatmul.mubr.f32.gmra.mrb[0].mxu0 %v4119
    %v4121 = vpop.f32.mrb[0].mxu0
    %v4122 = vadd.f32 %v4025, %v4121
    %v4123 = vpop.f32.mrb[0].mxu0
    %4124 = vdwg.mxu0
    %4125 = vmatprep.subr.mxu0 0.0
    %v4126 = vand.u32 %v3636, 4294901760
    %v4127 = vsub.f32 %v3636, %v4126
    %v4128 = vand.u32 %v4127, 4294901760
    %4129 = vmatpush1.msra.mxu0 %v4128
    %4130 = vmatprep.subr.mxu0 0.0
    %v4131 = vand.u32 %v3637, 4294901760
    %v4132 = vsub.f32 %v3637, %v4131
    %v4133 = vand.u32 %v4132, 4294901760
    %4134 = vmatpush1.msra.mxu0 %v4133
    %4135 = vmatprep.subr.mxu0 0.0
    %v4136 = vand.u32 %v3638, 4294901760
    %v4137 = vsub.f32 %v3638, %v4136
    %v4138 = vand.u32 %v4137, 4294901760
    %4139 = vmatpush1.msra.mxu0 %v4138
    %4140 = vmatprep.subr.mxu0 0.0
    %v4141 = vand.u32 %v3639, 4294901760
    %v4142 = vsub.f32 %v3639, %v4141
    %v4143 = vand.u32 %v4142, 4294901760
    %4144 = vmatpush1.msra.mxu0 %v4143
    %4145 = vmatprep.subr.mxu0 0.0
    %v4146 = vand.u32 %v3640, 4294901760
    %v4147 = vsub.f32 %v3640, %v4146
    %v4148 = vand.u32 %v4147, 4294901760
    %4149 = vmatpush1.msra.mxu0 %v4148
    %4150 = vmatprep.subr.mxu0 0.0
    %v4151 = vand.u32 %v3641, 4294901760
    %v4152 = vsub.f32 %v3641, %v4151
    %v4153 = vand.u32 %v4152, 4294901760
    %4154 = vmatpush1.msra.mxu0 %v4153
    %4155 = vmatprep.subr.mxu0 0.0
    %v4156 = vand.u32 %v3642, 4294901760
    %v4157 = vsub.f32 %v3642, %v4156
    %v4158 = vand.u32 %v4157, 4294901760
    %4159 = vmatpush1.msra.mxu0 %v4158
    %4160 = vmatprep.subr.mxu0 0.0
    %v4161 = vand.u32 %v3643, 4294901760
    %v4162 = vsub.f32 %v3643, %v4161
    %v4163 = vand.u32 %v4162, 4294901760
    %4164 = vmatpush1.msra.mxu0 %v4163
    %4165 = vmatprep.subr.mxu0 0.0
    %v4166 = vand.u32 %v3644, 4294901760
    %v4167 = vsub.f32 %v3644, %v4166
    %v4168 = vand.u32 %v4167, 4294901760
    %4169 = vmatpush1.msra.mxu0 %v4168
    %4170 = vmatprep.subr.mxu0 0.0
    %v4171 = vand.u32 %v3645, 4294901760
    %v4172 = vsub.f32 %v3645, %v4171
    %v4173 = vand.u32 %v4172, 4294901760
    %4174 = vmatpush1.msra.mxu0 %v4173
    %4175 = vmatprep.subr.mxu0 0.0
    %v4176 = vand.u32 %v3646, 4294901760
    %v4177 = vsub.f32 %v3646, %v4176
    %v4178 = vand.u32 %v4177, 4294901760
    %4179 = vmatpush1.msra.mxu0 %v4178
    %4180 = vmatprep.subr.mxu0 0.0
    %v4181 = vand.u32 %v3647, 4294901760
    %v4182 = vsub.f32 %v3647, %v4181
    %v4183 = vand.u32 %v4182, 4294901760
    %4184 = vmatpush1.msra.mxu0 %v4183
    %4185 = vmatprep.subr.mxu0 0.0
    %v4186 = vand.u32 %v3648, 4294901760
    %v4187 = vsub.f32 %v3648, %v4186
    %v4188 = vand.u32 %v4187, 4294901760
    %4189 = vmatpush1.msra.mxu0 %v4188
    %4190 = vmatprep.subr.mxu0 0.0
    %v4191 = vand.u32 %v3649, 4294901760
    %v4192 = vsub.f32 %v3649, %v4191
    %v4193 = vand.u32 %v4192, 4294901760
    %4194 = vmatpush1.msra.mxu0 %v4193
    %4195 = vmatprep.subr.mxu0 0.0
    %v4196 = vand.u32 %v3650, 4294901760
    %v4197 = vsub.f32 %v3650, %v4196
    %v4198 = vand.u32 %v4197, 4294901760
    %4199 = vmatpush1.msra.mxu0 %v4198
    %4200 = vmatprep.subr.mxu0 0.0
    %v4201 = vand.u32 %v3651, 4294901760
    %v4202 = vsub.f32 %v3651, %v4201
    %v4203 = vand.u32 %v4202, 4294901760
    %4204 = vmatpush1.msra.mxu0 %v4203
    %4205 = vmatprep.subr.mxu0 0.0
    %4206 = vmatpush1.msra.mxu0 0.0
    %4207 = vmatprep.subr.mxu0 0.0
    %4208 = vmatpush1.msra.mxu0 0.0
    %4209 = vmatprep.subr.mxu0 0.0
    %4210 = vmatpush1.msra.mxu0 0.0
    %4211 = vmatprep.subr.mxu0 0.0
    %4212 = vmatpush1.msra.mxu0 0.0
    %4213 = vmatprep.subr.mxu0 0.0
    %4214 = vmatpush1.msra.mxu0 0.0
    %4215 = vmatprep.subr.mxu0 0.0
    %4216 = vmatpush1.msra.mxu0 0.0
    %4217 = vmatprep.subr.mxu0 0.0
    %4218 = vmatpush1.msra.mxu0 0.0
    %4219 = vmatprep.subr.mxu0 0.0
    %4220 = vmatpush1.msra.mxu0 0.0
    %4221 = vmatprep.subr.mxu0 0.0
    %4222 = vmatpush1.msra.mxu0 0.0
    %4223 = vmatprep.subr.mxu0 0.0
    %4224 = vmatpush1.msra.mxu0 0.0
    %4225 = vmatprep.subr.mxu0 0.0
    %4226 = vmatpush1.msra.mxu0 0.0
    %4227 = vmatprep.subr.mxu0 0.0
    %4228 = vmatpush1.msra.mxu0 0.0
    %4229 = vmatprep.subr.mxu0 0.0
    %4230 = vmatpush1.msra.mxu0 0.0
    %4231 = vmatprep.subr.mxu0 0.0
    %4232 = vmatpush1.msra.mxu0 0.0
    %4233 = vmatprep.subr.mxu0 0.0
    %4234 = vmatpush1.msra.mxu0 0.0
    %4235 = vmatprep.subr.mxu0 0.0
    %4236 = vmatpush1.msra.mxu0 0.0
    %4237 = vmatprep.mubr.f32.mxu0 0.0
    %v4238 = vand.u32 %v3634, 4294901760
    %4239 = vmatmul.mubr.f32.gmra.mrb[0].mxu0 %v4238
    %v4240 = vpop.f32.mrb[0].mxu0
    %v4241 = vadd.f32 %v4114, %v4240
    %v4242 = vpop.f32.mrb[0].mxu0
    %4243 = vmatprep.mubr.f32.mxu0 0.0
    %v4244 = vand.u32 %v3635, 4294901760
    %4245 = vmatmul.mubr.f32.gmra.mrb[0].mxu0 %v4244
    %v4246 = vpop.f32.mrb[0].mxu0
    %v4247 = vadd.f32 %v4122, %v4246
    %v4248 = vpop.f32.mrb[0].mxu0
    %4249 = vdwg.mxu0
    %4250 = vmatprep.subr.mxu0 0.0
    %v4251 = vand.u32 %v3636, 4294901760
    %4252 = vmatpush1.msra.mxu0 %v4251
    %4253 = vmatprep.subr.mxu0 0.0
    %v4254 = vand.u32 %v3637, 4294901760
    %4255 = vmatpush1.msra.mxu0 %v4254
    %4256 = vmatprep.subr.mxu0 0.0
    %v4257 = vand.u32 %v3638, 4294901760
    %4258 = vmatpush1.msra.mxu0 %v4257
    %4259 = vmatprep.subr.mxu0 0.0
    %v4260 = vand.u32 %v3639, 4294901760
    %4261 = vmatpush1.msra.mxu0 %v4260
    %4262 = vmatprep.subr.mxu0 0.0
    %v4263 = vand.u32 %v3640, 4294901760
    %4264 = vmatpush1.msra.mxu0 %v4263
    %4265 = vmatprep.subr.mxu0 0.0
    %v4266 = vand.u32 %v3641, 4294901760
    %4267 = vmatpush1.msra.mxu0 %v4266
    %4268 = vmatprep.subr.mxu0 0.0
    %v4269 = vand.u32 %v3642, 4294901760
    %4270 = vmatpush1.msra.mxu0 %v4269
    %4271 = vmatprep.subr.mxu0 0.0
    %v4272 = vand.u32 %v3643, 4294901760
    %4273 = vmatpush1.msra.mxu0 %v4272
    %4274 = vmatprep.subr.mxu0 0.0
    %v4275 = vand.u32 %v3644, 4294901760
    %4276 = vmatpush1.msra.mxu0 %v4275
    %4277 = vmatprep.subr.mxu0 0.0
    %v4278 = vand.u32 %v3645, 4294901760
    %4279 = vmatpush1.msra.mxu0 %v4278
    %4280 = vmatprep.subr.mxu0 0.0
    %v4281 = vand.u32 %v3646, 4294901760
    %4282 = vmatpush1.msra.mxu0 %v4281
    %4283 = vmatprep.subr.mxu0 0.0
    %v4284 = vand.u32 %v3647, 4294901760
    %4285 = vmatpush1.msra.mxu0 %v4284
    %4286 = vmatprep.subr.mxu0 0.0
    %v4287 = vand.u32 %v3648, 4294901760
    %4288 = vmatpush1.msra.mxu0 %v4287
    %4289 = vmatprep.subr.mxu0 0.0
    %v4290 = vand.u32 %v3649, 4294901760
    %4291 = vmatpush1.msra.mxu0 %v4290
    %4292 = vmatprep.subr.mxu0 0.0
    %v4293 = vand.u32 %v3650, 4294901760
    %4294 = vmatpush1.msra.mxu0 %v4293
    %4295 = vmatprep.subr.mxu0 0.0
    %v4296 = vand.u32 %v3651, 4294901760
    %4297 = vmatpush1.msra.mxu0 %v4296
    %4298 = vmatprep.subr.mxu0 0.0
    %4299 = vmatpush1.msra.mxu0 0.0
    %4300 = vmatprep.subr.mxu0 0.0
    %4301 = vmatpush1.msra.mxu0 0.0
    %4302 = vmatprep.subr.mxu0 0.0
    %4303 = vmatpush1.msra.mxu0 0.0
    %4304 = vmatprep.subr.mxu0 0.0
    %4305 = vmatpush1.msra.mxu0 0.0
    %4306 = vmatprep.subr.mxu0 0.0
    %4307 = vmatpush1.msra.mxu0 0.0
    %4308 = vmatprep.subr.mxu0 0.0
    %4309 = vmatpush1.msra.mxu0 0.0
    %4310 = vmatprep.subr.mxu0 0.0
    %4311 = vmatpush1.msra.mxu0 0.0
    %4312 = vmatprep.subr.mxu0 0.0
    %4313 = vmatpush1.msra.mxu0 0.0
    %4314 = vmatprep.subr.mxu0 0.0
    %4315 = vmatpush1.msra.mxu0 0.0
    %4316 = vmatprep.subr.mxu0 0.0
    %4317 = vmatpush1.msra.mxu0 0.0
    %4318 = vmatprep.subr.mxu0 0.0
    %4319 = vmatpush1.msra.mxu0 0.0
    %4320 = vmatprep.subr.mxu0 0.0
    %4321 = vmatpush1.msra.mxu0 0.0
    %4322 = vmatprep.subr.mxu0 0.0
    %4323 = vmatpush1.msra.mxu0 0.0
    %4324 = vmatprep.subr.mxu0 0.0
    %4325 = vmatpush1.msra.mxu0 0.0
    %4326 = vmatprep.subr.mxu0 0.0
    %4327 = vmatpush1.msra.mxu0 0.0
    %4328 = vmatprep.subr.mxu0 0.0
    %4329 = vmatpush1.msra.mxu0 0.0
    %4330 = vmatprep.mubr.f32.mxu0 0.0
    %v4331 = vand.u32 %v3634, 4294901760
    %4332 = vmatmul.mubr.f32.gmra.mrb[0].mxu0 %v4331
    %v4333 = vpop.f32.mrb[0].mxu0
    %v4334 = vadd.f32 %v4241, %v4333
    %v4335 = vpop.f32.mrb[0].mxu0
    %4336 = vmatprep.mubr.f32.mxu0 0.0
    %v4337 = vand.u32 %v3635, 4294901760
    %4338 = vmatmul.mubr.f32.gmra.mrb[0].mxu0 %v4337
    %v4339 = vpop.f32.mrb[0].mxu0
    %v4340 = vadd.f32 %v4247, %v4339
    %v4341 = vpop.f32.mrb[0].mxu0
    %4342 = vdwg.mxu0
    %v4343 = vadd.f32 %v4334, %v27
    %v4344 = vadd.f32 %v4340, %v28
    %4345 = vst.msk [vmem:[#allocation2] sm:$0xff] %vm62, %v4343
    %4346 = vst.msk [vmem:[#allocation2 + $0x8] sm:$0xff] %vm62, %v4344
    // Predicated region
    $region30: #{tpu_custom_call.1} parent=1 // pred_check
      _
    $region31: #{tpu_custom_call.1} parent=1 // pred_check_branch
      %4348 = sbr.rel (0) target = $region33
    $region32: #{tpu_custom_call.1} parent=1 // pred_region
      %s4350 = ssub.s32 256, 256
      %4351 = vsyncadd [#allocation3], %s4350
      %s4352 = sshll.u32 [#allocation2], 4
      %s4353 = int_to_ptr.vmem [resolvable:$true] %s4352
      %4358 = dma.vmem_to_hbm [thread:$0]  %s4353, 256, %s7, [#allocation3], 128, 128, 8
    $region33: #{tpu_custom_call.1} parent=1 // pred_fallthru
      _
    // Predicated region
    $region34: #{tpu_custom_call.1} parent=1 // pred_check
      _
    $region35: #{tpu_custom_call.1} parent=1 // pred_check_branch
      %4360 = sbr.rel (0) target = $region37
    $region36: #{tpu_custom_call.1} parent=1 // pred_region
      %4361 = dma.done [#allocation3], 256
    $region37: #{tpu_custom_call.1} parent=1 // pred_fallthru
      _
    %4362 = vsyncpa [#allocation3], 1

</llo_original>
